<compile_context>
chip_gen: v7x
topology: tpu7x:2x2x1
jax: 0.10.0
libtpu: 0.0.40
codegen_flags: <defaults>
</compile_context>

<pallas_src>
import jax
import jax.numpy as jnp
from jax import lax
from jax.experimental import pallas as pl
from jax.experimental.pallas import tpu as pltpu

HIDDEN_DIM = 32
NUM_LAYERS = 3


def fudge_lstm_kernel(ids_ref, len_ref, emb_ref, wih_ref, whh_ref, b_ref,
                      wout_ref, bout_ref, out_ref):
    """Embedding + 3-layer masked LSTM + out_linear, fully fused in VMEM.

    ids_ref:  (B*S, 1)  int32 token ids, batch-major (row b*S + s == inputs[b, s])
    len_ref:  (B, 1)    int32 sequence lengths
    emb_ref:  (V, H)    embedding table (vocab padded to V for clean operands)
    wih_ref:  (L, H, 4H) input->gates weights  (i, f, g, o order)
    whh_ref:  (L, H, 4H) hidden->gates weights
    b_ref:    (L, 1, 4H) combined b_ih + b_hh
    wout_ref: (1, H)    out_linear weight
    bout_ref: (1, 1)    out_linear bias
    out_ref:  (B, S)    per-token logit, already in (batch, seq) order
    """
    B, S = out_ref.shape
    V, H = emb_ref.shape
    T = S

    # ---- fused embedding lookup: one-hot @ table on the MXU (no gather) -----
    ids = ids_ref[...]                                            # (B*S, 1) int32
    onehot = (ids == lax.broadcasted_iota(jnp.int32, (B * S, V), 1)
              ).astype(jnp.float32)                               # (B*S, V)
    emb = jnp.dot(onehot, emb_ref[...],
                  preferred_element_type=jnp.float32)             # (B*S, H)

    # ---- fused length mask, hoisted out of the recurrence --------------------
    lens_bh = jnp.broadcast_to(len_ref[...], (B, H))              # (B, H) int32

    # ---- layer 0: hoisted input projection (one MXU matmul for the whole seq)
    gx0 = (jnp.dot(emb, wih_ref[0], preferred_element_type=jnp.float32)
           + b_ref[0]).reshape(B, S, 4 * H)                       # (B, S, 4H)

    cur_seq = None                                                # layer l-1 outputs
    for layer in range(NUM_LAYERS):                               # static unroll
        w_hh = whh_ref[layer]                                     # (H, 4H)
        if layer > 0:
            w_ih = wih_ref[layer]
            bias = b_ref[layer]

        h = jnp.zeros((B, H), jnp.float32)
        c = jnp.zeros((B, H), jnp.float32)
        outs = []

        for t in range(T):                                        # static unroll
            if layer == 0:
                gx = gx0[:, t, :]                                 # (B, 4H)
            else:
                # Per-step input projection: depends only on layer-1's output at
                # the SAME t (available one wave earlier) -> wavefront DAG with
                # serial depth ~T+L-1 recurrent matmuls instead of L*T.
                gx = jnp.dot(cur_seq[t], w_ih,
                             preferred_element_type=jnp.float32) + bias

            gates = gx + jnp.dot(h, w_hh, preferred_element_type=jnp.float32)

            # One full-slab sigmoid + one full-slab tanh, then static lane slices.
            sg = jax.nn.sigmoid(gates)
            th = jnp.tanh(gates)
            i_g = sg[:, 0:H]
            f_g = sg[:, H:2 * H]
            g_g = th[:, 2 * H:3 * H]
            o_g = sg[:, 3 * H:4 * H]

            c_new = f_g * c + i_g * g_g
            h_new = o_g * jnp.tanh(c_new)

            # packed-sequence semantics via selects: emit 0 past length, freeze
            # the state.  Single compare-vs-constant per step (mask broadcast
            # hoisted above).
            m = lens_bh > t                                       # (B, H) bool
            outs.append(jnp.where(m, h_new, 0.0))
            h = jnp.where(m, h_new, h)
            c = jnp.where(m, c_new, c)

        cur_seq = outs

    # ---- epilogue: out_linear, emitted directly in (B, S) order --------------
    w_out = wout_ref[...]                                         # (1, H)
    logits = [jnp.sum(cur_seq[t] * w_out, axis=-1, keepdims=True)  # (B, 1) each
              for t in range(T)]
    out_ref[...] = jnp.concatenate(logits, axis=1) + bout_ref[...]  # (B, S)


@jax.jit
def fudge_forward(inputs, lengths, params):
    """inputs: (B, S) int32 token ids, right-padded with 0; lengths: (B,) int32.

    Returns (B, S) float32 — matches Model.forward's out_linear(...).squeeze(2)
    (assuming max(lengths) == S so pad_packed_sequence restores full length).
    """
    B, S = inputs.shape
    # Metadata-only reshapes (contiguous row-major -> bitcast), no real dispatch.
    ids = inputs.reshape(B * S, 1).astype(jnp.int32)
    lens = lengths.reshape(B, 1).astype(jnp.int32)

    # Grid-less, everything resident in VMEM: the whole working set (embedding
    # table + weights + activations) is a few tens of KiB — far below the VMEM
    # limit on v5e/v6e/v7x.  If B/S ever grow, add a parallel batch grid axis
    # (dimension_semantics=("parallel",)) and re-budget VMEM (64 MiB on v7x,
    # explicit vmem_limit_bytes on v5e).
    vmem = pl.BlockSpec(memory_space=pltpu.MemorySpace.VMEM)
    return pl.pallas_call(
        fudge_lstm_kernel,
        out_shape=jax.ShapeDtypeStruct((B, S), jnp.float32),
        in_specs=[vmem] * 8,
        out_specs=vmem,
    )(ids, lens, params["embed"], params["w_ih"], params["w_hh"],
      params["b"], params["w_out"], params["b_out"])


def reference_forward(inputs, lengths, params):
    """Pure-JAX reference of the same math (for a sanity check)."""
    emb = jnp.take(params["embed"], inputs, axis=0)               # (B, S, H)
    x = jnp.transpose(emb, (1, 0, 2)).astype(jnp.float32)         # (S, B, H)
    T, B, H = x.shape
    mask = (jnp.arange(T)[:, None] < lengths[None, :]).astype(jnp.float32)[:, :, None]
    seq = x
    for l in range(NUM_LAYERS):
        w_ih, w_hh, bias = params["w_ih"][l], params["w_hh"][l], params["b"][l]

        def step(carry, tm, w_ih=w_ih, w_hh=w_hh, bias=bias):
            h, c = carry
            xt, m = tm
            gates = xt @ w_ih + h @ w_hh + bias
            i = jax.nn.sigmoid(gates[:, 0:H])
            f = jax.nn.sigmoid(gates[:, H:2 * H])
            g = jnp.tanh(gates[:, 2 * H:3 * H])
            o = jax.nn.sigmoid(gates[:, 3 * H:4 * H])
            c_new = f * c + i * g
            h_new = o * jnp.tanh(c_new)
            return (m * h_new + (1 - m) * h, m * c_new + (1 - m) * c), h_new * m

        init = (jnp.zeros((B, H), jnp.float32), jnp.zeros((B, H), jnp.float32))
        _, seq = lax.scan(step, init, (seq, mask))
    logits = jnp.sum(seq * params["w_out"].reshape(1, 1, H), axis=-1) \
        + params["b_out"].reshape(())
    return jnp.transpose(logits, (1, 0))                          # (B, S)


if __name__ == "__main__":
    key = jax.random.PRNGKey(0)
    B, S = 2, 8
    gpt_pad_id = 49
    vocab = gpt_pad_id + 1                       # nn.Embedding(gpt_pad_id + 1, H)
    H = HIDDEN_DIM
    bound = 1.0 / float(jnp.sqrt(jnp.float32(H)))

    keys = jax.random.split(key, 8)
    embed = jax.random.uniform(keys[0], (vocab, H), jnp.float32, -0.1, 0.1)
    embed = embed.at[0].set(0.0)                 # padding_idx=0
    # One-time host-side prep: pad the vocab axis so the in-kernel one-hot matmul
    # has clean sublane-aligned operands (padded rows are never selected).
    V_PAD = 64
    embed = jnp.pad(embed, ((0, V_PAD - vocab), (0, 0)))

    # TODO(synk): PyTorch checkpoints store weight_ih/hh as (4H, H) with separate
    #             biases — transpose and sum biases when loading real weights.
    w_ih = jax.random.uniform(keys[1], (NUM_LAYERS, H, 4 * H), jnp.float32, -bound, bound)
    w_hh = jax.random.uniform(keys[2], (NUM_LAYERS, H, 4 * H), jnp.float32, -bound, bound)
    b = jax.random.uniform(keys[3], (NUM_LAYERS, 1, 4 * H), jnp.float32, -bound, bound)
    w_out = jax.random.uniform(keys[4], (1, H), jnp.float32, -bound, bound)
    b_out = jax.random.uniform(keys[5], (1, 1), jnp.float32, -bound, bound)
    params = {"embed": embed, "w_ih": w_ih, "w_hh": w_hh, "b": b,
              "w_out": w_out, "b_out": b_out}

    lengths = jnp.array([S, 5], dtype=jnp.int32)  # max(lengths) == S
    inputs = jax.random.randint(keys[6], (B, S), 1, vocab, dtype=jnp.int32)
    inputs = inputs * (jnp.arange(S)[None, :] < lengths[:, None]).astype(jnp.int32)

    out = fudge_forward(inputs, lengths, params)
    jax.block_until_ready(out)

    ref = reference_forward(inputs, lengths, params)
    assert out.shape == (B, S)
    assert jnp.allclose(out, ref, atol=1e-4, rtol=1e-4)
    print("KERNEL_OK")
</pallas_src>

<mosaic_0001>
module attributes {stable_mosaic.version = 11 : i64} {
  func.func @fudge_lstm_kernel(%arg0: memref<16x1xi32, #tpu.memory_space<vmem>>, %arg1: memref<2x1xi32, #tpu.memory_space<vmem>>, %arg2: memref<64x32xf32, #tpu.memory_space<vmem>>, %arg3: memref<3x32x128xf32, #tpu.memory_space<vmem>>, %arg4: memref<3x32x128xf32, #tpu.memory_space<vmem>>, %arg5: memref<3x1x128xf32, #tpu.memory_space<vmem>>, %arg6: memref<1x32xf32, #tpu.memory_space<vmem>>, %arg7: memref<1x1xf32, #tpu.memory_space<vmem>>, %arg8: memref<2x8xf32, #tpu.memory_space<vmem>>) attributes {dimension_semantics = [], scalar_prefetch = 0 : i64, scratch_operands = 0 : i64, tpu.core_type = #tpu.core_type<tc>} {
    %c0 = arith.constant 0 : index
    %c0_0 = arith.constant 0 : index
    %0 = vector.load %arg0[%c0, %c0_0] : memref<16x1xi32, #tpu.memory_space<vmem>>, vector<16x1xi32>
    %1 = tpu.iota {dimensions = array<i32: 1>} : vector<16x64xi32>
    %2 = vector.broadcast %0 : vector<16x1xi32> to vector<16x64xi32>
    %3 = arith.cmpi eq, %2, %1 : vector<16x64xi32>
    %4 = arith.extui %3 : vector<16x64xi1> to vector<16x64xi32>
    %5 = arith.sitofp %4 : vector<16x64xi32> to vector<16x64xf32>
    %c0_1 = arith.constant 0 : index
    %c0_2 = arith.constant 0 : index
    %6 = vector.load %arg2[%c0_1, %c0_2] : memref<64x32xf32, #tpu.memory_space<vmem>>, vector<64x32xf32>
    %cst = arith.constant dense<0.000000e+00> : vector<16x32xf32>
    %7 = tpu.matmul %5, %6, %cst {dimension_numbers = #tpu.dot_dimension_numbers<[1], [0], [0], [1], [0, 0, 1, 1], [], []>} : vector<16x64xf32>, vector<64x32xf32>, vector<16x32xf32> -> vector<16x32xf32>
    %c0_3 = arith.constant 0 : index
    %c0_4 = arith.constant 0 : index
    %8 = vector.load %arg1[%c0_3, %c0_4] : memref<2x1xi32, #tpu.memory_space<vmem>>, vector<2x1xi32>
    %9 = vector.shape_cast %8 : vector<2x1xi32> to vector<2x1xi32>
    %10 = vector.broadcast %9 : vector<2x1xi32> to vector<2x32xi32>
    %c0_5 = arith.constant 0 : index
    %c0_6 = arith.constant 0 : index
    %c0_7 = arith.constant 0 : index
    %11 = vector.load %arg3[%c0_5, %c0_6, %c0_7] : memref<3x32x128xf32, #tpu.memory_space<vmem>>, vector<1x32x128xf32>
    %12 = vector.shape_cast %11 : vector<1x32x128xf32> to vector<32x128xf32>
    %cst_8 = arith.constant dense<0.000000e+00> : vector<16x128xf32>
    %13 = tpu.matmul %7, %12, %cst_8 {dimension_numbers = #tpu.dot_dimension_numbers<[1], [0], [0], [1], [0, 0, 1, 1], [], []>} : vector<16x32xf32>, vector<32x128xf32>, vector<16x128xf32> -> vector<16x128xf32>
    %c0_9 = arith.constant 0 : index
    %c0_10 = arith.constant 0 : index
    %c0_11 = arith.constant 0 : index
    %14 = vector.load %arg5[%c0_9, %c0_10, %c0_11] : memref<3x1x128xf32, #tpu.memory_space<vmem>>, vector<1x1x128xf32>
    %15 = vector.shape_cast %14 : vector<1x1x128xf32> to vector<1x128xf32>
    %16 = vector.broadcast %15 : vector<1x128xf32> to vector<16x128xf32>
    %17 = arith.addf %13, %16 : vector<16x128xf32>
    %18 = vector.shape_cast %17 : vector<16x128xf32> to vector<2x8x128xf32>
    %c0_12 = arith.constant 0 : index
    %c0_13 = arith.constant 0 : index
    %c0_14 = arith.constant 0 : index
    %19 = vector.load %arg4[%c0_12, %c0_13, %c0_14] : memref<3x32x128xf32, #tpu.memory_space<vmem>>, vector<1x32x128xf32>
    %20 = vector.shape_cast %19 : vector<1x32x128xf32> to vector<32x128xf32>
    %cst_15 = arith.constant 0.000000e+00 : f32
    %21 = vector.broadcast %cst_15 : f32 to vector<2x32xf32>
    %cst_16 = arith.constant 0.000000e+00 : f32
    %22 = vector.broadcast %cst_16 : f32 to vector<2x32xf32>
    %23 = vector.extract_strided_slice %18 {offsets = [0, 0, 0], sizes = [2, 1, 128], strides = [1, 1, 1]} : vector<2x8x128xf32> to vector<2x1x128xf32>
    %24 = vector.shape_cast %23 : vector<2x1x128xf32> to vector<2x128xf32>
    %cst_17 = arith.constant dense<0.000000e+00> : vector<2x128xf32>
    %25 = tpu.matmul %21, %20, %cst_17 {dimension_numbers = #tpu.dot_dimension_numbers<[1], [0], [0], [1], [0, 0, 1, 1], [], []>} : vector<2x32xf32>, vector<32x128xf32>, vector<2x128xf32> -> vector<2x128xf32>
    %26 = arith.addf %24, %25 : vector<2x128xf32>
    %27 = arith.negf %26 : vector<2x128xf32>
    %28 = math.exp %27 : vector<2x128xf32>
    %cst_18 = arith.constant 1.000000e+00 : f32
    %29 = vector.broadcast %cst_18 : f32 to vector<2x128xf32>
    %30 = arith.addf %29, %28 : vector<2x128xf32>
    %31 = arith.divf %29, %30 : vector<2x128xf32>
    %32 = math.tanh %26 : vector<2x128xf32>
    %33 = vector.extract_strided_slice %31 {offsets = [0, 0], sizes = [2, 32], strides = [1, 1]} : vector<2x128xf32> to vector<2x32xf32>
    %34 = vector.extract_strided_slice %31 {offsets = [0, 32], sizes = [2, 32], strides = [1, 1]} : vector<2x128xf32> to vector<2x32xf32>
    %35 = vector.extract_strided_slice %32 {offsets = [0, 64], sizes = [2, 32], strides = [1, 1]} : vector<2x128xf32> to vector<2x32xf32>
    %36 = vector.extract_strided_slice %31 {offsets = [0, 96], sizes = [2, 32], strides = [1, 1]} : vector<2x128xf32> to vector<2x32xf32>
    %37 = arith.mulf %34, %22 : vector<2x32xf32>
    %38 = arith.mulf %33, %35 : vector<2x32xf32>
    %39 = arith.addf %37, %38 : vector<2x32xf32>
    %40 = math.tanh %39 : vector<2x32xf32>
    %41 = arith.mulf %36, %40 : vector<2x32xf32>
    %c0_i32 = arith.constant 0 : i32
    %42 = vector.broadcast %c0_i32 : i32 to vector<2x32xi32>
    %43 = arith.cmpi sgt, %10, %42 : vector<2x32xi32>
    %cst_19 = arith.constant 0.000000e+00 : f32
    %44 = vector.broadcast %cst_19 : f32 to vector<2x32xf32>
    %45 = arith.select %43, %41, %44 : vector<2x32xi1>, vector<2x32xf32>
    %46 = arith.select %43, %41, %21 : vector<2x32xi1>, vector<2x32xf32>
    %47 = arith.select %43, %39, %22 : vector<2x32xi1>, vector<2x32xf32>
    %48 = vector.extract_strided_slice %18 {offsets = [0, 1, 0], sizes = [2, 1, 128], strides = [1, 1, 1]} : vector<2x8x128xf32> to vector<2x1x128xf32>
    %49 = vector.shape_cast %48 : vector<2x1x128xf32> to vector<2x128xf32>
    %cst_20 = arith.constant dense<0.000000e+00> : vector<2x128xf32>
    %50 = tpu.matmul %46, %20, %cst_20 {dimension_numbers = #tpu.dot_dimension_numbers<[1], [0], [0], [1], [0, 0, 1, 1], [], []>} : vector<2x32xf32>, vector<32x128xf32>, vector<2x128xf32> -> vector<2x128xf32>
    %51 = arith.addf %49, %50 : vector<2x128xf32>
    %52 = arith.negf %51 : vector<2x128xf32>
    %53 = math.exp %52 : vector<2x128xf32>
    %cst_21 = arith.constant 1.000000e+00 : f32
    %54 = vector.broadcast %cst_21 : f32 to vector<2x128xf32>
    %55 = arith.addf %54, %53 : vector<2x128xf32>
    %56 = arith.divf %54, %55 : vector<2x128xf32>
    %57 = math.tanh %51 : vector<2x128xf32>
    %58 = vector.extract_strided_slice %56 {offsets = [0, 0], sizes = [2, 32], strides = [1, 1]} : vector<2x128xf32> to vector<2x32xf32>
    %59 = vector.extract_strided_slice %56 {offsets = [0, 32], sizes = [2, 32], strides = [1, 1]} : vector<2x128xf32> to vector<2x32xf32>
    %60 = vector.extract_strided_slice %57 {offsets = [0, 64], sizes = [2, 32], strides = [1, 1]} : vector<2x128xf32> to vector<2x32xf32>
    %61 = vector.extract_strided_slice %56 {offsets = [0, 96], sizes = [2, 32], strides = [1, 1]} : vector<2x128xf32> to vector<2x32xf32>
    %62 = arith.mulf %59, %47 : vector<2x32xf32>
    %63 = arith.mulf %58, %60 : vector<2x32xf32>
    %64 = arith.addf %62, %63 : vector<2x32xf32>
    %65 = math.tanh %64 : vector<2x32xf32>
    %66 = arith.mulf %61, %65 : vector<2x32xf32>
    %c1_i32 = arith.constant 1 : i32
    %67 = vector.broadcast %c1_i32 : i32 to vector<2x32xi32>
    %68 = arith.cmpi sgt, %10, %67 : vector<2x32xi32>
    %cst_22 = arith.constant 0.000000e+00 : f32
    %69 = vector.broadcast %cst_22 : f32 to vector<2x32xf32>
    %70 = arith.select %68, %66, %69 : vector<2x32xi1>, vector<2x32xf32>
    %71 = arith.select %68, %66, %46 : vector<2x32xi1>, vector<2x32xf32>
    %72 = arith.select %68, %64, %47 : vector<2x32xi1>, vector<2x32xf32>
    %73 = vector.extract_strided_slice %18 {offsets = [0, 2, 0], sizes = [2, 1, 128], strides = [1, 1, 1]} : vector<2x8x128xf32> to vector<2x1x128xf32>
    %74 = vector.shape_cast %73 : vector<2x1x128xf32> to vector<2x128xf32>
    %cst_23 = arith.constant dense<0.000000e+00> : vector<2x128xf32>
    %75 = tpu.matmul %71, %20, %cst_23 {dimension_numbers = #tpu.dot_dimension_numbers<[1], [0], [0], [1], [0, 0, 1, 1], [], []>} : vector<2x32xf32>, vector<32x128xf32>, vector<2x128xf32> -> vector<2x128xf32>
    %76 = arith.addf %74, %75 : vector<2x128xf32>
    %77 = arith.negf %76 : vector<2x128xf32>
    %78 = math.exp %77 : vector<2x128xf32>
    %cst_24 = arith.constant 1.000000e+00 : f32
    %79 = vector.broadcast %cst_24 : f32 to vector<2x128xf32>
    %80 = arith.addf %79, %78 : vector<2x128xf32>
    %81 = arith.divf %79, %80 : vector<2x128xf32>
    %82 = math.tanh %76 : vector<2x128xf32>
    %83 = vector.extract_strided_slice %81 {offsets = [0, 0], sizes = [2, 32], strides = [1, 1]} : vector<2x128xf32> to vector<2x32xf32>
    %84 = vector.extract_strided_slice %81 {offsets = [0, 32], sizes = [2, 32], strides = [1, 1]} : vector<2x128xf32> to vector<2x32xf32>
    %85 = vector.extract_strided_slice %82 {offsets = [0, 64], sizes = [2, 32], strides = [1, 1]} : vector<2x128xf32> to vector<2x32xf32>
    %86 = vector.extract_strided_slice %81 {offsets = [0, 96], sizes = [2, 32], strides = [1, 1]} : vector<2x128xf32> to vector<2x32xf32>
    %87 = arith.mulf %84, %72 : vector<2x32xf32>
    %88 = arith.mulf %83, %85 : vector<2x32xf32>
    %89 = arith.addf %87, %88 : vector<2x32xf32>
    %90 = math.tanh %89 : vector<2x32xf32>
    %91 = arith.mulf %86, %90 : vector<2x32xf32>
    %c2_i32 = arith.constant 2 : i32
    %92 = vector.broadcast %c2_i32 : i32 to vector<2x32xi32>
    %93 = arith.cmpi sgt, %10, %92 : vector<2x32xi32>
    %cst_25 = arith.constant 0.000000e+00 : f32
    %94 = vector.broadcast %cst_25 : f32 to vector<2x32xf32>
    %95 = arith.select %93, %91, %94 : vector<2x32xi1>, vector<2x32xf32>
    %96 = arith.select %93, %91, %71 : vector<2x32xi1>, vector<2x32xf32>
    %97 = arith.select %93, %89, %72 : vector<2x32xi1>, vector<2x32xf32>
    %98 = vector.extract_strided_slice %18 {offsets = [0, 3, 0], sizes = [2, 1, 128], strides = [1, 1, 1]} : vector<2x8x128xf32> to vector<2x1x128xf32>
    %99 = vector.shape_cast %98 : vector<2x1x128xf32> to vector<2x128xf32>
    %cst_26 = arith.constant dense<0.000000e+00> : vector<2x128xf32>
    %100 = tpu.matmul %96, %20, %cst_26 {dimension_numbers = #tpu.dot_dimension_numbers<[1], [0], [0], [1], [0, 0, 1, 1], [], []>} : vector<2x32xf32>, vector<32x128xf32>, vector<2x128xf32> -> vector<2x128xf32>
    %101 = arith.addf %99, %100 : vector<2x128xf32>
    %102 = arith.negf %101 : vector<2x128xf32>
    %103 = math.exp %102 : vector<2x128xf32>
    %cst_27 = arith.constant 1.000000e+00 : f32
    %104 = vector.broadcast %cst_27 : f32 to vector<2x128xf32>
    %105 = arith.addf %104, %103 : vector<2x128xf32>
    %106 = arith.divf %104, %105 : vector<2x128xf32>
    %107 = math.tanh %101 : vector<2x128xf32>
    %108 = vector.extract_strided_slice %106 {offsets = [0, 0], sizes = [2, 32], strides = [1, 1]} : vector<2x128xf32> to vector<2x32xf32>
    %109 = vector.extract_strided_slice %106 {offsets = [0, 32], sizes = [2, 32], strides = [1, 1]} : vector<2x128xf32> to vector<2x32xf32>
    %110 = vector.extract_strided_slice %107 {offsets = [0, 64], sizes = [2, 32], strides = [1, 1]} : vector<2x128xf32> to vector<2x32xf32>
    %111 = vector.extract_strided_slice %106 {offsets = [0, 96], sizes = [2, 32], strides = [1, 1]} : vector<2x128xf32> to vector<2x32xf32>
    %112 = arith.mulf %109, %97 : vector<2x32xf32>
    %113 = arith.mulf %108, %110 : vector<2x32xf32>
    %114 = arith.addf %112, %113 : vector<2x32xf32>
    %115 = math.tanh %114 : vector<2x32xf32>
    %116 = arith.mulf %111, %115 : vector<2x32xf32>
    %c3_i32 = arith.constant 3 : i32
    %117 = vector.broadcast %c3_i32 : i32 to vector<2x32xi32>
    %118 = arith.cmpi sgt, %10, %117 : vector<2x32xi32>
    %cst_28 = arith.constant 0.000000e+00 : f32
    %119 = vector.broadcast %cst_28 : f32 to vector<2x32xf32>
    %120 = arith.select %118, %116, %119 : vector<2x32xi1>, vector<2x32xf32>
    %121 = arith.select %118, %116, %96 : vector<2x32xi1>, vector<2x32xf32>
    %122 = arith.select %118, %114, %97 : vector<2x32xi1>, vector<2x32xf32>
    %123 = vector.extract_strided_slice %18 {offsets = [0, 4, 0], sizes = [2, 1, 128], strides = [1, 1, 1]} : vector<2x8x128xf32> to vector<2x1x128xf32>
    %124 = vector.shape_cast %123 : vector<2x1x128xf32> to vector<2x128xf32>
    %cst_29 = arith.constant dense<0.000000e+00> : vector<2x128xf32>
    %125 = tpu.matmul %121, %20, %cst_29 {dimension_numbers = #tpu.dot_dimension_numbers<[1], [0], [0], [1], [0, 0, 1, 1], [], []>} : vector<2x32xf32>, vector<32x128xf32>, vector<2x128xf32> -> vector<2x128xf32>
    %126 = arith.addf %124, %125 : vector<2x128xf32>
    %127 = arith.negf %126 : vector<2x128xf32>
    %128 = math.exp %127 : vector<2x128xf32>
    %cst_30 = arith.constant 1.000000e+00 : f32
    %129 = vector.broadcast %cst_30 : f32 to vector<2x128xf32>
    %130 = arith.addf %129, %128 : vector<2x128xf32>
    %131 = arith.divf %129, %130 : vector<2x128xf32>
    %132 = math.tanh %126 : vector<2x128xf32>
    %133 = vector.extract_strided_slice %131 {offsets = [0, 0], sizes = [2, 32], strides = [1, 1]} : vector<2x128xf32> to vector<2x32xf32>
    %134 = vector.extract_strided_slice %131 {offsets = [0, 32], sizes = [2, 32], strides = [1, 1]} : vector<2x128xf32> to vector<2x32xf32>
    %135 = vector.extract_strided_slice %132 {offsets = [0, 64], sizes = [2, 32], strides = [1, 1]} : vector<2x128xf32> to vector<2x32xf32>
    %136 = vector.extract_strided_slice %131 {offsets = [0, 96], sizes = [2, 32], strides = [1, 1]} : vector<2x128xf32> to vector<2x32xf32>
    %137 = arith.mulf %134, %122 : vector<2x32xf32>
    %138 = arith.mulf %133, %135 : vector<2x32xf32>
    %139 = arith.addf %137, %138 : vector<2x32xf32>
    %140 = math.tanh %139 : vector<2x32xf32>
    %141 = arith.mulf %136, %140 : vector<2x32xf32>
    %c4_i32 = arith.constant 4 : i32
    %142 = vector.broadcast %c4_i32 : i32 to vector<2x32xi32>
    %143 = arith.cmpi sgt, %10, %142 : vector<2x32xi32>
    %cst_31 = arith.constant 0.000000e+00 : f32
    %144 = vector.broadcast %cst_31 : f32 to vector<2x32xf32>
    %145 = arith.select %143, %141, %144 : vector<2x32xi1>, vector<2x32xf32>
    %146 = arith.select %143, %141, %121 : vector<2x32xi1>, vector<2x32xf32>
    %147 = arith.select %143, %139, %122 : vector<2x32xi1>, vector<2x32xf32>
    %148 = vector.extract_strided_slice %18 {offsets = [0, 5, 0], sizes = [2, 1, 128], strides = [1, 1, 1]} : vector<2x8x128xf32> to vector<2x1x128xf32>
    %149 = vector.shape_cast %148 : vector<2x1x128xf32> to vector<2x128xf32>
    %cst_32 = arith.constant dense<0.000000e+00> : vector<2x128xf32>
    %150 = tpu.matmul %146, %20, %cst_32 {dimension_numbers = #tpu.dot_dimension_numbers<[1], [0], [0], [1], [0, 0, 1, 1], [], []>} : vector<2x32xf32>, vector<32x128xf32>, vector<2x128xf32> -> vector<2x128xf32>
    %151 = arith.addf %149, %150 : vector<2x128xf32>
    %152 = arith.negf %151 : vector<2x128xf32>
    %153 = math.exp %152 : vector<2x128xf32>
    %cst_33 = arith.constant 1.000000e+00 : f32
    %154 = vector.broadcast %cst_33 : f32 to vector<2x128xf32>
    %155 = arith.addf %154, %153 : vector<2x128xf32>
    %156 = arith.divf %154, %155 : vector<2x128xf32>
    %157 = math.tanh %151 : vector<2x128xf32>
    %158 = vector.extract_strided_slice %156 {offsets = [0, 0], sizes = [2, 32], strides = [1, 1]} : vector<2x128xf32> to vector<2x32xf32>
    %159 = vector.extract_strided_slice %156 {offsets = [0, 32], sizes = [2, 32], strides = [1, 1]} : vector<2x128xf32> to vector<2x32xf32>
    %160 = vector.extract_strided_slice %157 {offsets = [0, 64], sizes = [2, 32], strides = [1, 1]} : vector<2x128xf32> to vector<2x32xf32>
    %161 = vector.extract_strided_slice %156 {offsets = [0, 96], sizes = [2, 32], strides = [1, 1]} : vector<2x128xf32> to vector<2x32xf32>
    %162 = arith.mulf %159, %147 : vector<2x32xf32>
    %163 = arith.mulf %158, %160 : vector<2x32xf32>
    %164 = arith.addf %162, %163 : vector<2x32xf32>
    %165 = math.tanh %164 : vector<2x32xf32>
    %166 = arith.mulf %161, %165 : vector<2x32xf32>
    %c5_i32 = arith.constant 5 : i32
    %167 = vector.broadcast %c5_i32 : i32 to vector<2x32xi32>
    %168 = arith.cmpi sgt, %10, %167 : vector<2x32xi32>
    %cst_34 = arith.constant 0.000000e+00 : f32
    %169 = vector.broadcast %cst_34 : f32 to vector<2x32xf32>
    %170 = arith.select %168, %166, %169 : vector<2x32xi1>, vector<2x32xf32>
    %171 = arith.select %168, %166, %146 : vector<2x32xi1>, vector<2x32xf32>
    %172 = arith.select %168, %164, %147 : vector<2x32xi1>, vector<2x32xf32>
    %173 = vector.extract_strided_slice %18 {offsets = [0, 6, 0], sizes = [2, 1, 128], strides = [1, 1, 1]} : vector<2x8x128xf32> to vector<2x1x128xf32>
    %174 = vector.shape_cast %173 : vector<2x1x128xf32> to vector<2x128xf32>
    %cst_35 = arith.constant dense<0.000000e+00> : vector<2x128xf32>
    %175 = tpu.matmul %171, %20, %cst_35 {dimension_numbers = #tpu.dot_dimension_numbers<[1], [0], [0], [1], [0, 0, 1, 1], [], []>} : vector<2x32xf32>, vector<32x128xf32>, vector<2x128xf32> -> vector<2x128xf32>
    %176 = arith.addf %174, %175 : vector<2x128xf32>
    %177 = arith.negf %176 : vector<2x128xf32>
    %178 = math.exp %177 : vector<2x128xf32>
    %cst_36 = arith.constant 1.000000e+00 : f32
    %179 = vector.broadcast %cst_36 : f32 to vector<2x128xf32>
    %180 = arith.addf %179, %178 : vector<2x128xf32>
    %181 = arith.divf %179, %180 : vector<2x128xf32>
    %182 = math.tanh %176 : vector<2x128xf32>
    %183 = vector.extract_strided_slice %181 {offsets = [0, 0], sizes = [2, 32], strides = [1, 1]} : vector<2x128xf32> to vector<2x32xf32>
    %184 = vector.extract_strided_slice %181 {offsets = [0, 32], sizes = [2, 32], strides = [1, 1]} : vector<2x128xf32> to vector<2x32xf32>
    %185 = vector.extract_strided_slice %182 {offsets = [0, 64], sizes = [2, 32], strides = [1, 1]} : vector<2x128xf32> to vector<2x32xf32>
    %186 = vector.extract_strided_slice %181 {offsets = [0, 96], sizes = [2, 32], strides = [1, 1]} : vector<2x128xf32> to vector<2x32xf32>
    %187 = arith.mulf %184, %172 : vector<2x32xf32>
    %188 = arith.mulf %183, %185 : vector<2x32xf32>
    %189 = arith.addf %187, %188 : vector<2x32xf32>
    %190 = math.tanh %189 : vector<2x32xf32>
    %191 = arith.mulf %186, %190 : vector<2x32xf32>
    %c6_i32 = arith.constant 6 : i32
    %192 = vector.broadcast %c6_i32 : i32 to vector<2x32xi32>
    %193 = arith.cmpi sgt, %10, %192 : vector<2x32xi32>
    %cst_37 = arith.constant 0.000000e+00 : f32
    %194 = vector.broadcast %cst_37 : f32 to vector<2x32xf32>
    %195 = arith.select %193, %191, %194 : vector<2x32xi1>, vector<2x32xf32>
    %196 = arith.select %193, %191, %171 : vector<2x32xi1>, vector<2x32xf32>
    %197 = arith.select %193, %189, %172 : vector<2x32xi1>, vector<2x32xf32>
    %198 = vector.extract_strided_slice %18 {offsets = [0, 7, 0], sizes = [2, 1, 128], strides = [1, 1, 1]} : vector<2x8x128xf32> to vector<2x1x128xf32>
    %199 = vector.shape_cast %198 : vector<2x1x128xf32> to vector<2x128xf32>
    %cst_38 = arith.constant dense<0.000000e+00> : vector<2x128xf32>
    %200 = tpu.matmul %196, %20, %cst_38 {dimension_numbers = #tpu.dot_dimension_numbers<[1], [0], [0], [1], [0, 0, 1, 1], [], []>} : vector<2x32xf32>, vector<32x128xf32>, vector<2x128xf32> -> vector<2x128xf32>
    %201 = arith.addf %199, %200 : vector<2x128xf32>
    %202 = arith.negf %201 : vector<2x128xf32>
    %203 = math.exp %202 : vector<2x128xf32>
    %cst_39 = arith.constant 1.000000e+00 : f32
    %204 = vector.broadcast %cst_39 : f32 to vector<2x128xf32>
    %205 = arith.addf %204, %203 : vector<2x128xf32>
    %206 = arith.divf %204, %205 : vector<2x128xf32>
    %207 = math.tanh %201 : vector<2x128xf32>
    %208 = vector.extract_strided_slice %206 {offsets = [0, 0], sizes = [2, 32], strides = [1, 1]} : vector<2x128xf32> to vector<2x32xf32>
    %209 = vector.extract_strided_slice %206 {offsets = [0, 32], sizes = [2, 32], strides = [1, 1]} : vector<2x128xf32> to vector<2x32xf32>
    %210 = vector.extract_strided_slice %207 {offsets = [0, 64], sizes = [2, 32], strides = [1, 1]} : vector<2x128xf32> to vector<2x32xf32>
    %211 = vector.extract_strided_slice %206 {offsets = [0, 96], sizes = [2, 32], strides = [1, 1]} : vector<2x128xf32> to vector<2x32xf32>
    %212 = arith.mulf %209, %197 : vector<2x32xf32>
    %213 = arith.mulf %208, %210 : vector<2x32xf32>
    %214 = arith.addf %212, %213 : vector<2x32xf32>
    %215 = math.tanh %214 : vector<2x32xf32>
    %216 = arith.mulf %211, %215 : vector<2x32xf32>
    %c7_i32 = arith.constant 7 : i32
    %217 = vector.broadcast %c7_i32 : i32 to vector<2x32xi32>
    %218 = arith.cmpi sgt, %10, %217 : vector<2x32xi32>
    %cst_40 = arith.constant 0.000000e+00 : f32
    %219 = vector.broadcast %cst_40 : f32 to vector<2x32xf32>
    %220 = arith.select %218, %216, %219 : vector<2x32xi1>, vector<2x32xf32>
    %c1 = arith.constant 1 : index
    %c0_41 = arith.constant 0 : index
    %c0_42 = arith.constant 0 : index
    %221 = vector.load %arg4[%c1, %c0_41, %c0_42] : memref<3x32x128xf32, #tpu.memory_space<vmem>>, vector<1x32x128xf32>
    %222 = vector.shape_cast %221 : vector<1x32x128xf32> to vector<32x128xf32>
    %c1_43 = arith.constant 1 : index
    %c0_44 = arith.constant 0 : index
    %c0_45 = arith.constant 0 : index
    %223 = vector.load %arg3[%c1_43, %c0_44, %c0_45] : memref<3x32x128xf32, #tpu.memory_space<vmem>>, vector<1x32x128xf32>
    %224 = vector.shape_cast %223 : vector<1x32x128xf32> to vector<32x128xf32>
    %c1_46 = arith.constant 1 : index
    %c0_47 = arith.constant 0 : index
    %c0_48 = arith.constant 0 : index
    %225 = vector.load %arg5[%c1_46, %c0_47, %c0_48] : memref<3x1x128xf32, #tpu.memory_space<vmem>>, vector<1x1x128xf32>
    %226 = vector.shape_cast %225 : vector<1x1x128xf32> to vector<1x128xf32>
    %cst_49 = arith.constant 0.000000e+00 : f32
    %227 = vector.broadcast %cst_49 : f32 to vector<2x32xf32>
    %cst_50 = arith.constant 0.000000e+00 : f32
    %228 = vector.broadcast %cst_50 : f32 to vector<2x32xf32>
    %cst_51 = arith.constant dense<0.000000e+00> : vector<2x128xf32>
    %229 = tpu.matmul %45, %224, %cst_51 {dimension_numbers = #tpu.dot_dimension_numbers<[1], [0], [0], [1], [0, 0, 1, 1], [], []>} : vector<2x32xf32>, vector<32x128xf32>, vector<2x128xf32> -> vector<2x128xf32>
    %230 = vector.broadcast %226 : vector<1x128xf32> to vector<2x128xf32>
    %231 = arith.addf %229, %230 : vector<2x128xf32>
    %cst_52 = arith.constant dense<0.000000e+00> : vector<2x128xf32>
    %232 = tpu.matmul %227, %222, %cst_52 {dimension_numbers = #tpu.dot_dimension_numbers<[1], [0], [0], [1], [0, 0, 1, 1], [], []>} : vector<2x32xf32>, vector<32x128xf32>, vector<2x128xf32> -> vector<2x128xf32>
    %233 = arith.addf %231, %232 : vector<2x128xf32>
    %234 = arith.negf %233 : vector<2x128xf32>
    %235 = math.exp %234 : vector<2x128xf32>
    %cst_53 = arith.constant 1.000000e+00 : f32
    %236 = vector.broadcast %cst_53 : f32 to vector<2x128xf32>
    %237 = arith.addf %236, %235 : vector<2x128xf32>
    %238 = arith.divf %236, %237 : vector<2x128xf32>
    %239 = math.tanh %233 : vector<2x128xf32>
    %240 = vector.extract_strided_slice %238 {offsets = [0, 0], sizes = [2, 32], strides = [1, 1]} : vector<2x128xf32> to vector<2x32xf32>
    %241 = vector.extract_strided_slice %238 {offsets = [0, 32], sizes = [2, 32], strides = [1, 1]} : vector<2x128xf32> to vector<2x32xf32>
    %242 = vector.extract_strided_slice %239 {offsets = [0, 64], sizes = [2, 32], strides = [1, 1]} : vector<2x128xf32> to vector<2x32xf32>
    %243 = vector.extract_strided_slice %238 {offsets = [0, 96], sizes = [2, 32], strides = [1, 1]} : vector<2x128xf32> to vector<2x32xf32>
    %244 = arith.mulf %241, %228 : vector<2x32xf32>
    %245 = arith.mulf %240, %242 : vector<2x32xf32>
    %246 = arith.addf %244, %245 : vector<2x32xf32>
    %247 = math.tanh %246 : vector<2x32xf32>
    %248 = arith.mulf %243, %247 : vector<2x32xf32>
    %c0_i32_54 = arith.constant 0 : i32
    %249 = vector.broadcast %c0_i32_54 : i32 to vector<2x32xi32>
    %250 = arith.cmpi sgt, %10, %249 : vector<2x32xi32>
    %cst_55 = arith.constant 0.000000e+00 : f32
    %251 = vector.broadcast %cst_55 : f32 to vector<2x32xf32>
    %252 = arith.select %250, %248, %251 : vector<2x32xi1>, vector<2x32xf32>
    %253 = arith.select %250, %248, %227 : vector<2x32xi1>, vector<2x32xf32>
    %254 = arith.select %250, %246, %228 : vector<2x32xi1>, vector<2x32xf32>
    %cst_56 = arith.constant dense<0.000000e+00> : vector<2x128xf32>
    %255 = tpu.matmul %70, %224, %cst_56 {dimension_numbers = #tpu.dot_dimension_numbers<[1], [0], [0], [1], [0, 0, 1, 1], [], []>} : vector<2x32xf32>, vector<32x128xf32>, vector<2x128xf32> -> vector<2x128xf32>
    %256 = vector.broadcast %226 : vector<1x128xf32> to vector<2x128xf32>
    %257 = arith.addf %255, %256 : vector<2x128xf32>
    %cst_57 = arith.constant dense<0.000000e+00> : vector<2x128xf32>
    %258 = tpu.matmul %253, %222, %cst_57 {dimension_numbers = #tpu.dot_dimension_numbers<[1], [0], [0], [1], [0, 0, 1, 1], [], []>} : vector<2x32xf32>, vector<32x128xf32>, vector<2x128xf32> -> vector<2x128xf32>
    %259 = arith.addf %257, %258 : vector<2x128xf32>
    %260 = arith.negf %259 : vector<2x128xf32>
    %261 = math.exp %260 : vector<2x128xf32>
    %cst_58 = arith.constant 1.000000e+00 : f32
    %262 = vector.broadcast %cst_58 : f32 to vector<2x128xf32>
    %263 = arith.addf %262, %261 : vector<2x128xf32>
    %264 = arith.divf %262, %263 : vector<2x128xf32>
    %265 = math.tanh %259 : vector<2x128xf32>
    %266 = vector.extract_strided_slice %264 {offsets = [0, 0], sizes = [2, 32], strides = [1, 1]} : vector<2x128xf32> to vector<2x32xf32>
    %267 = vector.extract_strided_slice %264 {offsets = [0, 32], sizes = [2, 32], strides = [1, 1]} : vector<2x128xf32> to vector<2x32xf32>
    %268 = vector.extract_strided_slice %265 {offsets = [0, 64], sizes = [2, 32], strides = [1, 1]} : vector<2x128xf32> to vector<2x32xf32>
    %269 = vector.extract_strided_slice %264 {offsets = [0, 96], sizes = [2, 32], strides = [1, 1]} : vector<2x128xf32> to vector<2x32xf32>
    %270 = arith.mulf %267, %254 : vector<2x32xf32>
    %271 = arith.mulf %266, %268 : vector<2x32xf32>
    %272 = arith.addf %270, %271 : vector<2x32xf32>
    %273 = math.tanh %272 : vector<2x32xf32>
    %274 = arith.mulf %269, %273 : vector<2x32xf32>
    %c1_i32_59 = arith.constant 1 : i32
    %275 = vector.broadcast %c1_i32_59 : i32 to vector<2x32xi32>
    %276 = arith.cmpi sgt, %10, %275 : vector<2x32xi32>
    %cst_60 = arith.constant 0.000000e+00 : f32
    %277 = vector.broadcast %cst_60 : f32 to vector<2x32xf32>
    %278 = arith.select %276, %274, %277 : vector<2x32xi1>, vector<2x32xf32>
    %279 = arith.select %276, %274, %253 : vector<2x32xi1>, vector<2x32xf32>
    %280 = arith.select %276, %272, %254 : vector<2x32xi1>, vector<2x32xf32>
    %cst_61 = arith.constant dense<0.000000e+00> : vector<2x128xf32>
    %281 = tpu.matmul %95, %224, %cst_61 {dimension_numbers = #tpu.dot_dimension_numbers<[1], [0], [0], [1], [0, 0, 1, 1], [], []>} : vector<2x32xf32>, vector<32x128xf32>, vector<2x128xf32> -> vector<2x128xf32>
    %282 = vector.broadcast %226 : vector<1x128xf32> to vector<2x128xf32>
    %283 = arith.addf %281, %282 : vector<2x128xf32>
    %cst_62 = arith.constant dense<0.000000e+00> : vector<2x128xf32>
    %284 = tpu.matmul %279, %222, %cst_62 {dimension_numbers = #tpu.dot_dimension_numbers<[1], [0], [0], [1], [0, 0, 1, 1], [], []>} : vector<2x32xf32>, vector<32x128xf32>, vector<2x128xf32> -> vector<2x128xf32>
    %285 = arith.addf %283, %284 : vector<2x128xf32>
    %286 = arith.negf %285 : vector<2x128xf32>
    %287 = math.exp %286 : vector<2x128xf32>
    %cst_63 = arith.constant 1.000000e+00 : f32
    %288 = vector.broadcast %cst_63 : f32 to vector<2x128xf32>
    %289 = arith.addf %288, %287 : vector<2x128xf32>
    %290 = arith.divf %288, %289 : vector<2x128xf32>
    %291 = math.tanh %285 : vector<2x128xf32>
    %292 = vector.extract_strided_slice %290 {offsets = [0, 0], sizes = [2, 32], strides = [1, 1]} : vector<2x128xf32> to vector<2x32xf32>
    %293 = vector.extract_strided_slice %290 {offsets = [0, 32], sizes = [2, 32], strides = [1, 1]} : vector<2x128xf32> to vector<2x32xf32>
    %294 = vector.extract_strided_slice %291 {offsets = [0, 64], sizes = [2, 32], strides = [1, 1]} : vector<2x128xf32> to vector<2x32xf32>
    %295 = vector.extract_strided_slice %290 {offsets = [0, 96], sizes = [2, 32], strides = [1, 1]} : vector<2x128xf32> to vector<2x32xf32>
    %296 = arith.mulf %293, %280 : vector<2x32xf32>
    %297 = arith.mulf %292, %294 : vector<2x32xf32>
    %298 = arith.addf %296, %297 : vector<2x32xf32>
    %299 = math.tanh %298 : vector<2x32xf32>
    %300 = arith.mulf %295, %299 : vector<2x32xf32>
    %c2_i32_64 = arith.constant 2 : i32
    %301 = vector.broadcast %c2_i32_64 : i32 to vector<2x32xi32>
    %302 = arith.cmpi sgt, %10, %301 : vector<2x32xi32>
    %cst_65 = arith.constant 0.000000e+00 : f32
    %303 = vector.broadcast %cst_65 : f32 to vector<2x32xf32>
    %304 = arith.select %302, %300, %303 : vector<2x32xi1>, vector<2x32xf32>
    %305 = arith.select %302, %300, %279 : vector<2x32xi1>, vector<2x32xf32>
    %306 = arith.select %302, %298, %280 : vector<2x32xi1>, vector<2x32xf32>
    %cst_66 = arith.constant dense<0.000000e+00> : vector<2x128xf32>
    %307 = tpu.matmul %120, %224, %cst_66 {dimension_numbers = #tpu.dot_dimension_numbers<[1], [0], [0], [1], [0, 0, 1, 1], [], []>} : vector<2x32xf32>, vector<32x128xf32>, vector<2x128xf32> -> vector<2x128xf32>
    %308 = vector.broadcast %226 : vector<1x128xf32> to vector<2x128xf32>
    %309 = arith.addf %307, %308 : vector<2x128xf32>
    %cst_67 = arith.constant dense<0.000000e+00> : vector<2x128xf32>
    %310 = tpu.matmul %305, %222, %cst_67 {dimension_numbers = #tpu.dot_dimension_numbers<[1], [0], [0], [1], [0, 0, 1, 1], [], []>} : vector<2x32xf32>, vector<32x128xf32>, vector<2x128xf32> -> vector<2x128xf32>
    %311 = arith.addf %309, %310 : vector<2x128xf32>
    %312 = arith.negf %311 : vector<2x128xf32>
    %313 = math.exp %312 : vector<2x128xf32>
    %cst_68 = arith.constant 1.000000e+00 : f32
    %314 = vector.broadcast %cst_68 : f32 to vector<2x128xf32>
    %315 = arith.addf %314, %313 : vector<2x128xf32>
    %316 = arith.divf %314, %315 : vector<2x128xf32>
    %317 = math.tanh %311 : vector<2x128xf32>
    %318 = vector.extract_strided_slice %316 {offsets = [0, 0], sizes = [2, 32], strides = [1, 1]} : vector<2x128xf32> to vector<2x32xf32>
    %319 = vector.extract_strided_slice %316 {offsets = [0, 32], sizes = [2, 32], strides = [1, 1]} : vector<2x128xf32> to vector<2x32xf32>
    %320 = vector.extract_strided_slice %317 {offsets = [0, 64], sizes = [2, 32], strides = [1, 1]} : vector<2x128xf32> to vector<2x32xf32>
    %321 = vector.extract_strided_slice %316 {offsets = [0, 96], sizes = [2, 32], strides = [1, 1]} : vector<2x128xf32> to vector<2x32xf32>
    %322 = arith.mulf %319, %306 : vector<2x32xf32>
    %323 = arith.mulf %318, %320 : vector<2x32xf32>
    %324 = arith.addf %322, %323 : vector<2x32xf32>
    %325 = math.tanh %324 : vector<2x32xf32>
    %326 = arith.mulf %321, %325 : vector<2x32xf32>
    %c3_i32_69 = arith.constant 3 : i32
    %327 = vector.broadcast %c3_i32_69 : i32 to vector<2x32xi32>
    %328 = arith.cmpi sgt, %10, %327 : vector<2x32xi32>
    %cst_70 = arith.constant 0.000000e+00 : f32
    %329 = vector.broadcast %cst_70 : f32 to vector<2x32xf32>
    %330 = arith.select %328, %326, %329 : vector<2x32xi1>, vector<2x32xf32>
    %331 = arith.select %328, %326, %305 : vector<2x32xi1>, vector<2x32xf32>
    %332 = arith.select %328, %324, %306 : vector<2x32xi1>, vector<2x32xf32>
    %cst_71 = arith.constant dense<0.000000e+00> : vector<2x128xf32>
    %333 = tpu.matmul %145, %224, %cst_71 {dimension_numbers = #tpu.dot_dimension_numbers<[1], [0], [0], [1], [0, 0, 1, 1], [], []>} : vector<2x32xf32>, vector<32x128xf32>, vector<2x128xf32> -> vector<2x128xf32>
    %334 = vector.broadcast %226 : vector<1x128xf32> to vector<2x128xf32>
    %335 = arith.addf %333, %334 : vector<2x128xf32>
    %cst_72 = arith.constant dense<0.000000e+00> : vector<2x128xf32>
    %336 = tpu.matmul %331, %222, %cst_72 {dimension_numbers = #tpu.dot_dimension_numbers<[1], [0], [0], [1], [0, 0, 1, 1], [], []>} : vector<2x32xf32>, vector<32x128xf32>, vector<2x128xf32> -> vector<2x128xf32>
    %337 = arith.addf %335, %336 : vector<2x128xf32>
    %338 = arith.negf %337 : vector<2x128xf32>
    %339 = math.exp %338 : vector<2x128xf32>
    %cst_73 = arith.constant 1.000000e+00 : f32
    %340 = vector.broadcast %cst_73 : f32 to vector<2x128xf32>
    %341 = arith.addf %340, %339 : vector<2x128xf32>
    %342 = arith.divf %340, %341 : vector<2x128xf32>
    %343 = math.tanh %337 : vector<2x128xf32>
    %344 = vector.extract_strided_slice %342 {offsets = [0, 0], sizes = [2, 32], strides = [1, 1]} : vector<2x128xf32> to vector<2x32xf32>
    %345 = vector.extract_strided_slice %342 {offsets = [0, 32], sizes = [2, 32], strides = [1, 1]} : vector<2x128xf32> to vector<2x32xf32>
    %346 = vector.extract_strided_slice %343 {offsets = [0, 64], sizes = [2, 32], strides = [1, 1]} : vector<2x128xf32> to vector<2x32xf32>
    %347 = vector.extract_strided_slice %342 {offsets = [0, 96], sizes = [2, 32], strides = [1, 1]} : vector<2x128xf32> to vector<2x32xf32>
    %348 = arith.mulf %345, %332 : vector<2x32xf32>
    %349 = arith.mulf %344, %346 : vector<2x32xf32>
    %350 = arith.addf %348, %349 : vector<2x32xf32>
    %351 = math.tanh %350 : vector<2x32xf32>
    %352 = arith.mulf %347, %351 : vector<2x32xf32>
    %c4_i32_74 = arith.constant 4 : i32
    %353 = vector.broadcast %c4_i32_74 : i32 to vector<2x32xi32>
    %354 = arith.cmpi sgt, %10, %353 : vector<2x32xi32>
    %cst_75 = arith.constant 0.000000e+00 : f32
    %355 = vector.broadcast %cst_75 : f32 to vector<2x32xf32>
    %356 = arith.select %354, %352, %355 : vector<2x32xi1>, vector<2x32xf32>
    %357 = arith.select %354, %352, %331 : vector<2x32xi1>, vector<2x32xf32>
    %358 = arith.select %354, %350, %332 : vector<2x32xi1>, vector<2x32xf32>
    %cst_76 = arith.constant dense<0.000000e+00> : vector<2x128xf32>
    %359 = tpu.matmul %170, %224, %cst_76 {dimension_numbers = #tpu.dot_dimension_numbers<[1], [0], [0], [1], [0, 0, 1, 1], [], []>} : vector<2x32xf32>, vector<32x128xf32>, vector<2x128xf32> -> vector<2x128xf32>
    %360 = vector.broadcast %226 : vector<1x128xf32> to vector<2x128xf32>
    %361 = arith.addf %359, %360 : vector<2x128xf32>
    %cst_77 = arith.constant dense<0.000000e+00> : vector<2x128xf32>
    %362 = tpu.matmul %357, %222, %cst_77 {dimension_numbers = #tpu.dot_dimension_numbers<[1], [0], [0], [1], [0, 0, 1, 1], [], []>} : vector<2x32xf32>, vector<32x128xf32>, vector<2x128xf32> -> vector<2x128xf32>
    %363 = arith.addf %361, %362 : vector<2x128xf32>
    %364 = arith.negf %363 : vector<2x128xf32>
    %365 = math.exp %364 : vector<2x128xf32>
    %cst_78 = arith.constant 1.000000e+00 : f32
    %366 = vector.broadcast %cst_78 : f32 to vector<2x128xf32>
    %367 = arith.addf %366, %365 : vector<2x128xf32>
    %368 = arith.divf %366, %367 : vector<2x128xf32>
    %369 = math.tanh %363 : vector<2x128xf32>
    %370 = vector.extract_strided_slice %368 {offsets = [0, 0], sizes = [2, 32], strides = [1, 1]} : vector<2x128xf32> to vector<2x32xf32>
    %371 = vector.extract_strided_slice %368 {offsets = [0, 32], sizes = [2, 32], strides = [1, 1]} : vector<2x128xf32> to vector<2x32xf32>
    %372 = vector.extract_strided_slice %369 {offsets = [0, 64], sizes = [2, 32], strides = [1, 1]} : vector<2x128xf32> to vector<2x32xf32>
    %373 = vector.extract_strided_slice %368 {offsets = [0, 96], sizes = [2, 32], strides = [1, 1]} : vector<2x128xf32> to vector<2x32xf32>
    %374 = arith.mulf %371, %358 : vector<2x32xf32>
    %375 = arith.mulf %370, %372 : vector<2x32xf32>
    %376 = arith.addf %374, %375 : vector<2x32xf32>
    %377 = math.tanh %376 : vector<2x32xf32>
    %378 = arith.mulf %373, %377 : vector<2x32xf32>
    %c5_i32_79 = arith.constant 5 : i32
    %379 = vector.broadcast %c5_i32_79 : i32 to vector<2x32xi32>
    %380 = arith.cmpi sgt, %10, %379 : vector<2x32xi32>
    %cst_80 = arith.constant 0.000000e+00 : f32
    %381 = vector.broadcast %cst_80 : f32 to vector<2x32xf32>
    %382 = arith.select %380, %378, %381 : vector<2x32xi1>, vector<2x32xf32>
    %383 = arith.select %380, %378, %357 : vector<2x32xi1>, vector<2x32xf32>
    %384 = arith.select %380, %376, %358 : vector<2x32xi1>, vector<2x32xf32>
    %cst_81 = arith.constant dense<0.000000e+00> : vector<2x128xf32>
    %385 = tpu.matmul %195, %224, %cst_81 {dimension_numbers = #tpu.dot_dimension_numbers<[1], [0], [0], [1], [0, 0, 1, 1], [], []>} : vector<2x32xf32>, vector<32x128xf32>, vector<2x128xf32> -> vector<2x128xf32>
    %386 = vector.broadcast %226 : vector<1x128xf32> to vector<2x128xf32>
    %387 = arith.addf %385, %386 : vector<2x128xf32>
    %cst_82 = arith.constant dense<0.000000e+00> : vector<2x128xf32>
    %388 = tpu.matmul %383, %222, %cst_82 {dimension_numbers = #tpu.dot_dimension_numbers<[1], [0], [0], [1], [0, 0, 1, 1], [], []>} : vector<2x32xf32>, vector<32x128xf32>, vector<2x128xf32> -> vector<2x128xf32>
    %389 = arith.addf %387, %388 : vector<2x128xf32>
    %390 = arith.negf %389 : vector<2x128xf32>
    %391 = math.exp %390 : vector<2x128xf32>
    %cst_83 = arith.constant 1.000000e+00 : f32
    %392 = vector.broadcast %cst_83 : f32 to vector<2x128xf32>
    %393 = arith.addf %392, %391 : vector<2x128xf32>
    %394 = arith.divf %392, %393 : vector<2x128xf32>
    %395 = math.tanh %389 : vector<2x128xf32>
    %396 = vector.extract_strided_slice %394 {offsets = [0, 0], sizes = [2, 32], strides = [1, 1]} : vector<2x128xf32> to vector<2x32xf32>
    %397 = vector.extract_strided_slice %394 {offsets = [0, 32], sizes = [2, 32], strides = [1, 1]} : vector<2x128xf32> to vector<2x32xf32>
    %398 = vector.extract_strided_slice %395 {offsets = [0, 64], sizes = [2, 32], strides = [1, 1]} : vector<2x128xf32> to vector<2x32xf32>
    %399 = vector.extract_strided_slice %394 {offsets = [0, 96], sizes = [2, 32], strides = [1, 1]} : vector<2x128xf32> to vector<2x32xf32>
    %400 = arith.mulf %397, %384 : vector<2x32xf32>
    %401 = arith.mulf %396, %398 : vector<2x32xf32>
    %402 = arith.addf %400, %401 : vector<2x32xf32>
    %403 = math.tanh %402 : vector<2x32xf32>
    %404 = arith.mulf %399, %403 : vector<2x32xf32>
    %c6_i32_84 = arith.constant 6 : i32
    %405 = vector.broadcast %c6_i32_84 : i32 to vector<2x32xi32>
    %406 = arith.cmpi sgt, %10, %405 : vector<2x32xi32>
    %cst_85 = arith.constant 0.000000e+00 : f32
    %407 = vector.broadcast %cst_85 : f32 to vector<2x32xf32>
    %408 = arith.select %406, %404, %407 : vector<2x32xi1>, vector<2x32xf32>
    %409 = arith.select %406, %404, %383 : vector<2x32xi1>, vector<2x32xf32>
    %410 = arith.select %406, %402, %384 : vector<2x32xi1>, vector<2x32xf32>
    %cst_86 = arith.constant dense<0.000000e+00> : vector<2x128xf32>
    %411 = tpu.matmul %220, %224, %cst_86 {dimension_numbers = #tpu.dot_dimension_numbers<[1], [0], [0], [1], [0, 0, 1, 1], [], []>} : vector<2x32xf32>, vector<32x128xf32>, vector<2x128xf32> -> vector<2x128xf32>
    %412 = vector.broadcast %226 : vector<1x128xf32> to vector<2x128xf32>
    %413 = arith.addf %411, %412 : vector<2x128xf32>
    %cst_87 = arith.constant dense<0.000000e+00> : vector<2x128xf32>
    %414 = tpu.matmul %409, %222, %cst_87 {dimension_numbers = #tpu.dot_dimension_numbers<[1], [0], [0], [1], [0, 0, 1, 1], [], []>} : vector<2x32xf32>, vector<32x128xf32>, vector<2x128xf32> -> vector<2x128xf32>
    %415 = arith.addf %413, %414 : vector<2x128xf32>
    %416 = arith.negf %415 : vector<2x128xf32>
    %417 = math.exp %416 : vector<2x128xf32>
    %cst_88 = arith.constant 1.000000e+00 : f32
    %418 = vector.broadcast %cst_88 : f32 to vector<2x128xf32>
    %419 = arith.addf %418, %417 : vector<2x128xf32>
    %420 = arith.divf %418, %419 : vector<2x128xf32>
    %421 = math.tanh %415 : vector<2x128xf32>
    %422 = vector.extract_strided_slice %420 {offsets = [0, 0], sizes = [2, 32], strides = [1, 1]} : vector<2x128xf32> to vector<2x32xf32>
    %423 = vector.extract_strided_slice %420 {offsets = [0, 32], sizes = [2, 32], strides = [1, 1]} : vector<2x128xf32> to vector<2x32xf32>
    %424 = vector.extract_strided_slice %421 {offsets = [0, 64], sizes = [2, 32], strides = [1, 1]} : vector<2x128xf32> to vector<2x32xf32>
    %425 = vector.extract_strided_slice %420 {offsets = [0, 96], sizes = [2, 32], strides = [1, 1]} : vector<2x128xf32> to vector<2x32xf32>
    %426 = arith.mulf %423, %410 : vector<2x32xf32>
    %427 = arith.mulf %422, %424 : vector<2x32xf32>
    %428 = arith.addf %426, %427 : vector<2x32xf32>
    %429 = math.tanh %428 : vector<2x32xf32>
    %430 = arith.mulf %425, %429 : vector<2x32xf32>
    %c7_i32_89 = arith.constant 7 : i32
    %431 = vector.broadcast %c7_i32_89 : i32 to vector<2x32xi32>
    %432 = arith.cmpi sgt, %10, %431 : vector<2x32xi32>
    %cst_90 = arith.constant 0.000000e+00 : f32
    %433 = vector.broadcast %cst_90 : f32 to vector<2x32xf32>
    %434 = arith.select %432, %430, %433 : vector<2x32xi1>, vector<2x32xf32>
    %c2 = arith.constant 2 : index
    %c0_91 = arith.constant 0 : index
    %c0_92 = arith.constant 0 : index
    %435 = vector.load %arg4[%c2, %c0_91, %c0_92] : memref<3x32x128xf32, #tpu.memory_space<vmem>>, vector<1x32x128xf32>
    %436 = vector.shape_cast %435 : vector<1x32x128xf32> to vector<32x128xf32>
    %c2_93 = arith.constant 2 : index
    %c0_94 = arith.constant 0 : index
    %c0_95 = arith.constant 0 : index
    %437 = vector.load %arg3[%c2_93, %c0_94, %c0_95] : memref<3x32x128xf32, #tpu.memory_space<vmem>>, vector<1x32x128xf32>
    %438 = vector.shape_cast %437 : vector<1x32x128xf32> to vector<32x128xf32>
    %c2_96 = arith.constant 2 : index
    %c0_97 = arith.constant 0 : index
    %c0_98 = arith.constant 0 : index
    %439 = vector.load %arg5[%c2_96, %c0_97, %c0_98] : memref<3x1x128xf32, #tpu.memory_space<vmem>>, vector<1x1x128xf32>
    %440 = vector.shape_cast %439 : vector<1x1x128xf32> to vector<1x128xf32>
    %cst_99 = arith.constant 0.000000e+00 : f32
    %441 = vector.broadcast %cst_99 : f32 to vector<2x32xf32>
    %cst_100 = arith.constant 0.000000e+00 : f32
    %442 = vector.broadcast %cst_100 : f32 to vector<2x32xf32>
    %cst_101 = arith.constant dense<0.000000e+00> : vector<2x128xf32>
    %443 = tpu.matmul %252, %438, %cst_101 {dimension_numbers = #tpu.dot_dimension_numbers<[1], [0], [0], [1], [0, 0, 1, 1], [], []>} : vector<2x32xf32>, vector<32x128xf32>, vector<2x128xf32> -> vector<2x128xf32>
    %444 = vector.broadcast %440 : vector<1x128xf32> to vector<2x128xf32>
    %445 = arith.addf %443, %444 : vector<2x128xf32>
    %cst_102 = arith.constant dense<0.000000e+00> : vector<2x128xf32>
    %446 = tpu.matmul %441, %436, %cst_102 {dimension_numbers = #tpu.dot_dimension_numbers<[1], [0], [0], [1], [0, 0, 1, 1], [], []>} : vector<2x32xf32>, vector<32x128xf32>, vector<2x128xf32> -> vector<2x128xf32>
    %447 = arith.addf %445, %446 : vector<2x128xf32>
    %448 = arith.negf %447 : vector<2x128xf32>
    %449 = math.exp %448 : vector<2x128xf32>
    %cst_103 = arith.constant 1.000000e+00 : f32
    %450 = vector.broadcast %cst_103 : f32 to vector<2x128xf32>
    %451 = arith.addf %450, %449 : vector<2x128xf32>
    %452 = arith.divf %450, %451 : vector<2x128xf32>
    %453 = math.tanh %447 : vector<2x128xf32>
    %454 = vector.extract_strided_slice %452 {offsets = [0, 0], sizes = [2, 32], strides = [1, 1]} : vector<2x128xf32> to vector<2x32xf32>
    %455 = vector.extract_strided_slice %452 {offsets = [0, 32], sizes = [2, 32], strides = [1, 1]} : vector<2x128xf32> to vector<2x32xf32>
    %456 = vector.extract_strided_slice %453 {offsets = [0, 64], sizes = [2, 32], strides = [1, 1]} : vector<2x128xf32> to vector<2x32xf32>
    %457 = vector.extract_strided_slice %452 {offsets = [0, 96], sizes = [2, 32], strides = [1, 1]} : vector<2x128xf32> to vector<2x32xf32>
    %458 = arith.mulf %455, %442 : vector<2x32xf32>
    %459 = arith.mulf %454, %456 : vector<2x32xf32>
    %460 = arith.addf %458, %459 : vector<2x32xf32>
    %461 = math.tanh %460 : vector<2x32xf32>
    %462 = arith.mulf %457, %461 : vector<2x32xf32>
    %c0_i32_104 = arith.constant 0 : i32
    %463 = vector.broadcast %c0_i32_104 : i32 to vector<2x32xi32>
    %464 = arith.cmpi sgt, %10, %463 : vector<2x32xi32>
    %cst_105 = arith.constant 0.000000e+00 : f32
    %465 = vector.broadcast %cst_105 : f32 to vector<2x32xf32>
    %466 = arith.select %464, %462, %465 : vector<2x32xi1>, vector<2x32xf32>
    %467 = arith.select %464, %462, %441 : vector<2x32xi1>, vector<2x32xf32>
    %468 = arith.select %464, %460, %442 : vector<2x32xi1>, vector<2x32xf32>
    %cst_106 = arith.constant dense<0.000000e+00> : vector<2x128xf32>
    %469 = tpu.matmul %278, %438, %cst_106 {dimension_numbers = #tpu.dot_dimension_numbers<[1], [0], [0], [1], [0, 0, 1, 1], [], []>} : vector<2x32xf32>, vector<32x128xf32>, vector<2x128xf32> -> vector<2x128xf32>
    %470 = vector.broadcast %440 : vector<1x128xf32> to vector<2x128xf32>
    %471 = arith.addf %469, %470 : vector<2x128xf32>
    %cst_107 = arith.constant dense<0.000000e+00> : vector<2x128xf32>
    %472 = tpu.matmul %467, %436, %cst_107 {dimension_numbers = #tpu.dot_dimension_numbers<[1], [0], [0], [1], [0, 0, 1, 1], [], []>} : vector<2x32xf32>, vector<32x128xf32>, vector<2x128xf32> -> vector<2x128xf32>
    %473 = arith.addf %471, %472 : vector<2x128xf32>
    %474 = arith.negf %473 : vector<2x128xf32>
    %475 = math.exp %474 : vector<2x128xf32>
    %cst_108 = arith.constant 1.000000e+00 : f32
    %476 = vector.broadcast %cst_108 : f32 to vector<2x128xf32>
    %477 = arith.addf %476, %475 : vector<2x128xf32>
    %478 = arith.divf %476, %477 : vector<2x128xf32>
    %479 = math.tanh %473 : vector<2x128xf32>
    %480 = vector.extract_strided_slice %478 {offsets = [0, 0], sizes = [2, 32], strides = [1, 1]} : vector<2x128xf32> to vector<2x32xf32>
    %481 = vector.extract_strided_slice %478 {offsets = [0, 32], sizes = [2, 32], strides = [1, 1]} : vector<2x128xf32> to vector<2x32xf32>
    %482 = vector.extract_strided_slice %479 {offsets = [0, 64], sizes = [2, 32], strides = [1, 1]} : vector<2x128xf32> to vector<2x32xf32>
    %483 = vector.extract_strided_slice %478 {offsets = [0, 96], sizes = [2, 32], strides = [1, 1]} : vector<2x128xf32> to vector<2x32xf32>
    %484 = arith.mulf %481, %468 : vector<2x32xf32>
    %485 = arith.mulf %480, %482 : vector<2x32xf32>
    %486 = arith.addf %484, %485 : vector<2x32xf32>
    %487 = math.tanh %486 : vector<2x32xf32>
    %488 = arith.mulf %483, %487 : vector<2x32xf32>
    %c1_i32_109 = arith.constant 1 : i32
    %489 = vector.broadcast %c1_i32_109 : i32 to vector<2x32xi32>
    %490 = arith.cmpi sgt, %10, %489 : vector<2x32xi32>
    %cst_110 = arith.constant 0.000000e+00 : f32
    %491 = vector.broadcast %cst_110 : f32 to vector<2x32xf32>
    %492 = arith.select %490, %488, %491 : vector<2x32xi1>, vector<2x32xf32>
    %493 = arith.select %490, %488, %467 : vector<2x32xi1>, vector<2x32xf32>
    %494 = arith.select %490, %486, %468 : vector<2x32xi1>, vector<2x32xf32>
    %cst_111 = arith.constant dense<0.000000e+00> : vector<2x128xf32>
    %495 = tpu.matmul %304, %438, %cst_111 {dimension_numbers = #tpu.dot_dimension_numbers<[1], [0], [0], [1], [0, 0, 1, 1], [], []>} : vector<2x32xf32>, vector<32x128xf32>, vector<2x128xf32> -> vector<2x128xf32>
    %496 = vector.broadcast %440 : vector<1x128xf32> to vector<2x128xf32>
    %497 = arith.addf %495, %496 : vector<2x128xf32>
    %cst_112 = arith.constant dense<0.000000e+00> : vector<2x128xf32>
    %498 = tpu.matmul %493, %436, %cst_112 {dimension_numbers = #tpu.dot_dimension_numbers<[1], [0], [0], [1], [0, 0, 1, 1], [], []>} : vector<2x32xf32>, vector<32x128xf32>, vector<2x128xf32> -> vector<2x128xf32>
    %499 = arith.addf %497, %498 : vector<2x128xf32>
    %500 = arith.negf %499 : vector<2x128xf32>
    %501 = math.exp %500 : vector<2x128xf32>
    %cst_113 = arith.constant 1.000000e+00 : f32
    %502 = vector.broadcast %cst_113 : f32 to vector<2x128xf32>
    %503 = arith.addf %502, %501 : vector<2x128xf32>
    %504 = arith.divf %502, %503 : vector<2x128xf32>
    %505 = math.tanh %499 : vector<2x128xf32>
    %506 = vector.extract_strided_slice %504 {offsets = [0, 0], sizes = [2, 32], strides = [1, 1]} : vector<2x128xf32> to vector<2x32xf32>
    %507 = vector.extract_strided_slice %504 {offsets = [0, 32], sizes = [2, 32], strides = [1, 1]} : vector<2x128xf32> to vector<2x32xf32>
    %508 = vector.extract_strided_slice %505 {offsets = [0, 64], sizes = [2, 32], strides = [1, 1]} : vector<2x128xf32> to vector<2x32xf32>
    %509 = vector.extract_strided_slice %504 {offsets = [0, 96], sizes = [2, 32], strides = [1, 1]} : vector<2x128xf32> to vector<2x32xf32>
    %510 = arith.mulf %507, %494 : vector<2x32xf32>
    %511 = arith.mulf %506, %508 : vector<2x32xf32>
    %512 = arith.addf %510, %511 : vector<2x32xf32>
    %513 = math.tanh %512 : vector<2x32xf32>
    %514 = arith.mulf %509, %513 : vector<2x32xf32>
    %c2_i32_114 = arith.constant 2 : i32
    %515 = vector.broadcast %c2_i32_114 : i32 to vector<2x32xi32>
    %516 = arith.cmpi sgt, %10, %515 : vector<2x32xi32>
    %cst_115 = arith.constant 0.000000e+00 : f32
    %517 = vector.broadcast %cst_115 : f32 to vector<2x32xf32>
    %518 = arith.select %516, %514, %517 : vector<2x32xi1>, vector<2x32xf32>
    %519 = arith.select %516, %514, %493 : vector<2x32xi1>, vector<2x32xf32>
    %520 = arith.select %516, %512, %494 : vector<2x32xi1>, vector<2x32xf32>
    %cst_116 = arith.constant dense<0.000000e+00> : vector<2x128xf32>
    %521 = tpu.matmul %330, %438, %cst_116 {dimension_numbers = #tpu.dot_dimension_numbers<[1], [0], [0], [1], [0, 0, 1, 1], [], []>} : vector<2x32xf32>, vector<32x128xf32>, vector<2x128xf32> -> vector<2x128xf32>
    %522 = vector.broadcast %440 : vector<1x128xf32> to vector<2x128xf32>
    %523 = arith.addf %521, %522 : vector<2x128xf32>
    %cst_117 = arith.constant dense<0.000000e+00> : vector<2x128xf32>
    %524 = tpu.matmul %519, %436, %cst_117 {dimension_numbers = #tpu.dot_dimension_numbers<[1], [0], [0], [1], [0, 0, 1, 1], [], []>} : vector<2x32xf32>, vector<32x128xf32>, vector<2x128xf32> -> vector<2x128xf32>
    %525 = arith.addf %523, %524 : vector<2x128xf32>
    %526 = arith.negf %525 : vector<2x128xf32>
    %527 = math.exp %526 : vector<2x128xf32>
    %cst_118 = arith.constant 1.000000e+00 : f32
    %528 = vector.broadcast %cst_118 : f32 to vector<2x128xf32>
    %529 = arith.addf %528, %527 : vector<2x128xf32>
    %530 = arith.divf %528, %529 : vector<2x128xf32>
    %531 = math.tanh %525 : vector<2x128xf32>
    %532 = vector.extract_strided_slice %530 {offsets = [0, 0], sizes = [2, 32], strides = [1, 1]} : vector<2x128xf32> to vector<2x32xf32>
    %533 = vector.extract_strided_slice %530 {offsets = [0, 32], sizes = [2, 32], strides = [1, 1]} : vector<2x128xf32> to vector<2x32xf32>
    %534 = vector.extract_strided_slice %531 {offsets = [0, 64], sizes = [2, 32], strides = [1, 1]} : vector<2x128xf32> to vector<2x32xf32>
    %535 = vector.extract_strided_slice %530 {offsets = [0, 96], sizes = [2, 32], strides = [1, 1]} : vector<2x128xf32> to vector<2x32xf32>
    %536 = arith.mulf %533, %520 : vector<2x32xf32>
    %537 = arith.mulf %532, %534 : vector<2x32xf32>
    %538 = arith.addf %536, %537 : vector<2x32xf32>
    %539 = math.tanh %538 : vector<2x32xf32>
    %540 = arith.mulf %535, %539 : vector<2x32xf32>
    %c3_i32_119 = arith.constant 3 : i32
    %541 = vector.broadcast %c3_i32_119 : i32 to vector<2x32xi32>
    %542 = arith.cmpi sgt, %10, %541 : vector<2x32xi32>
    %cst_120 = arith.constant 0.000000e+00 : f32
    %543 = vector.broadcast %cst_120 : f32 to vector<2x32xf32>
    %544 = arith.select %542, %540, %543 : vector<2x32xi1>, vector<2x32xf32>
    %545 = arith.select %542, %540, %519 : vector<2x32xi1>, vector<2x32xf32>
    %546 = arith.select %542, %538, %520 : vector<2x32xi1>, vector<2x32xf32>
    %cst_121 = arith.constant dense<0.000000e+00> : vector<2x128xf32>
    %547 = tpu.matmul %356, %438, %cst_121 {dimension_numbers = #tpu.dot_dimension_numbers<[1], [0], [0], [1], [0, 0, 1, 1], [], []>} : vector<2x32xf32>, vector<32x128xf32>, vector<2x128xf32> -> vector<2x128xf32>
    %548 = vector.broadcast %440 : vector<1x128xf32> to vector<2x128xf32>
    %549 = arith.addf %547, %548 : vector<2x128xf32>
    %cst_122 = arith.constant dense<0.000000e+00> : vector<2x128xf32>
    %550 = tpu.matmul %545, %436, %cst_122 {dimension_numbers = #tpu.dot_dimension_numbers<[1], [0], [0], [1], [0, 0, 1, 1], [], []>} : vector<2x32xf32>, vector<32x128xf32>, vector<2x128xf32> -> vector<2x128xf32>
    %551 = arith.addf %549, %550 : vector<2x128xf32>
    %552 = arith.negf %551 : vector<2x128xf32>
    %553 = math.exp %552 : vector<2x128xf32>
    %cst_123 = arith.constant 1.000000e+00 : f32
    %554 = vector.broadcast %cst_123 : f32 to vector<2x128xf32>
    %555 = arith.addf %554, %553 : vector<2x128xf32>
    %556 = arith.divf %554, %555 : vector<2x128xf32>
    %557 = math.tanh %551 : vector<2x128xf32>
    %558 = vector.extract_strided_slice %556 {offsets = [0, 0], sizes = [2, 32], strides = [1, 1]} : vector<2x128xf32> to vector<2x32xf32>
    %559 = vector.extract_strided_slice %556 {offsets = [0, 32], sizes = [2, 32], strides = [1, 1]} : vector<2x128xf32> to vector<2x32xf32>
    %560 = vector.extract_strided_slice %557 {offsets = [0, 64], sizes = [2, 32], strides = [1, 1]} : vector<2x128xf32> to vector<2x32xf32>
    %561 = vector.extract_strided_slice %556 {offsets = [0, 96], sizes = [2, 32], strides = [1, 1]} : vector<2x128xf32> to vector<2x32xf32>
    %562 = arith.mulf %559, %546 : vector<2x32xf32>
    %563 = arith.mulf %558, %560 : vector<2x32xf32>
    %564 = arith.addf %562, %563 : vector<2x32xf32>
    %565 = math.tanh %564 : vector<2x32xf32>
    %566 = arith.mulf %561, %565 : vector<2x32xf32>
    %c4_i32_124 = arith.constant 4 : i32
    %567 = vector.broadcast %c4_i32_124 : i32 to vector<2x32xi32>
    %568 = arith.cmpi sgt, %10, %567 : vector<2x32xi32>
    %cst_125 = arith.constant 0.000000e+00 : f32
    %569 = vector.broadcast %cst_125 : f32 to vector<2x32xf32>
    %570 = arith.select %568, %566, %569 : vector<2x32xi1>, vector<2x32xf32>
    %571 = arith.select %568, %566, %545 : vector<2x32xi1>, vector<2x32xf32>
    %572 = arith.select %568, %564, %546 : vector<2x32xi1>, vector<2x32xf32>
    %cst_126 = arith.constant dense<0.000000e+00> : vector<2x128xf32>
    %573 = tpu.matmul %382, %438, %cst_126 {dimension_numbers = #tpu.dot_dimension_numbers<[1], [0], [0], [1], [0, 0, 1, 1], [], []>} : vector<2x32xf32>, vector<32x128xf32>, vector<2x128xf32> -> vector<2x128xf32>
    %574 = vector.broadcast %440 : vector<1x128xf32> to vector<2x128xf32>
    %575 = arith.addf %573, %574 : vector<2x128xf32>
    %cst_127 = arith.constant dense<0.000000e+00> : vector<2x128xf32>
    %576 = tpu.matmul %571, %436, %cst_127 {dimension_numbers = #tpu.dot_dimension_numbers<[1], [0], [0], [1], [0, 0, 1, 1], [], []>} : vector<2x32xf32>, vector<32x128xf32>, vector<2x128xf32> -> vector<2x128xf32>
    %577 = arith.addf %575, %576 : vector<2x128xf32>
    %578 = arith.negf %577 : vector<2x128xf32>
    %579 = math.exp %578 : vector<2x128xf32>
    %cst_128 = arith.constant 1.000000e+00 : f32
    %580 = vector.broadcast %cst_128 : f32 to vector<2x128xf32>
    %581 = arith.addf %580, %579 : vector<2x128xf32>
    %582 = arith.divf %580, %581 : vector<2x128xf32>
    %583 = math.tanh %577 : vector<2x128xf32>
    %584 = vector.extract_strided_slice %582 {offsets = [0, 0], sizes = [2, 32], strides = [1, 1]} : vector<2x128xf32> to vector<2x32xf32>
    %585 = vector.extract_strided_slice %582 {offsets = [0, 32], sizes = [2, 32], strides = [1, 1]} : vector<2x128xf32> to vector<2x32xf32>
    %586 = vector.extract_strided_slice %583 {offsets = [0, 64], sizes = [2, 32], strides = [1, 1]} : vector<2x128xf32> to vector<2x32xf32>
    %587 = vector.extract_strided_slice %582 {offsets = [0, 96], sizes = [2, 32], strides = [1, 1]} : vector<2x128xf32> to vector<2x32xf32>
    %588 = arith.mulf %585, %572 : vector<2x32xf32>
    %589 = arith.mulf %584, %586 : vector<2x32xf32>
    %590 = arith.addf %588, %589 : vector<2x32xf32>
    %591 = math.tanh %590 : vector<2x32xf32>
    %592 = arith.mulf %587, %591 : vector<2x32xf32>
    %c5_i32_129 = arith.constant 5 : i32
    %593 = vector.broadcast %c5_i32_129 : i32 to vector<2x32xi32>
    %594 = arith.cmpi sgt, %10, %593 : vector<2x32xi32>
    %cst_130 = arith.constant 0.000000e+00 : f32
    %595 = vector.broadcast %cst_130 : f32 to vector<2x32xf32>
    %596 = arith.select %594, %592, %595 : vector<2x32xi1>, vector<2x32xf32>
    %597 = arith.select %594, %592, %571 : vector<2x32xi1>, vector<2x32xf32>
    %598 = arith.select %594, %590, %572 : vector<2x32xi1>, vector<2x32xf32>
    %cst_131 = arith.constant dense<0.000000e+00> : vector<2x128xf32>
    %599 = tpu.matmul %408, %438, %cst_131 {dimension_numbers = #tpu.dot_dimension_numbers<[1], [0], [0], [1], [0, 0, 1, 1], [], []>} : vector<2x32xf32>, vector<32x128xf32>, vector<2x128xf32> -> vector<2x128xf32>
    %600 = vector.broadcast %440 : vector<1x128xf32> to vector<2x128xf32>
    %601 = arith.addf %599, %600 : vector<2x128xf32>
    %cst_132 = arith.constant dense<0.000000e+00> : vector<2x128xf32>
    %602 = tpu.matmul %597, %436, %cst_132 {dimension_numbers = #tpu.dot_dimension_numbers<[1], [0], [0], [1], [0, 0, 1, 1], [], []>} : vector<2x32xf32>, vector<32x128xf32>, vector<2x128xf32> -> vector<2x128xf32>
    %603 = arith.addf %601, %602 : vector<2x128xf32>
    %604 = arith.negf %603 : vector<2x128xf32>
    %605 = math.exp %604 : vector<2x128xf32>
    %cst_133 = arith.constant 1.000000e+00 : f32
    %606 = vector.broadcast %cst_133 : f32 to vector<2x128xf32>
    %607 = arith.addf %606, %605 : vector<2x128xf32>
    %608 = arith.divf %606, %607 : vector<2x128xf32>
    %609 = math.tanh %603 : vector<2x128xf32>
    %610 = vector.extract_strided_slice %608 {offsets = [0, 0], sizes = [2, 32], strides = [1, 1]} : vector<2x128xf32> to vector<2x32xf32>
    %611 = vector.extract_strided_slice %608 {offsets = [0, 32], sizes = [2, 32], strides = [1, 1]} : vector<2x128xf32> to vector<2x32xf32>
    %612 = vector.extract_strided_slice %609 {offsets = [0, 64], sizes = [2, 32], strides = [1, 1]} : vector<2x128xf32> to vector<2x32xf32>
    %613 = vector.extract_strided_slice %608 {offsets = [0, 96], sizes = [2, 32], strides = [1, 1]} : vector<2x128xf32> to vector<2x32xf32>
    %614 = arith.mulf %611, %598 : vector<2x32xf32>
    %615 = arith.mulf %610, %612 : vector<2x32xf32>
    %616 = arith.addf %614, %615 : vector<2x32xf32>
    %617 = math.tanh %616 : vector<2x32xf32>
    %618 = arith.mulf %613, %617 : vector<2x32xf32>
    %c6_i32_134 = arith.constant 6 : i32
    %619 = vector.broadcast %c6_i32_134 : i32 to vector<2x32xi32>
    %620 = arith.cmpi sgt, %10, %619 : vector<2x32xi32>
    %cst_135 = arith.constant 0.000000e+00 : f32
    %621 = vector.broadcast %cst_135 : f32 to vector<2x32xf32>
    %622 = arith.select %620, %618, %621 : vector<2x32xi1>, vector<2x32xf32>
    %623 = arith.select %620, %618, %597 : vector<2x32xi1>, vector<2x32xf32>
    %624 = arith.select %620, %616, %598 : vector<2x32xi1>, vector<2x32xf32>
    %cst_136 = arith.constant dense<0.000000e+00> : vector<2x128xf32>
    %625 = tpu.matmul %434, %438, %cst_136 {dimension_numbers = #tpu.dot_dimension_numbers<[1], [0], [0], [1], [0, 0, 1, 1], [], []>} : vector<2x32xf32>, vector<32x128xf32>, vector<2x128xf32> -> vector<2x128xf32>
    %626 = vector.broadcast %440 : vector<1x128xf32> to vector<2x128xf32>
    %627 = arith.addf %625, %626 : vector<2x128xf32>
    %cst_137 = arith.constant dense<0.000000e+00> : vector<2x128xf32>
    %628 = tpu.matmul %623, %436, %cst_137 {dimension_numbers = #tpu.dot_dimension_numbers<[1], [0], [0], [1], [0, 0, 1, 1], [], []>} : vector<2x32xf32>, vector<32x128xf32>, vector<2x128xf32> -> vector<2x128xf32>
    %629 = arith.addf %627, %628 : vector<2x128xf32>
    %630 = arith.negf %629 : vector<2x128xf32>
    %631 = math.exp %630 : vector<2x128xf32>
    %cst_138 = arith.constant 1.000000e+00 : f32
    %632 = vector.broadcast %cst_138 : f32 to vector<2x128xf32>
    %633 = arith.addf %632, %631 : vector<2x128xf32>
    %634 = arith.divf %632, %633 : vector<2x128xf32>
    %635 = math.tanh %629 : vector<2x128xf32>
    %636 = vector.extract_strided_slice %634 {offsets = [0, 0], sizes = [2, 32], strides = [1, 1]} : vector<2x128xf32> to vector<2x32xf32>
    %637 = vector.extract_strided_slice %634 {offsets = [0, 32], sizes = [2, 32], strides = [1, 1]} : vector<2x128xf32> to vector<2x32xf32>
    %638 = vector.extract_strided_slice %635 {offsets = [0, 64], sizes = [2, 32], strides = [1, 1]} : vector<2x128xf32> to vector<2x32xf32>
    %639 = vector.extract_strided_slice %634 {offsets = [0, 96], sizes = [2, 32], strides = [1, 1]} : vector<2x128xf32> to vector<2x32xf32>
    %640 = arith.mulf %637, %624 : vector<2x32xf32>
    %641 = arith.mulf %636, %638 : vector<2x32xf32>
    %642 = arith.addf %640, %641 : vector<2x32xf32>
    %643 = math.tanh %642 : vector<2x32xf32>
    %644 = arith.mulf %639, %643 : vector<2x32xf32>
    %c7_i32_139 = arith.constant 7 : i32
    %645 = vector.broadcast %c7_i32_139 : i32 to vector<2x32xi32>
    %646 = arith.cmpi sgt, %10, %645 : vector<2x32xi32>
    %cst_140 = arith.constant 0.000000e+00 : f32
    %647 = vector.broadcast %cst_140 : f32 to vector<2x32xf32>
    %648 = arith.select %646, %644, %647 : vector<2x32xi1>, vector<2x32xf32>
    %c0_141 = arith.constant 0 : index
    %c0_142 = arith.constant 0 : index
    %649 = vector.load %arg6[%c0_141, %c0_142] : memref<1x32xf32, #tpu.memory_space<vmem>>, vector<1x32xf32>
    %650 = vector.broadcast %649 : vector<1x32xf32> to vector<2x32xf32>
    %651 = arith.mulf %466, %650 : vector<2x32xf32>
    %cst_143 = arith.constant dense<0.000000e+00> : vector<2xf32>
    %652 = vector.multi_reduction <add>, %651, %cst_143 [1] : vector<2x32xf32> to vector<2xf32>
    %653 = vector.shape_cast %652 : vector<2xf32> to vector<2x1xf32>
    %654 = vector.broadcast %649 : vector<1x32xf32> to vector<2x32xf32>
    %655 = arith.mulf %492, %654 : vector<2x32xf32>
    %cst_144 = arith.constant dense<0.000000e+00> : vector<2xf32>
    %656 = vector.multi_reduction <add>, %655, %cst_144 [1] : vector<2x32xf32> to vector<2xf32>
    %657 = vector.shape_cast %656 : vector<2xf32> to vector<2x1xf32>
    %658 = vector.broadcast %649 : vector<1x32xf32> to vector<2x32xf32>
    %659 = arith.mulf %518, %658 : vector<2x32xf32>
    %cst_145 = arith.constant dense<0.000000e+00> : vector<2xf32>
    %660 = vector.multi_reduction <add>, %659, %cst_145 [1] : vector<2x32xf32> to vector<2xf32>
    %661 = vector.shape_cast %660 : vector<2xf32> to vector<2x1xf32>
    %662 = vector.broadcast %649 : vector<1x32xf32> to vector<2x32xf32>
    %663 = arith.mulf %544, %662 : vector<2x32xf32>
    %cst_146 = arith.constant dense<0.000000e+00> : vector<2xf32>
    %664 = vector.multi_reduction <add>, %663, %cst_146 [1] : vector<2x32xf32> to vector<2xf32>
    %665 = vector.shape_cast %664 : vector<2xf32> to vector<2x1xf32>
    %666 = vector.broadcast %649 : vector<1x32xf32> to vector<2x32xf32>
    %667 = arith.mulf %570, %666 : vector<2x32xf32>
    %cst_147 = arith.constant dense<0.000000e+00> : vector<2xf32>
    %668 = vector.multi_reduction <add>, %667, %cst_147 [1] : vector<2x32xf32> to vector<2xf32>
    %669 = vector.shape_cast %668 : vector<2xf32> to vector<2x1xf32>
    %670 = vector.broadcast %649 : vector<1x32xf32> to vector<2x32xf32>
    %671 = arith.mulf %596, %670 : vector<2x32xf32>
    %cst_148 = arith.constant dense<0.000000e+00> : vector<2xf32>
    %672 = vector.multi_reduction <add>, %671, %cst_148 [1] : vector<2x32xf32> to vector<2xf32>
    %673 = vector.shape_cast %672 : vector<2xf32> to vector<2x1xf32>
    %674 = vector.broadcast %649 : vector<1x32xf32> to vector<2x32xf32>
    %675 = arith.mulf %622, %674 : vector<2x32xf32>
    %cst_149 = arith.constant dense<0.000000e+00> : vector<2xf32>
    %676 = vector.multi_reduction <add>, %675, %cst_149 [1] : vector<2x32xf32> to vector<2xf32>
    %677 = vector.shape_cast %676 : vector<2xf32> to vector<2x1xf32>
    %678 = vector.broadcast %649 : vector<1x32xf32> to vector<2x32xf32>
    %679 = arith.mulf %648, %678 : vector<2x32xf32>
    %cst_150 = arith.constant dense<0.000000e+00> : vector<2xf32>
    %680 = vector.multi_reduction <add>, %679, %cst_150 [1] : vector<2x32xf32> to vector<2xf32>
    %681 = vector.shape_cast %680 : vector<2xf32> to vector<2x1xf32>
    %682 = tpu.concatenate %653, %657, %661, %665, %669, %673, %677, %681 in 1 : vector<2x1xf32>, vector<2x1xf32>, vector<2x1xf32>, vector<2x1xf32>, vector<2x1xf32>, vector<2x1xf32>, vector<2x1xf32>, vector<2x1xf32> -> vector<2x8xf32>
    %c0_151 = arith.constant 0 : index
    %c0_152 = arith.constant 0 : index
    %683 = vector.load %arg7[%c0_151, %c0_152] : memref<1x1xf32, #tpu.memory_space<vmem>>, vector<1x1xf32>
    %684 = vector.broadcast %683 : vector<1x1xf32> to vector<2x8xf32>
    %685 = arith.addf %682, %684 : vector<2x8xf32>
    %c0_153 = arith.constant 0 : index
    %c0_154 = arith.constant 0 : index
    %686 = vector.load %arg8[%c0_153, %c0_154] : memref<2x8xf32, #tpu.memory_space<vmem>>, vector<2x8xf32>
    tpu.vector_store %arg8[%c0_153, %c0_154], %685 {strides = array<i32>} : memref<2x8xf32, #tpu.memory_space<vmem>>, vector<2x8xf32>,
    return
  }
}

</mosaic_0001>

<llo_original>
// kernel: fudge_forward.1
$region0: #{fudge_forward.1}
  #allocation0 [shape = 'u32[]', space=smem, size = 0x4, offset = 0x4, fixed_abs, tag = 'smem constant byte address 0x4 - core index']
  #allocation1 [shape = 'u32[144,128]{1,0:T(1,128)}', space=vmem, size = 0x12000, scoped, tag = 'internal scratch']
  #allocation2 [shape = 'f32[1,1]{1,0:T(1,128)S(1)}', space=vmem, size = 0x200, scoped, tag = 'scoped memory for fudge_forward.1']
  %s0 = inlined_call_operand.vmem [shape: s32[16,1], index: 0, kind: input, shape index: {}]
  %s1 = inlined_call_operand.vmem [shape: s32[2,1], index: 1, kind: input, shape index: {}]
  %s2 = inlined_call_operand.vmem [shape: f32[64,32], index: 2, kind: input, shape index: {}]
  %s3 = inlined_call_operand.vmem [shape: f32[3,32,128], index: 3, kind: input, shape index: {}]
  %s4 = inlined_call_operand.hbm [shape: f32[3,32,128], index: 4, kind: input, shape index: {}]
  %s5 = inlined_call_operand.vmem [shape: f32[3,1,128], index: 5, kind: input, shape index: {}]
  %s6 = inlined_call_operand.vmem [shape: f32[1,32], index: 6, kind: input, shape index: {}]
  %s7 = inlined_call_operand.<no memory space> [shape: f32[1,1], index: 7, kind: input, shape index: {}]
  %s8 = inlined_call_operand.hbm [shape: f32[2,8], index: 8, kind: output, shape index: {}]
  %s9 = sld [smem:[#allocation0]]
  $region46: #{fudge_forward.1} parent=0
    _
  %s11 = ssub.s32 1, %s9
  %s12 = scalar_select 0, %s11, %s9
  %v13 = vstv %s7
  %14 = vst [vmem:[#allocation2] sm:$0x1] %v13
  $region1: #{fudge_forward.1} parent=0
    #allocation3 [shape = 'u8[49152]{0}', space=vmem, size = 0xc000, scoped, tag = 'input window, operand 4, single buffered']
    #allocation4 [shape = 's32[1]{0}', space=sflag, size = 0x4, scoped, tag = 'scoped memory for fudge_forward.1']
    #allocation5 [shape = 's32[1]{0}', space=sflag, size = 0x4, scoped, tag = 'scoped memory for fudge_forward.1']
    #allocation6 [shape = 'u8[1024]{0}', space=vmem, size = 0x400, scoped, tag = 'output window, operand 0, single buffered']
    %15 = vsyncpa [#allocation4], 0
    %16 = vsyncpa [#allocation5], 0
    // Predicated region
    $region2: #{fudge_forward.1} parent=1 // pred_check
      _
    $region3: #{fudge_forward.1} parent=1 // pred_check_branch
      %18 = sbr.rel (0) target = $region5
    $region4: #{fudge_forward.1} parent=1 // pred_region
      _
    $region5: #{fudge_forward.1} parent=1 // pred_fallthru
      _
    // Predicated region
    $region6: #{fudge_forward.1} parent=1 // pred_check
      _
    $region7: #{fudge_forward.1} parent=1 // pred_check_branch
      %20 = sbr.rel (0) target = $region9
    $region8: #{fudge_forward.1} parent=1 // pred_region
      _
    $region9: #{fudge_forward.1} parent=1 // pred_fallthru
      _
    // Predicated region
    $region10: #{fudge_forward.1} parent=1 // pred_check
      _
    $region11: #{fudge_forward.1} parent=1 // pred_check_branch
      %22 = sbr.rel (0) target = $region13
    $region12: #{fudge_forward.1} parent=1 // pred_region
      _
    $region13: #{fudge_forward.1} parent=1 // pred_fallthru
      _
    // Predicated region
    $region14: #{fudge_forward.1} parent=1 // pred_check
      _
    $region15: #{fudge_forward.1} parent=1 // pred_check_branch
      %24 = sbr.rel (0) target = $region17
    $region16: #{fudge_forward.1} parent=1 // pred_region
      _
    $region17: #{fudge_forward.1} parent=1 // pred_fallthru
      _
    // Predicated region
    $region18: #{fudge_forward.1} parent=1 // pred_check
      _
    $region19: #{fudge_forward.1} parent=1 // pred_check_branch
      %26 = sbr.rel (0) target = $region21
    $region20: #{fudge_forward.1} parent=1 // pred_region
      %s28 = ssub.s32 1536, 1536
      %29 = vsyncadd [#allocation4], %s28
      %s30 = sshll.u32 [#allocation3], 4
      %s31 = int_to_ptr.vmem [resolvable:$true] %s30
      %36 = dma.hbm_to_vmem [thread:$0]  %s4, 1536, %s31, [#allocation4], 128, 128, 8
    $region21: #{fudge_forward.1} parent=1 // pred_fallthru
      _
    // Predicated region
    $region22: #{fudge_forward.1} parent=1 // pred_check
      _
    $region23: #{fudge_forward.1} parent=1 // pred_check_branch
      %38 = sbr.rel (0) target = $region25
    $region24: #{fudge_forward.1} parent=1 // pred_region
      _
    $region25: #{fudge_forward.1} parent=1 // pred_fallthru
      _
    // Predicated region
    $region26: #{fudge_forward.1} parent=1 // pred_check
      _
    $region27: #{fudge_forward.1} parent=1 // pred_check_branch
      %40 = sbr.rel (0) target = $region29
    $region28: #{fudge_forward.1} parent=1 // pred_region
      _
    $region29: #{fudge_forward.1} parent=1 // pred_fallthru
      _
    // Predicated region
    $region30: #{fudge_forward.1} parent=1 // pred_check
      _
    $region31: #{fudge_forward.1} parent=1 // pred_check_branch
      %42 = sbr.rel (0) target = $region33
    $region32: #{fudge_forward.1} parent=1 // pred_region
      _
    $region33: #{fudge_forward.1} parent=1 // pred_fallthru
      _
    // Predicated region
    $region34: #{fudge_forward.1} parent=1 // pred_check
      _
    $region35: #{fudge_forward.1} parent=1 // pred_check_branch
      %44 = sbr.rel (0) target = $region37
    $region36: #{fudge_forward.1} parent=1 // pred_region
      %45 = dma.done [#allocation4], 1536
    $region37: #{fudge_forward.1} parent=1 // pred_fallthru
      _
    %v46 = vld [vmem:[%s0] sm:$0xff]
    %v47 = vld [vmem:[%s0 + $0x8] sm:$0xff]
    %v48 = vlaneseq
    %v49 = vand.u32 %v48, 127
    %50 = vset.pattern.permute.xlu0 0
    %51 = vperm.xlu0 %50, %v46
    %v52 = vpop.permute.xlu0 %51
    %53 = vset.pattern.permute.xlu0 0
    %54 = vperm.xlu0 %53, %v47
    %v55 = vpop.permute.xlu0 %54
    %vm56 = vcmp.eq.s32.totalorder %v52, %v49
    %vm57 = vcmp.eq.s32.totalorder %v55, %v49
    %v58 = vsel %vm56, 1, 0
    %v59 = vsel %vm57, 1, 0
    %v60 = vcvt.s32.f32 %v58
    %v61 = vcvt.s32.f32 %v59
    %v62 = vld [vmem:[%s2] sm:$0xff]
    %v63 = vld [vmem:[%s2 + $0x8] sm:$0xff]
    %v64 = vld [vmem:[%s2 + $0x10] sm:$0xff]
    %v65 = vld [vmem:[%s2 + $0x18] sm:$0xff]
    %v66 = vld [vmem:[%s2 + $0x20] sm:$0xff]
    %v67 = vld [vmem:[%s2 + $0x28] sm:$0xff]
    %v68 = vld [vmem:[%s2 + $0x30] sm:$0xff]
    %v69 = vld [vmem:[%s2 + $0x38] sm:$0xff]
    %vm70 = vcmask 523264
    %v72 = vsel %vm70, %v60, 0
    %v75 = vsel %vm70, %v61, 0
    %77 = vmatprep.subr.mxu0 0.0
    %78 = vmatpush1.msra.mxu0 %v62
    %79 = vmatprep.subr.mxu0 0.0
    %80 = vmatpush1.msra.mxu0 %v63
    %81 = vmatprep.subr.mxu0 0.0
    %82 = vmatpush1.msra.mxu0 %v64
    %83 = vmatprep.subr.mxu0 0.0
    %84 = vmatpush1.msra.mxu0 %v65
    %85 = vmatprep.subr.mxu0 0.0
    %86 = vmatpush1.msra.mxu0 %v66
    %87 = vmatprep.subr.mxu0 0.0
    %88 = vmatpush1.msra.mxu0 %v67
    %89 = vmatprep.subr.mxu0 0.0
    %90 = vmatpush1.msra.mxu0 %v68
    %91 = vmatprep.subr.mxu0 0.0
    %92 = vmatpush1.msra.mxu0 %v69
    %93 = vmatprep.subr.mxu0 0.0
    %94 = vmatpush1.msra.mxu0 0.0
    %95 = vmatprep.subr.mxu0 0.0
    %96 = vmatpush1.msra.mxu0 0.0
    %97 = vmatprep.subr.mxu0 0.0
    %98 = vmatpush1.msra.mxu0 0.0
    %99 = vmatprep.subr.mxu0 0.0
    %100 = vmatpush1.msra.mxu0 0.0
    %101 = vmatprep.subr.mxu0 0.0
    %102 = vmatpush1.msra.mxu0 0.0
    %103 = vmatprep.subr.mxu0 0.0
    %104 = vmatpush1.msra.mxu0 0.0
    %105 = vmatprep.subr.mxu0 0.0
    %106 = vmatpush1.msra.mxu0 0.0
    %107 = vmatprep.subr.mxu0 0.0
    %108 = vmatpush1.msra.mxu0 0.0
    %109 = vmatprep.subr.mxu0 0.0
    %110 = vmatpush1.msra.mxu0 0.0
    %111 = vmatprep.subr.mxu0 0.0
    %112 = vmatpush1.msra.mxu0 0.0
    %113 = vmatprep.subr.mxu0 0.0
    %114 = vmatpush1.msra.mxu0 0.0
    %115 = vmatprep.subr.mxu0 0.0
    %116 = vmatpush1.msra.mxu0 0.0
    %117 = vmatprep.subr.mxu0 0.0
    %118 = vmatpush1.msra.mxu0 0.0
    %119 = vmatprep.subr.mxu0 0.0
    %120 = vmatpush1.msra.mxu0 0.0
    %121 = vmatprep.subr.mxu0 0.0
    %122 = vmatpush1.msra.mxu0 0.0
    %123 = vmatprep.subr.mxu0 0.0
    %124 = vmatpush1.msra.mxu0 0.0
    %125 = vmatprep.subr.mxu0 0.0
    %126 = vmatpush1.msra.mxu0 0.0
    %127 = vmatprep.subr.mxu0 0.0
    %128 = vmatpush1.msra.mxu0 0.0
    %129 = vmatprep.subr.mxu0 0.0
    %130 = vmatpush1.msra.mxu0 0.0
    %131 = vmatprep.subr.mxu0 0.0
    %132 = vmatpush1.msra.mxu0 0.0
    %133 = vmatprep.subr.mxu0 0.0
    %134 = vmatpush1.msra.mxu0 0.0
    %135 = vmatprep.subr.mxu0 0.0
    %136 = vmatpush1.msra.mxu0 0.0
    %137 = vmatprep.subr.mxu0 0.0
    %138 = vmatpush1.msra.mxu0 0.0
    %139 = vmatprep.subr.mxu0 0.0
    %140 = vmatpush1.msra.mxu0 0.0
    %141 = vmatprep.mubr.f32.mxu0 0.0
    %142 = vmatmul.mubr.f32.gmra.mrb[0].mxu0 %v72
    %v143 = vpop.f32.mrb[0].mxu0
    %v144 = vadd.f32 0.0, %v143
    %v145 = vpop.f32.mrb[0].mxu0
    %146 = vmatprep.mubr.f32.mxu0 0.0
    %147 = vmatmul.mubr.f32.gmra.mrb[0].mxu0 %v75
    %v148 = vpop.f32.mrb[0].mxu0
    %v149 = vadd.f32 0.0, %v148
    %v150 = vpop.f32.mrb[0].mxu0
    %151 = vdwg.mxu0
    %v152 = vld [vmem:[%s1] sm:$0x3]
    %153 = vset.pattern.permute.xlu0 0
    %154 = vperm.xlu0 %153, %v152
    %v155 = vpop.permute.xlu0 %154
    %v156 = vld [vmem:[%s3] sm:$0xff]
    %v157 = vld [vmem:[%s3 + $0x8] sm:$0xff]
    %v158 = vld [vmem:[%s3 + $0x10] sm:$0xff]
    %v159 = vld [vmem:[%s3 + $0x18] sm:$0xff]
    %v160 = vld [vmem:[%s5] sm:$0x1]
    %v162 = vlaneseq
    %v163 = vshrl.u32 %v162, 7
    %v164 = vsub.s32 0, %v163
    %v165 = vrot.slane %v160, %v164
    %vm167 = vcmask 261120
    %v169 = vsel %vm167, %v144, 0
    %v172 = vsel %vm167, %v149, 0
    %174 = vmatprep.subr.mxu0 0.0
    %175 = vmatpush1.msra.mxu0 %v156
    %176 = vmatprep.subr.mxu0 0.0
    %177 = vmatpush1.msra.mxu0 %v157
    %178 = vmatprep.subr.mxu0 0.0
    %179 = vmatpush1.msra.mxu0 %v158
    %180 = vmatprep.subr.mxu0 0.0
    %181 = vmatpush1.msra.mxu0 %v159
    %182 = vmatprep.subr.mxu0 0.0
    %183 = vmatpush1.msra.mxu0 0.0
    %184 = vmatprep.subr.mxu0 0.0
    %185 = vmatpush1.msra.mxu0 0.0
    %186 = vmatprep.subr.mxu0 0.0
    %187 = vmatpush1.msra.mxu0 0.0
    %188 = vmatprep.subr.mxu0 0.0
    %189 = vmatpush1.msra.mxu0 0.0
    %190 = vmatprep.subr.mxu0 0.0
    %191 = vmatpush1.msra.mxu0 0.0
    %192 = vmatprep.subr.mxu0 0.0
    %193 = vmatpush1.msra.mxu0 0.0
    %194 = vmatprep.subr.mxu0 0.0
    %195 = vmatpush1.msra.mxu0 0.0
    %196 = vmatprep.subr.mxu0 0.0
    %197 = vmatpush1.msra.mxu0 0.0
    %198 = vmatprep.subr.mxu0 0.0
    %199 = vmatpush1.msra.mxu0 0.0
    %200 = vmatprep.subr.mxu0 0.0
    %201 = vmatpush1.msra.mxu0 0.0
    %202 = vmatprep.subr.mxu0 0.0
    %203 = vmatpush1.msra.mxu0 0.0
    %204 = vmatprep.subr.mxu0 0.0
    %205 = vmatpush1.msra.mxu0 0.0
    %206 = vmatprep.subr.mxu0 0.0
    %207 = vmatpush1.msra.mxu0 0.0
    %208 = vmatprep.subr.mxu0 0.0
    %209 = vmatpush1.msra.mxu0 0.0
    %210 = vmatprep.subr.mxu0 0.0
    %211 = vmatpush1.msra.mxu0 0.0
    %212 = vmatprep.subr.mxu0 0.0
    %213 = vmatpush1.msra.mxu0 0.0
    %214 = vmatprep.subr.mxu0 0.0
    %215 = vmatpush1.msra.mxu0 0.0
    %216 = vmatprep.subr.mxu0 0.0
    %217 = vmatpush1.msra.mxu0 0.0
    %218 = vmatprep.subr.mxu0 0.0
    %219 = vmatpush1.msra.mxu0 0.0
    %220 = vmatprep.subr.mxu0 0.0
    %221 = vmatpush1.msra.mxu0 0.0
    %222 = vmatprep.subr.mxu0 0.0
    %223 = vmatpush1.msra.mxu0 0.0
    %224 = vmatprep.subr.mxu0 0.0
    %225 = vmatpush1.msra.mxu0 0.0
    %226 = vmatprep.subr.mxu0 0.0
    %227 = vmatpush1.msra.mxu0 0.0
    %228 = vmatprep.subr.mxu0 0.0
    %229 = vmatpush1.msra.mxu0 0.0
    %230 = vmatprep.subr.mxu0 0.0
    %231 = vmatpush1.msra.mxu0 0.0
    %232 = vmatprep.subr.mxu0 0.0
    %233 = vmatpush1.msra.mxu0 0.0
    %234 = vmatprep.subr.mxu0 0.0
    %235 = vmatpush1.msra.mxu0 0.0
    %236 = vmatprep.subr.mxu0 0.0
    %237 = vmatpush1.msra.mxu0 0.0
    %238 = vmatprep.mubr.f32.mxu0 0.0
    %239 = vmatmul.mubr.f32.gmra.mrb[0].mxu0 %v169
    %v240 = vpop.f32.mrb[0].mxu0
    %v241 = vadd.f32 %v165, %v240
    %v242 = vpop.f32.mrb[0].mxu0
    %243 = vmatprep.mubr.f32.mxu0 0.0
    %244 = vmatmul.mubr.f32.gmra.mrb[0].mxu0 %v172
    %v245 = vpop.f32.mrb[0].mxu0
    %v246 = vadd.f32 %v165, %v245
    %v247 = vpop.f32.mrb[0].mxu0
    %248 = vdwg.mxu0
    %v249 = vld [vmem:[#allocation3] sm:$0xff]
    %v250 = vld [vmem:[#allocation3 + $0x8] sm:$0xff]
    %v251 = vld [vmem:[#allocation3 + $0x10] sm:$0xff]
    %v252 = vld [vmem:[#allocation3 + $0x18] sm:$0xff]
    %v254 = vsel %vm167, 0.0, 0
    %256 = vmatprep.subr.mxu0 0.0
    %257 = vmatpush1.msra.mxu0 %v249
    %258 = vmatprep.subr.mxu0 0.0
    %259 = vmatpush1.msra.mxu0 %v250
    %260 = vmatprep.subr.mxu0 0.0
    %261 = vmatpush1.msra.mxu0 %v251
    %262 = vmatprep.subr.mxu0 0.0
    %263 = vmatpush1.msra.mxu0 %v252
    %264 = vmatprep.subr.mxu0 0.0
    %265 = vmatpush1.msra.mxu0 0.0
    %266 = vmatprep.subr.mxu0 0.0
    %267 = vmatpush1.msra.mxu0 0.0
    %268 = vmatprep.subr.mxu0 0.0
    %269 = vmatpush1.msra.mxu0 0.0
    %270 = vmatprep.subr.mxu0 0.0
    %271 = vmatpush1.msra.mxu0 0.0
    %272 = vmatprep.subr.mxu0 0.0
    %273 = vmatpush1.msra.mxu0 0.0
    %274 = vmatprep.subr.mxu0 0.0
    %275 = vmatpush1.msra.mxu0 0.0
    %276 = vmatprep.subr.mxu0 0.0
    %277 = vmatpush1.msra.mxu0 0.0
    %278 = vmatprep.subr.mxu0 0.0
    %279 = vmatpush1.msra.mxu0 0.0
    %280 = vmatprep.subr.mxu0 0.0
    %281 = vmatpush1.msra.mxu0 0.0
    %282 = vmatprep.subr.mxu0 0.0
    %283 = vmatpush1.msra.mxu0 0.0
    %284 = vmatprep.subr.mxu0 0.0
    %285 = vmatpush1.msra.mxu0 0.0
    %286 = vmatprep.subr.mxu0 0.0
    %287 = vmatpush1.msra.mxu0 0.0
    %288 = vmatprep.subr.mxu0 0.0
    %289 = vmatpush1.msra.mxu0 0.0
    %290 = vmatprep.subr.mxu0 0.0
    %291 = vmatpush1.msra.mxu0 0.0
    %292 = vmatprep.subr.mxu0 0.0
    %293 = vmatpush1.msra.mxu0 0.0
    %294 = vmatprep.subr.mxu0 0.0
    %295 = vmatpush1.msra.mxu0 0.0
    %296 = vmatprep.subr.mxu0 0.0
    %297 = vmatpush1.msra.mxu0 0.0
    %298 = vmatprep.subr.mxu0 0.0
    %299 = vmatpush1.msra.mxu0 0.0
    %300 = vmatprep.subr.mxu0 0.0
    %301 = vmatpush1.msra.mxu0 0.0
    %302 = vmatprep.subr.mxu0 0.0
    %303 = vmatpush1.msra.mxu0 0.0
    %304 = vmatprep.subr.mxu0 0.0
    %305 = vmatpush1.msra.mxu0 0.0
    %306 = vmatprep.subr.mxu0 0.0
    %307 = vmatpush1.msra.mxu0 0.0
    %308 = vmatprep.subr.mxu0 0.0
    %309 = vmatpush1.msra.mxu0 0.0
    %310 = vmatprep.subr.mxu0 0.0
    %311 = vmatpush1.msra.mxu0 0.0
    %312 = vmatprep.subr.mxu0 0.0
    %313 = vmatpush1.msra.mxu0 0.0
    %314 = vmatprep.subr.mxu0 0.0
    %315 = vmatpush1.msra.mxu0 0.0
    %316 = vmatprep.subr.mxu0 0.0
    %317 = vmatpush1.msra.mxu0 0.0
    %318 = vmatprep.subr.mxu0 0.0
    %319 = vmatpush1.msra.mxu0 0.0
    %320 = vmatprep.mubr.f32.mxu0 0.0
    %321 = vmatmul.mubr.f32.gmra.mrb[0].mxu0 %v254
    %v322 = vpop.f32.mrb[0].mxu0
    %v323 = vadd.f32 0.0, %v322
    %v324 = vpop.f32.mrb[0].mxu0
    %325 = vdwg.mxu0
    %v327 = vrot.slane %v323, 1
    %v330 = vadd.f32 %v241, %v323
    %v331 = vadd.f32 %v246, %v327
    %v332 = vxor.u32 %v330, 2147483648
    %v333 = vxor.u32 %v331, 2147483648
    %v334 = vmul.f32 %v332, 1.442695
    %v335 = vpow.pop %v334
    %v336 = vmul.f32 %v333, 1.442695
    %v337 = vpow.pop %v336
    %v338 = vadd.f32 %v335, 1.0
    %v339 = vadd.f32 %v337, 1.0
    %v340 = vrcp.pop %v338
    %v341 = vmul.f32 1.0, %v340
    %v342 = vrcp.pop %v339
    %v343 = vmul.f32 1.0, %v342
    %v344 = vtanh.pop %v330
    %v345 = vtanh.pop %v331
    %v346 = vmul.f32 %v341, 0.0
    %v347 = vmul.f32 %v343, 0.0
    %350 = vrot.lane.b32.xlu0 %v344, 64
    %v351 = vpop.permute.xlu0 %350
    %352 = vrot.lane.b32.xlu0 %v345, 64
    %v353 = vpop.permute.xlu0 %352
    %v356 = vmul.f32 %v341, %v351
    %v357 = vmul.f32 %v343, %v353
    %360 = vrot.lane.b32.xlu0 %v356, 32
    %v361 = vpop.permute.xlu0 %360
    %362 = vrot.lane.b32.xlu0 %v357, 32
    %v363 = vpop.permute.xlu0 %362
    %v366 = vadd.f32 %v346, %v361
    %v367 = vadd.f32 %v347, %v363
    %v368 = vtanh.pop %v366
    %v369 = vtanh.pop %v367
    %372 = vrot.lane.b32.xlu0 %v368, 64
    %v373 = vpop.permute.xlu0 %372
    %374 = vrot.lane.b32.xlu0 %v369, 64
    %v375 = vpop.permute.xlu0 %374
    %v378 = vmul.f32 %v341, %v373
    %v379 = vmul.f32 %v343, %v375
    %vm380 = vcmp.gt.s32.totalorder %v155, 0
    %v383 = vrot.slane %v379, 7
    %vm384 = vcmask 1041409
    %v385 = vsel %vm384, %v383, %v378
    %386 = vrot.lane.b32.xlu0 %v385, 32
    %v387 = vpop.permute.xlu0 %386
    %v389 = vsel %vm380, %v387, 0.0
    %v392 = vrot.slane %v367, 7
    %v393 = vsel %vm384, %v392, %v366
    %394 = vrot.lane.b32.xlu0 %v393, 96
    %v395 = vpop.permute.xlu0 %394
    %v397 = vsel %vm380, %v395, 0.0
    %v399 = vsel %vm167, %v389, 0
    %401 = vmatprep.subr.mxu0 0.0
    %402 = vmatpush1.msra.mxu0 %v249
    %403 = vmatprep.subr.mxu0 0.0
    %404 = vmatpush1.msra.mxu0 %v250
    %405 = vmatprep.subr.mxu0 0.0
    %406 = vmatpush1.msra.mxu0 %v251
    %407 = vmatprep.subr.mxu0 0.0
    %408 = vmatpush1.msra.mxu0 %v252
    %409 = vmatprep.subr.mxu0 0.0
    %410 = vmatpush1.msra.mxu0 0.0
    %411 = vmatprep.subr.mxu0 0.0
    %412 = vmatpush1.msra.mxu0 0.0
    %413 = vmatprep.subr.mxu0 0.0
    %414 = vmatpush1.msra.mxu0 0.0
    %415 = vmatprep.subr.mxu0 0.0
    %416 = vmatpush1.msra.mxu0 0.0
    %417 = vmatprep.subr.mxu0 0.0
    %418 = vmatpush1.msra.mxu0 0.0
    %419 = vmatprep.subr.mxu0 0.0
    %420 = vmatpush1.msra.mxu0 0.0
    %421 = vmatprep.subr.mxu0 0.0
    %422 = vmatpush1.msra.mxu0 0.0
    %423 = vmatprep.subr.mxu0 0.0
    %424 = vmatpush1.msra.mxu0 0.0
    %425 = vmatprep.subr.mxu0 0.0
    %426 = vmatpush1.msra.mxu0 0.0
    %427 = vmatprep.subr.mxu0 0.0
    %428 = vmatpush1.msra.mxu0 0.0
    %429 = vmatprep.subr.mxu0 0.0
    %430 = vmatpush1.msra.mxu0 0.0
    %431 = vmatprep.subr.mxu0 0.0
    %432 = vmatpush1.msra.mxu0 0.0
    %433 = vmatprep.subr.mxu0 0.0
    %434 = vmatpush1.msra.mxu0 0.0
    %435 = vmatprep.subr.mxu0 0.0
    %436 = vmatpush1.msra.mxu0 0.0
    %437 = vmatprep.subr.mxu0 0.0
    %438 = vmatpush1.msra.mxu0 0.0
    %439 = vmatprep.subr.mxu0 0.0
    %440 = vmatpush1.msra.mxu0 0.0
    %441 = vmatprep.subr.mxu0 0.0
    %442 = vmatpush1.msra.mxu0 0.0
    %443 = vmatprep.subr.mxu0 0.0
    %444 = vmatpush1.msra.mxu0 0.0
    %445 = vmatprep.subr.mxu0 0.0
    %446 = vmatpush1.msra.mxu0 0.0
    %447 = vmatprep.subr.mxu0 0.0
    %448 = vmatpush1.msra.mxu0 0.0
    %449 = vmatprep.subr.mxu0 0.0
    %450 = vmatpush1.msra.mxu0 0.0
    %451 = vmatprep.subr.mxu0 0.0
    %452 = vmatpush1.msra.mxu0 0.0
    %453 = vmatprep.subr.mxu0 0.0
    %454 = vmatpush1.msra.mxu0 0.0
    %455 = vmatprep.subr.mxu0 0.0
    %456 = vmatpush1.msra.mxu0 0.0
    %457 = vmatprep.subr.mxu0 0.0
    %458 = vmatpush1.msra.mxu0 0.0
    %459 = vmatprep.subr.mxu0 0.0
    %460 = vmatpush1.msra.mxu0 0.0
    %461 = vmatprep.subr.mxu0 0.0
    %462 = vmatpush1.msra.mxu0 0.0
    %463 = vmatprep.subr.mxu0 0.0
    %464 = vmatpush1.msra.mxu0 0.0
    %465 = vmatprep.mubr.f32.mxu0 0.0
    %466 = vmatmul.mubr.f32.gmra.mrb[0].mxu0 %v399
    %v467 = vpop.f32.mrb[0].mxu0
    %v468 = vadd.f32 0.0, %v467
    %v469 = vpop.f32.mrb[0].mxu0
    %470 = vdwg.mxu0
    %v472 = vrot.slane %v468, 7
    %v475 = vadd.f32 %v241, %v472
    %v476 = vadd.f32 %v246, %v468
    %v477 = vxor.u32 %v475, 2147483648
    %v478 = vxor.u32 %v476, 2147483648
    %v479 = vmul.f32 %v477, 1.442695
    %v480 = vpow.pop %v479
    %v481 = vmul.f32 %v478, 1.442695
    %v482 = vpow.pop %v481
    %v483 = vadd.f32 %v480, 1.0
    %v484 = vadd.f32 %v482, 1.0
    %v485 = vrcp.pop %v483
    %v486 = vmul.f32 1.0, %v485
    %v487 = vrcp.pop %v484
    %v488 = vmul.f32 1.0, %v487
    %v489 = vtanh.pop %v475
    %v490 = vtanh.pop %v476
    %v492 = vrot.slane %v397, 7
    %493 = vrot.lane.b32.xlu0 %v492, 32
    %v494 = vpop.permute.xlu0 %493
    %495 = vrot.lane.b32.xlu0 %v397, 32
    %v496 = vpop.permute.xlu0 %495
    %v499 = vmul.f32 %v486, %v494
    %v500 = vmul.f32 %v488, %v496
    %503 = vrot.lane.b32.xlu0 %v489, 64
    %v504 = vpop.permute.xlu0 %503
    %505 = vrot.lane.b32.xlu0 %v490, 64
    %v506 = vpop.permute.xlu0 %505
    %v509 = vmul.f32 %v486, %v504
    %v510 = vmul.f32 %v488, %v506
    %513 = vrot.lane.b32.xlu0 %v509, 32
    %v514 = vpop.permute.xlu0 %513
    %515 = vrot.lane.b32.xlu0 %v510, 32
    %v516 = vpop.permute.xlu0 %515
    %v519 = vadd.f32 %v499, %v514
    %v520 = vadd.f32 %v500, %v516
    %v521 = vtanh.pop %v519
    %v522 = vtanh.pop %v520
    %525 = vrot.lane.b32.xlu0 %v521, 64
    %v526 = vpop.permute.xlu0 %525
    %527 = vrot.lane.b32.xlu0 %v522, 64
    %v528 = vpop.permute.xlu0 %527
    %v531 = vmul.f32 %v486, %v526
    %v532 = vmul.f32 %v488, %v528
    %vm533 = vcmp.gt.s32.totalorder %v155, 1
    %v536 = vrot.slane %v531, 1
    %v537 = vsel %vm384, %v532, %v536
    %538 = vrot.lane.b32.xlu0 %v537, 32
    %v539 = vpop.permute.xlu0 %538
    %v541 = vsel %vm533, %v539, 0.0
    %v542 = vsel %vm533, %v539, %v389
    %v545 = vrot.slane %v519, 1
    %v546 = vsel %vm384, %v520, %v545
    %547 = vrot.lane.b32.xlu0 %v546, 96
    %v548 = vpop.permute.xlu0 %547
    %v550 = vsel %vm533, %v548, %v397
    %v552 = vsel %vm167, %v542, 0
    %554 = vmatprep.subr.mxu0 0.0
    %555 = vmatpush1.msra.mxu0 %v249
    %556 = vmatprep.subr.mxu0 0.0
    %557 = vmatpush1.msra.mxu0 %v250
    %558 = vmatprep.subr.mxu0 0.0
    %559 = vmatpush1.msra.mxu0 %v251
    %560 = vmatprep.subr.mxu0 0.0
    %561 = vmatpush1.msra.mxu0 %v252
    %562 = vmatprep.subr.mxu0 0.0
    %563 = vmatpush1.msra.mxu0 0.0
    %564 = vmatprep.subr.mxu0 0.0
    %565 = vmatpush1.msra.mxu0 0.0
    %566 = vmatprep.subr.mxu0 0.0
    %567 = vmatpush1.msra.mxu0 0.0
    %568 = vmatprep.subr.mxu0 0.0
    %569 = vmatpush1.msra.mxu0 0.0
    %570 = vmatprep.subr.mxu0 0.0
    %571 = vmatpush1.msra.mxu0 0.0
    %572 = vmatprep.subr.mxu0 0.0
    %573 = vmatpush1.msra.mxu0 0.0
    %574 = vmatprep.subr.mxu0 0.0
    %575 = vmatpush1.msra.mxu0 0.0
    %576 = vmatprep.subr.mxu0 0.0
    %577 = vmatpush1.msra.mxu0 0.0
    %578 = vmatprep.subr.mxu0 0.0
    %579 = vmatpush1.msra.mxu0 0.0
    %580 = vmatprep.subr.mxu0 0.0
    %581 = vmatpush1.msra.mxu0 0.0
    %582 = vmatprep.subr.mxu0 0.0
    %583 = vmatpush1.msra.mxu0 0.0
    %584 = vmatprep.subr.mxu0 0.0
    %585 = vmatpush1.msra.mxu0 0.0
    %586 = vmatprep.subr.mxu0 0.0
    %587 = vmatpush1.msra.mxu0 0.0
    %588 = vmatprep.subr.mxu0 0.0
    %589 = vmatpush1.msra.mxu0 0.0
    %590 = vmatprep.subr.mxu0 0.0
    %591 = vmatpush1.msra.mxu0 0.0
    %592 = vmatprep.subr.mxu0 0.0
    %593 = vmatpush1.msra.mxu0 0.0
    %594 = vmatprep.subr.mxu0 0.0
    %595 = vmatpush1.msra.mxu0 0.0
    %596 = vmatprep.subr.mxu0 0.0
    %597 = vmatpush1.msra.mxu0 0.0
    %598 = vmatprep.subr.mxu0 0.0
    %599 = vmatpush1.msra.mxu0 0.0
    %600 = vmatprep.subr.mxu0 0.0
    %601 = vmatpush1.msra.mxu0 0.0
    %602 = vmatprep.subr.mxu0 0.0
    %603 = vmatpush1.msra.mxu0 0.0
    %604 = vmatprep.subr.mxu0 0.0
    %605 = vmatpush1.msra.mxu0 0.0
    %606 = vmatprep.subr.mxu0 0.0
    %607 = vmatpush1.msra.mxu0 0.0
    %608 = vmatprep.subr.mxu0 0.0
    %609 = vmatpush1.msra.mxu0 0.0
    %610 = vmatprep.subr.mxu0 0.0
    %611 = vmatpush1.msra.mxu0 0.0
    %612 = vmatprep.subr.mxu0 0.0
    %613 = vmatpush1.msra.mxu0 0.0
    %614 = vmatprep.subr.mxu0 0.0
    %615 = vmatpush1.msra.mxu0 0.0
    %616 = vmatprep.subr.mxu0 0.0
    %617 = vmatpush1.msra.mxu0 0.0
    %618 = vmatprep.mubr.f32.mxu0 0.0
    %619 = vmatmul.mubr.f32.gmra.mrb[0].mxu0 %v552
    %v620 = vpop.f32.mrb[0].mxu0
    %v621 = vadd.f32 0.0, %v620
    %v622 = vpop.f32.mrb[0].mxu0
    %623 = vdwg.mxu0
    %v625 = vrot.slane %v621, 6
    %v626 = vrot.slane %v621, 7
    %v629 = vadd.f32 %v241, %v625
    %v630 = vadd.f32 %v246, %v626
    %v631 = vxor.u32 %v629, 2147483648
    %v632 = vxor.u32 %v630, 2147483648
    %v633 = vmul.f32 %v631, 1.442695
    %v634 = vpow.pop %v633
    %v635 = vmul.f32 %v632, 1.442695
    %v636 = vpow.pop %v635
    %v637 = vadd.f32 %v634, 1.0
    %v638 = vadd.f32 %v636, 1.0
    %v639 = vrcp.pop %v637
    %v640 = vmul.f32 1.0, %v639
    %v641 = vrcp.pop %v638
    %v642 = vmul.f32 1.0, %v641
    %v643 = vtanh.pop %v629
    %v644 = vtanh.pop %v630
    %v646 = vrot.slane %v550, 6
    %v647 = vrot.slane %v550, 7
    %648 = vrot.lane.b32.xlu0 %v646, 32
    %v649 = vpop.permute.xlu0 %648
    %650 = vrot.lane.b32.xlu0 %v647, 32
    %v651 = vpop.permute.xlu0 %650
    %v654 = vmul.f32 %v640, %v649
    %v655 = vmul.f32 %v642, %v651
    %658 = vrot.lane.b32.xlu0 %v643, 64
    %v659 = vpop.permute.xlu0 %658
    %660 = vrot.lane.b32.xlu0 %v644, 64
    %v661 = vpop.permute.xlu0 %660
    %v664 = vmul.f32 %v640, %v659
    %v665 = vmul.f32 %v642, %v661
    %668 = vrot.lane.b32.xlu0 %v664, 32
    %v669 = vpop.permute.xlu0 %668
    %670 = vrot.lane.b32.xlu0 %v665, 32
    %v671 = vpop.permute.xlu0 %670
    %v674 = vadd.f32 %v654, %v669
    %v675 = vadd.f32 %v655, %v671
    %v676 = vtanh.pop %v674
    %v677 = vtanh.pop %v675
    %680 = vrot.lane.b32.xlu0 %v676, 64
    %v681 = vpop.permute.xlu0 %680
    %682 = vrot.lane.b32.xlu0 %v677, 64
    %v683 = vpop.permute.xlu0 %682
    %v686 = vmul.f32 %v640, %v681
    %v687 = vmul.f32 %v642, %v683
    %vm688 = vcmp.gt.s32.totalorder %v155, 2
    %v691 = vrot.slane %v686, 2
    %v692 = vrot.slane %v687, 1
    %v693 = vsel %vm384, %v692, %v691
    %694 = vrot.lane.b32.xlu0 %v693, 32
    %v695 = vpop.permute.xlu0 %694
    %v697 = vsel %vm688, %v695, 0.0
    %v698 = vsel %vm688, %v695, %v542
    %v701 = vrot.slane %v674, 2
    %v702 = vrot.slane %v675, 1
    %v703 = vsel %vm384, %v702, %v701
    %704 = vrot.lane.b32.xlu0 %v703, 96
    %v705 = vpop.permute.xlu0 %704
    %v707 = vsel %vm688, %v705, %v550
    %v709 = vsel %vm167, %v698, 0
    %711 = vmatprep.subr.mxu0 0.0
    %712 = vmatpush1.msra.mxu0 %v249
    %713 = vmatprep.subr.mxu0 0.0
    %714 = vmatpush1.msra.mxu0 %v250
    %715 = vmatprep.subr.mxu0 0.0
    %716 = vmatpush1.msra.mxu0 %v251
    %717 = vmatprep.subr.mxu0 0.0
    %718 = vmatpush1.msra.mxu0 %v252
    %719 = vmatprep.subr.mxu0 0.0
    %720 = vmatpush1.msra.mxu0 0.0
    %721 = vmatprep.subr.mxu0 0.0
    %722 = vmatpush1.msra.mxu0 0.0
    %723 = vmatprep.subr.mxu0 0.0
    %724 = vmatpush1.msra.mxu0 0.0
    %725 = vmatprep.subr.mxu0 0.0
    %726 = vmatpush1.msra.mxu0 0.0
    %727 = vmatprep.subr.mxu0 0.0
    %728 = vmatpush1.msra.mxu0 0.0
    %729 = vmatprep.subr.mxu0 0.0
    %730 = vmatpush1.msra.mxu0 0.0
    %731 = vmatprep.subr.mxu0 0.0
    %732 = vmatpush1.msra.mxu0 0.0
    %733 = vmatprep.subr.mxu0 0.0
    %734 = vmatpush1.msra.mxu0 0.0
    %735 = vmatprep.subr.mxu0 0.0
    %736 = vmatpush1.msra.mxu0 0.0
    %737 = vmatprep.subr.mxu0 0.0
    %738 = vmatpush1.msra.mxu0 0.0
    %739 = vmatprep.subr.mxu0 0.0
    %740 = vmatpush1.msra.mxu0 0.0
    %741 = vmatprep.subr.mxu0 0.0
    %742 = vmatpush1.msra.mxu0 0.0
    %743 = vmatprep.subr.mxu0 0.0
    %744 = vmatpush1.msra.mxu0 0.0
    %745 = vmatprep.subr.mxu0 0.0
    %746 = vmatpush1.msra.mxu0 0.0
    %747 = vmatprep.subr.mxu0 0.0
    %748 = vmatpush1.msra.mxu0 0.0
    %749 = vmatprep.subr.mxu0 0.0
    %750 = vmatpush1.msra.mxu0 0.0
    %751 = vmatprep.subr.mxu0 0.0
    %752 = vmatpush1.msra.mxu0 0.0
    %753 = vmatprep.subr.mxu0 0.0
    %754 = vmatpush1.msra.mxu0 0.0
    %755 = vmatprep.subr.mxu0 0.0
    %756 = vmatpush1.msra.mxu0 0.0
    %757 = vmatprep.subr.mxu0 0.0
    %758 = vmatpush1.msra.mxu0 0.0
    %759 = vmatprep.subr.mxu0 0.0
    %760 = vmatpush1.msra.mxu0 0.0
    %761 = vmatprep.subr.mxu0 0.0
    %762 = vmatpush1.msra.mxu0 0.0
    %763 = vmatprep.subr.mxu0 0.0
    %764 = vmatpush1.msra.mxu0 0.0
    %765 = vmatprep.subr.mxu0 0.0
    %766 = vmatpush1.msra.mxu0 0.0
    %767 = vmatprep.subr.mxu0 0.0
    %768 = vmatpush1.msra.mxu0 0.0
    %769 = vmatprep.subr.mxu0 0.0
    %770 = vmatpush1.msra.mxu0 0.0
    %771 = vmatprep.subr.mxu0 0.0
    %772 = vmatpush1.msra.mxu0 0.0
    %773 = vmatprep.subr.mxu0 0.0
    %774 = vmatpush1.msra.mxu0 0.0
    %775 = vmatprep.mubr.f32.mxu0 0.0
    %776 = vmatmul.mubr.f32.gmra.mrb[0].mxu0 %v709
    %v777 = vpop.f32.mrb[0].mxu0
    %v778 = vadd.f32 0.0, %v777
    %v779 = vpop.f32.mrb[0].mxu0
    %780 = vdwg.mxu0
    %v782 = vrot.slane %v778, 5
    %v783 = vrot.slane %v778, 6
    %v786 = vadd.f32 %v241, %v782
    %v787 = vadd.f32 %v246, %v783
    %v788 = vxor.u32 %v786, 2147483648
    %v789 = vxor.u32 %v787, 2147483648
    %v790 = vmul.f32 %v788, 1.442695
    %v791 = vpow.pop %v790
    %v792 = vmul.f32 %v789, 1.442695
    %v793 = vpow.pop %v792
    %v794 = vadd.f32 %v791, 1.0
    %v795 = vadd.f32 %v793, 1.0
    %v796 = vrcp.pop %v794
    %v797 = vmul.f32 1.0, %v796
    %v798 = vrcp.pop %v795
    %v799 = vmul.f32 1.0, %v798
    %v800 = vtanh.pop %v786
    %v801 = vtanh.pop %v787
    %v803 = vrot.slane %v707, 5
    %v804 = vrot.slane %v707, 6
    %805 = vrot.lane.b32.xlu0 %v803, 32
    %v806 = vpop.permute.xlu0 %805
    %807 = vrot.lane.b32.xlu0 %v804, 32
    %v808 = vpop.permute.xlu0 %807
    %v811 = vmul.f32 %v797, %v806
    %v812 = vmul.f32 %v799, %v808
    %815 = vrot.lane.b32.xlu0 %v800, 64
    %v816 = vpop.permute.xlu0 %815
    %817 = vrot.lane.b32.xlu0 %v801, 64
    %v818 = vpop.permute.xlu0 %817
    %v821 = vmul.f32 %v797, %v816
    %v822 = vmul.f32 %v799, %v818
    %825 = vrot.lane.b32.xlu0 %v821, 32
    %v826 = vpop.permute.xlu0 %825
    %827 = vrot.lane.b32.xlu0 %v822, 32
    %v828 = vpop.permute.xlu0 %827
    %v831 = vadd.f32 %v811, %v826
    %v832 = vadd.f32 %v812, %v828
    %v833 = vtanh.pop %v831
    %v834 = vtanh.pop %v832
    %837 = vrot.lane.b32.xlu0 %v833, 64
    %v838 = vpop.permute.xlu0 %837
    %839 = vrot.lane.b32.xlu0 %v834, 64
    %v840 = vpop.permute.xlu0 %839
    %v843 = vmul.f32 %v797, %v838
    %v844 = vmul.f32 %v799, %v840
    %vm845 = vcmp.gt.s32.totalorder %v155, 3
    %v848 = vrot.slane %v843, 3
    %v849 = vrot.slane %v844, 2
    %v850 = vsel %vm384, %v849, %v848
    %851 = vrot.lane.b32.xlu0 %v850, 32
    %v852 = vpop.permute.xlu0 %851
    %v854 = vsel %vm845, %v852, 0.0
    %v855 = vsel %vm845, %v852, %v698
    %v858 = vrot.slane %v831, 3
    %v859 = vrot.slane %v832, 2
    %v860 = vsel %vm384, %v859, %v858
    %861 = vrot.lane.b32.xlu0 %v860, 96
    %v862 = vpop.permute.xlu0 %861
    %v864 = vsel %vm845, %v862, %v707
    %v866 = vsel %vm167, %v855, 0
    %868 = vmatprep.subr.mxu0 0.0
    %869 = vmatpush1.msra.mxu0 %v249
    %870 = vmatprep.subr.mxu0 0.0
    %871 = vmatpush1.msra.mxu0 %v250
    %872 = vmatprep.subr.mxu0 0.0
    %873 = vmatpush1.msra.mxu0 %v251
    %874 = vmatprep.subr.mxu0 0.0
    %875 = vmatpush1.msra.mxu0 %v252
    %876 = vmatprep.subr.mxu0 0.0
    %877 = vmatpush1.msra.mxu0 0.0
    %878 = vmatprep.subr.mxu0 0.0
    %879 = vmatpush1.msra.mxu0 0.0
    %880 = vmatprep.subr.mxu0 0.0
    %881 = vmatpush1.msra.mxu0 0.0
    %882 = vmatprep.subr.mxu0 0.0
    %883 = vmatpush1.msra.mxu0 0.0
    %884 = vmatprep.subr.mxu0 0.0
    %885 = vmatpush1.msra.mxu0 0.0
    %886 = vmatprep.subr.mxu0 0.0
    %887 = vmatpush1.msra.mxu0 0.0
    %888 = vmatprep.subr.mxu0 0.0
    %889 = vmatpush1.msra.mxu0 0.0
    %890 = vmatprep.subr.mxu0 0.0
    %891 = vmatpush1.msra.mxu0 0.0
    %892 = vmatprep.subr.mxu0 0.0
    %893 = vmatpush1.msra.mxu0 0.0
    %894 = vmatprep.subr.mxu0 0.0
    %895 = vmatpush1.msra.mxu0 0.0
    %896 = vmatprep.subr.mxu0 0.0
    %897 = vmatpush1.msra.mxu0 0.0
    %898 = vmatprep.subr.mxu0 0.0
    %899 = vmatpush1.msra.mxu0 0.0
    %900 = vmatprep.subr.mxu0 0.0
    %901 = vmatpush1.msra.mxu0 0.0
    %902 = vmatprep.subr.mxu0 0.0
    %903 = vmatpush1.msra.mxu0 0.0
    %904 = vmatprep.subr.mxu0 0.0
    %905 = vmatpush1.msra.mxu0 0.0
    %906 = vmatprep.subr.mxu0 0.0
    %907 = vmatpush1.msra.mxu0 0.0
    %908 = vmatprep.subr.mxu0 0.0
    %909 = vmatpush1.msra.mxu0 0.0
    %910 = vmatprep.subr.mxu0 0.0
    %911 = vmatpush1.msra.mxu0 0.0
    %912 = vmatprep.subr.mxu0 0.0
    %913 = vmatpush1.msra.mxu0 0.0
    %914 = vmatprep.subr.mxu0 0.0
    %915 = vmatpush1.msra.mxu0 0.0
    %916 = vmatprep.subr.mxu0 0.0
    %917 = vmatpush1.msra.mxu0 0.0
    %918 = vmatprep.subr.mxu0 0.0
    %919 = vmatpush1.msra.mxu0 0.0
    %920 = vmatprep.subr.mxu0 0.0
    %921 = vmatpush1.msra.mxu0 0.0
    %922 = vmatprep.subr.mxu0 0.0
    %923 = vmatpush1.msra.mxu0 0.0
    %924 = vmatprep.subr.mxu0 0.0
    %925 = vmatpush1.msra.mxu0 0.0
    %926 = vmatprep.subr.mxu0 0.0
    %927 = vmatpush1.msra.mxu0 0.0
    %928 = vmatprep.subr.mxu0 0.0
    %929 = vmatpush1.msra.mxu0 0.0
    %930 = vmatprep.subr.mxu0 0.0
    %931 = vmatpush1.msra.mxu0 0.0
    %932 = vmatprep.mubr.f32.mxu0 0.0
    %933 = vmatmul.mubr.f32.gmra.mrb[0].mxu0 %v866
    %v934 = vpop.f32.mrb[0].mxu0
    %v935 = vadd.f32 0.0, %v934
    %v936 = vpop.f32.mrb[0].mxu0
    %937 = vdwg.mxu0
    %v939 = vrot.slane %v935, 4
    %v940 = vrot.slane %v935, 5
    %v943 = vadd.f32 %v241, %v939
    %v944 = vadd.f32 %v246, %v940
    %v945 = vxor.u32 %v943, 2147483648
    %v946 = vxor.u32 %v944, 2147483648
    %v947 = vmul.f32 %v945, 1.442695
    %v948 = vpow.pop %v947
    %v949 = vmul.f32 %v946, 1.442695
    %v950 = vpow.pop %v949
    %v951 = vadd.f32 %v948, 1.0
    %v952 = vadd.f32 %v950, 1.0
    %v953 = vrcp.pop %v951
    %v954 = vmul.f32 1.0, %v953
    %v955 = vrcp.pop %v952
    %v956 = vmul.f32 1.0, %v955
    %v957 = vtanh.pop %v943
    %v958 = vtanh.pop %v944
    %v960 = vrot.slane %v864, 4
    %v961 = vrot.slane %v864, 5
    %962 = vrot.lane.b32.xlu0 %v960, 32
    %v963 = vpop.permute.xlu0 %962
    %964 = vrot.lane.b32.xlu0 %v961, 32
    %v965 = vpop.permute.xlu0 %964
    %v968 = vmul.f32 %v954, %v963
    %v969 = vmul.f32 %v956, %v965
    %972 = vrot.lane.b32.xlu0 %v957, 64
    %v973 = vpop.permute.xlu0 %972
    %974 = vrot.lane.b32.xlu0 %v958, 64
    %v975 = vpop.permute.xlu0 %974
    %v978 = vmul.f32 %v954, %v973
    %v979 = vmul.f32 %v956, %v975
    %982 = vrot.lane.b32.xlu0 %v978, 32
    %v983 = vpop.permute.xlu0 %982
    %984 = vrot.lane.b32.xlu0 %v979, 32
    %v985 = vpop.permute.xlu0 %984
    %v988 = vadd.f32 %v968, %v983
    %v989 = vadd.f32 %v969, %v985
    %v990 = vtanh.pop %v988
    %v991 = vtanh.pop %v989
    %994 = vrot.lane.b32.xlu0 %v990, 64
    %v995 = vpop.permute.xlu0 %994
    %996 = vrot.lane.b32.xlu0 %v991, 64
    %v997 = vpop.permute.xlu0 %996
    %v1000 = vmul.f32 %v954, %v995
    %v1001 = vmul.f32 %v956, %v997
    %vm1002 = vcmp.gt.s32.totalorder %v155, 4
    %v1005 = vrot.slane %v1000, 4
    %v1006 = vrot.slane %v1001, 3
    %v1007 = vsel %vm384, %v1006, %v1005
    %1008 = vrot.lane.b32.xlu0 %v1007, 32
    %v1009 = vpop.permute.xlu0 %1008
    %v1011 = vsel %vm1002, %v1009, 0.0
    %v1012 = vsel %vm1002, %v1009, %v855
    %v1015 = vrot.slane %v988, 4
    %v1016 = vrot.slane %v989, 3
    %v1017 = vsel %vm384, %v1016, %v1015
    %1018 = vrot.lane.b32.xlu0 %v1017, 96
    %v1019 = vpop.permute.xlu0 %1018
    %v1021 = vsel %vm1002, %v1019, %v864
    %v1023 = vsel %vm167, %v1012, 0
    %1025 = vmatprep.subr.mxu0 0.0
    %1026 = vmatpush1.msra.mxu0 %v249
    %1027 = vmatprep.subr.mxu0 0.0
    %1028 = vmatpush1.msra.mxu0 %v250
    %1029 = vmatprep.subr.mxu0 0.0
    %1030 = vmatpush1.msra.mxu0 %v251
    %1031 = vmatprep.subr.mxu0 0.0
    %1032 = vmatpush1.msra.mxu0 %v252
    %1033 = vmatprep.subr.mxu0 0.0
    %1034 = vmatpush1.msra.mxu0 0.0
    %1035 = vmatprep.subr.mxu0 0.0
    %1036 = vmatpush1.msra.mxu0 0.0
    %1037 = vmatprep.subr.mxu0 0.0
    %1038 = vmatpush1.msra.mxu0 0.0
    %1039 = vmatprep.subr.mxu0 0.0
    %1040 = vmatpush1.msra.mxu0 0.0
    %1041 = vmatprep.subr.mxu0 0.0
    %1042 = vmatpush1.msra.mxu0 0.0
    %1043 = vmatprep.subr.mxu0 0.0
    %1044 = vmatpush1.msra.mxu0 0.0
    %1045 = vmatprep.subr.mxu0 0.0
    %1046 = vmatpush1.msra.mxu0 0.0
    %1047 = vmatprep.subr.mxu0 0.0
    %1048 = vmatpush1.msra.mxu0 0.0
    %1049 = vmatprep.subr.mxu0 0.0
    %1050 = vmatpush1.msra.mxu0 0.0
    %1051 = vmatprep.subr.mxu0 0.0
    %1052 = vmatpush1.msra.mxu0 0.0
    %1053 = vmatprep.subr.mxu0 0.0
    %1054 = vmatpush1.msra.mxu0 0.0
    %1055 = vmatprep.subr.mxu0 0.0
    %1056 = vmatpush1.msra.mxu0 0.0
    %1057 = vmatprep.subr.mxu0 0.0
    %1058 = vmatpush1.msra.mxu0 0.0
    %1059 = vmatprep.subr.mxu0 0.0
    %1060 = vmatpush1.msra.mxu0 0.0
    %1061 = vmatprep.subr.mxu0 0.0
    %1062 = vmatpush1.msra.mxu0 0.0
    %1063 = vmatprep.subr.mxu0 0.0
    %1064 = vmatpush1.msra.mxu0 0.0
    %1065 = vmatprep.subr.mxu0 0.0
    %1066 = vmatpush1.msra.mxu0 0.0
    %1067 = vmatprep.subr.mxu0 0.0
    %1068 = vmatpush1.msra.mxu0 0.0
    %1069 = vmatprep.subr.mxu0 0.0
    %1070 = vmatpush1.msra.mxu0 0.0
    %1071 = vmatprep.subr.mxu0 0.0
    %1072 = vmatpush1.msra.mxu0 0.0
    %1073 = vmatprep.subr.mxu0 0.0
    %1074 = vmatpush1.msra.mxu0 0.0
    %1075 = vmatprep.subr.mxu0 0.0
    %1076 = vmatpush1.msra.mxu0 0.0
    %1077 = vmatprep.subr.mxu0 0.0
    %1078 = vmatpush1.msra.mxu0 0.0
    %1079 = vmatprep.subr.mxu0 0.0
    %1080 = vmatpush1.msra.mxu0 0.0
    %1081 = vmatprep.subr.mxu0 0.0
    %1082 = vmatpush1.msra.mxu0 0.0
    %1083 = vmatprep.subr.mxu0 0.0
    %1084 = vmatpush1.msra.mxu0 0.0
    %1085 = vmatprep.subr.mxu0 0.0
    %1086 = vmatpush1.msra.mxu0 0.0
    %1087 = vmatprep.subr.mxu0 0.0
    %1088 = vmatpush1.msra.mxu0 0.0
    %1089 = vmatprep.mubr.f32.mxu0 0.0
    %1090 = vmatmul.mubr.f32.gmra.mrb[0].mxu0 %v1023
    %v1091 = vpop.f32.mrb[0].mxu0
    %v1092 = vadd.f32 0.0, %v1091
    %v1093 = vpop.f32.mrb[0].mxu0
    %1094 = vdwg.mxu0
    %v1096 = vrot.slane %v1092, 3
    %v1097 = vrot.slane %v1092, 4
    %v1100 = vadd.f32 %v241, %v1096
    %v1101 = vadd.f32 %v246, %v1097
    %v1102 = vxor.u32 %v1100, 2147483648
    %v1103 = vxor.u32 %v1101, 2147483648
    %v1104 = vmul.f32 %v1102, 1.442695
    %v1105 = vpow.pop %v1104
    %v1106 = vmul.f32 %v1103, 1.442695
    %v1107 = vpow.pop %v1106
    %v1108 = vadd.f32 %v1105, 1.0
    %v1109 = vadd.f32 %v1107, 1.0
    %v1110 = vrcp.pop %v1108
    %v1111 = vmul.f32 1.0, %v1110
    %v1112 = vrcp.pop %v1109
    %v1113 = vmul.f32 1.0, %v1112
    %v1114 = vtanh.pop %v1100
    %v1115 = vtanh.pop %v1101
    %v1117 = vrot.slane %v1021, 3
    %v1118 = vrot.slane %v1021, 4
    %1119 = vrot.lane.b32.xlu0 %v1117, 32
    %v1120 = vpop.permute.xlu0 %1119
    %1121 = vrot.lane.b32.xlu0 %v1118, 32
    %v1122 = vpop.permute.xlu0 %1121
    %v1125 = vmul.f32 %v1111, %v1120
    %v1126 = vmul.f32 %v1113, %v1122
    %1129 = vrot.lane.b32.xlu0 %v1114, 64
    %v1130 = vpop.permute.xlu0 %1129
    %1131 = vrot.lane.b32.xlu0 %v1115, 64
    %v1132 = vpop.permute.xlu0 %1131
    %v1135 = vmul.f32 %v1111, %v1130
    %v1136 = vmul.f32 %v1113, %v1132
    %1139 = vrot.lane.b32.xlu0 %v1135, 32
    %v1140 = vpop.permute.xlu0 %1139
    %1141 = vrot.lane.b32.xlu0 %v1136, 32
    %v1142 = vpop.permute.xlu0 %1141
    %v1145 = vadd.f32 %v1125, %v1140
    %v1146 = vadd.f32 %v1126, %v1142
    %v1147 = vtanh.pop %v1145
    %v1148 = vtanh.pop %v1146
    %1151 = vrot.lane.b32.xlu0 %v1147, 64
    %v1152 = vpop.permute.xlu0 %1151
    %1153 = vrot.lane.b32.xlu0 %v1148, 64
    %v1154 = vpop.permute.xlu0 %1153
    %v1157 = vmul.f32 %v1111, %v1152
    %v1158 = vmul.f32 %v1113, %v1154
    %vm1159 = vcmp.gt.s32.totalorder %v155, 5
    %v1162 = vrot.slane %v1157, 5
    %v1163 = vrot.slane %v1158, 4
    %v1164 = vsel %vm384, %v1163, %v1162
    %1165 = vrot.lane.b32.xlu0 %v1164, 32
    %v1166 = vpop.permute.xlu0 %1165
    %v1168 = vsel %vm1159, %v1166, 0.0
    %v1169 = vsel %vm1159, %v1166, %v1012
    %v1172 = vrot.slane %v1145, 5
    %v1173 = vrot.slane %v1146, 4
    %v1174 = vsel %vm384, %v1173, %v1172
    %1175 = vrot.lane.b32.xlu0 %v1174, 96
    %v1176 = vpop.permute.xlu0 %1175
    %v1178 = vsel %vm1159, %v1176, %v1021
    %v1180 = vsel %vm167, %v1169, 0
    %1182 = vmatprep.subr.mxu0 0.0
    %1183 = vmatpush1.msra.mxu0 %v249
    %1184 = vmatprep.subr.mxu0 0.0
    %1185 = vmatpush1.msra.mxu0 %v250
    %1186 = vmatprep.subr.mxu0 0.0
    %1187 = vmatpush1.msra.mxu0 %v251
    %1188 = vmatprep.subr.mxu0 0.0
    %1189 = vmatpush1.msra.mxu0 %v252
    %1190 = vmatprep.subr.mxu0 0.0
    %1191 = vmatpush1.msra.mxu0 0.0
    %1192 = vmatprep.subr.mxu0 0.0
    %1193 = vmatpush1.msra.mxu0 0.0
    %1194 = vmatprep.subr.mxu0 0.0
    %1195 = vmatpush1.msra.mxu0 0.0
    %1196 = vmatprep.subr.mxu0 0.0
    %1197 = vmatpush1.msra.mxu0 0.0
    %1198 = vmatprep.subr.mxu0 0.0
    %1199 = vmatpush1.msra.mxu0 0.0
    %1200 = vmatprep.subr.mxu0 0.0
    %1201 = vmatpush1.msra.mxu0 0.0
    %1202 = vmatprep.subr.mxu0 0.0
    %1203 = vmatpush1.msra.mxu0 0.0
    %1204 = vmatprep.subr.mxu0 0.0
    %1205 = vmatpush1.msra.mxu0 0.0
    %1206 = vmatprep.subr.mxu0 0.0
    %1207 = vmatpush1.msra.mxu0 0.0
    %1208 = vmatprep.subr.mxu0 0.0
    %1209 = vmatpush1.msra.mxu0 0.0
    %1210 = vmatprep.subr.mxu0 0.0
    %1211 = vmatpush1.msra.mxu0 0.0
    %1212 = vmatprep.subr.mxu0 0.0
    %1213 = vmatpush1.msra.mxu0 0.0
    %1214 = vmatprep.subr.mxu0 0.0
    %1215 = vmatpush1.msra.mxu0 0.0
    %1216 = vmatprep.subr.mxu0 0.0
    %1217 = vmatpush1.msra.mxu0 0.0
    %1218 = vmatprep.subr.mxu0 0.0
    %1219 = vmatpush1.msra.mxu0 0.0
    %1220 = vmatprep.subr.mxu0 0.0
    %1221 = vmatpush1.msra.mxu0 0.0
    %1222 = vmatprep.subr.mxu0 0.0
    %1223 = vmatpush1.msra.mxu0 0.0
    %1224 = vmatprep.subr.mxu0 0.0
    %1225 = vmatpush1.msra.mxu0 0.0
    %1226 = vmatprep.subr.mxu0 0.0
    %1227 = vmatpush1.msra.mxu0 0.0
    %1228 = vmatprep.subr.mxu0 0.0
    %1229 = vmatpush1.msra.mxu0 0.0
    %1230 = vmatprep.subr.mxu0 0.0
    %1231 = vmatpush1.msra.mxu0 0.0
    %1232 = vmatprep.subr.mxu0 0.0
    %1233 = vmatpush1.msra.mxu0 0.0
    %1234 = vmatprep.subr.mxu0 0.0
    %1235 = vmatpush1.msra.mxu0 0.0
    %1236 = vmatprep.subr.mxu0 0.0
    %1237 = vmatpush1.msra.mxu0 0.0
    %1238 = vmatprep.subr.mxu0 0.0
    %1239 = vmatpush1.msra.mxu0 0.0
    %1240 = vmatprep.subr.mxu0 0.0
    %1241 = vmatpush1.msra.mxu0 0.0
    %1242 = vmatprep.subr.mxu0 0.0
    %1243 = vmatpush1.msra.mxu0 0.0
    %1244 = vmatprep.subr.mxu0 0.0
    %1245 = vmatpush1.msra.mxu0 0.0
    %1246 = vmatprep.mubr.f32.mxu0 0.0
    %1247 = vmatmul.mubr.f32.gmra.mrb[0].mxu0 %v1180
    %v1248 = vpop.f32.mrb[0].mxu0
    %v1249 = vadd.f32 0.0, %v1248
    %v1250 = vpop.f32.mrb[0].mxu0
    %1251 = vdwg.mxu0
    %v1253 = vrot.slane %v1249, 2
    %v1254 = vrot.slane %v1249, 3
    %v1257 = vadd.f32 %v241, %v1253
    %v1258 = vadd.f32 %v246, %v1254
    %v1259 = vxor.u32 %v1257, 2147483648
    %v1260 = vxor.u32 %v1258, 2147483648
    %v1261 = vmul.f32 %v1259, 1.442695
    %v1262 = vpow.pop %v1261
    %v1263 = vmul.f32 %v1260, 1.442695
    %v1264 = vpow.pop %v1263
    %v1265 = vadd.f32 %v1262, 1.0
    %v1266 = vadd.f32 %v1264, 1.0
    %v1267 = vrcp.pop %v1265
    %v1268 = vmul.f32 1.0, %v1267
    %v1269 = vrcp.pop %v1266
    %v1270 = vmul.f32 1.0, %v1269
    %v1271 = vtanh.pop %v1257
    %v1272 = vtanh.pop %v1258
    %v1274 = vrot.slane %v1178, 2
    %v1275 = vrot.slane %v1178, 3
    %1276 = vrot.lane.b32.xlu0 %v1274, 32
    %v1277 = vpop.permute.xlu0 %1276
    %1278 = vrot.lane.b32.xlu0 %v1275, 32
    %v1279 = vpop.permute.xlu0 %1278
    %v1282 = vmul.f32 %v1268, %v1277
    %v1283 = vmul.f32 %v1270, %v1279
    %1286 = vrot.lane.b32.xlu0 %v1271, 64
    %v1287 = vpop.permute.xlu0 %1286
    %1288 = vrot.lane.b32.xlu0 %v1272, 64
    %v1289 = vpop.permute.xlu0 %1288
    %v1292 = vmul.f32 %v1268, %v1287
    %v1293 = vmul.f32 %v1270, %v1289
    %1296 = vrot.lane.b32.xlu0 %v1292, 32
    %v1297 = vpop.permute.xlu0 %1296
    %1298 = vrot.lane.b32.xlu0 %v1293, 32
    %v1299 = vpop.permute.xlu0 %1298
    %v1302 = vadd.f32 %v1282, %v1297
    %v1303 = vadd.f32 %v1283, %v1299
    %v1304 = vtanh.pop %v1302
    %v1305 = vtanh.pop %v1303
    %1308 = vrot.lane.b32.xlu0 %v1304, 64
    %v1309 = vpop.permute.xlu0 %1308
    %1310 = vrot.lane.b32.xlu0 %v1305, 64
    %v1311 = vpop.permute.xlu0 %1310
    %v1314 = vmul.f32 %v1268, %v1309
    %v1315 = vmul.f32 %v1270, %v1311
    %vm1316 = vcmp.gt.s32.totalorder %v155, 6
    %v1319 = vrot.slane %v1314, 6
    %v1320 = vrot.slane %v1315, 5
    %v1321 = vsel %vm384, %v1320, %v1319
    %1322 = vrot.lane.b32.xlu0 %v1321, 32
    %v1323 = vpop.permute.xlu0 %1322
    %v1325 = vsel %vm1316, %v1323, 0.0
    %v1326 = vsel %vm1316, %v1323, %v1169
    %v1329 = vrot.slane %v1302, 6
    %v1330 = vrot.slane %v1303, 5
    %v1331 = vsel %vm384, %v1330, %v1329
    %1332 = vrot.lane.b32.xlu0 %v1331, 96
    %v1333 = vpop.permute.xlu0 %1332
    %v1335 = vsel %vm1316, %v1333, %v1178
    %v1337 = vsel %vm167, %v1326, 0
    %1339 = vmatprep.subr.mxu0 0.0
    %1340 = vmatpush1.msra.mxu0 %v249
    %1341 = vmatprep.subr.mxu0 0.0
    %1342 = vmatpush1.msra.mxu0 %v250
    %1343 = vmatprep.subr.mxu0 0.0
    %1344 = vmatpush1.msra.mxu0 %v251
    %1345 = vmatprep.subr.mxu0 0.0
    %1346 = vmatpush1.msra.mxu0 %v252
    %1347 = vmatprep.subr.mxu0 0.0
    %1348 = vmatpush1.msra.mxu0 0.0
    %1349 = vmatprep.subr.mxu0 0.0
    %1350 = vmatpush1.msra.mxu0 0.0
    %1351 = vmatprep.subr.mxu0 0.0
    %1352 = vmatpush1.msra.mxu0 0.0
    %1353 = vmatprep.subr.mxu0 0.0
    %1354 = vmatpush1.msra.mxu0 0.0
    %1355 = vmatprep.subr.mxu0 0.0
    %1356 = vmatpush1.msra.mxu0 0.0
    %1357 = vmatprep.subr.mxu0 0.0
    %1358 = vmatpush1.msra.mxu0 0.0
    %1359 = vmatprep.subr.mxu0 0.0
    %1360 = vmatpush1.msra.mxu0 0.0
    %1361 = vmatprep.subr.mxu0 0.0
    %1362 = vmatpush1.msra.mxu0 0.0
    %1363 = vmatprep.subr.mxu0 0.0
    %1364 = vmatpush1.msra.mxu0 0.0
    %1365 = vmatprep.subr.mxu0 0.0
    %1366 = vmatpush1.msra.mxu0 0.0
    %1367 = vmatprep.subr.mxu0 0.0
    %1368 = vmatpush1.msra.mxu0 0.0
    %1369 = vmatprep.subr.mxu0 0.0
    %1370 = vmatpush1.msra.mxu0 0.0
    %1371 = vmatprep.subr.mxu0 0.0
    %1372 = vmatpush1.msra.mxu0 0.0
    %1373 = vmatprep.subr.mxu0 0.0
    %1374 = vmatpush1.msra.mxu0 0.0
    %1375 = vmatprep.subr.mxu0 0.0
    %1376 = vmatpush1.msra.mxu0 0.0
    %1377 = vmatprep.subr.mxu0 0.0
    %1378 = vmatpush1.msra.mxu0 0.0
    %1379 = vmatprep.subr.mxu0 0.0
    %1380 = vmatpush1.msra.mxu0 0.0
    %1381 = vmatprep.subr.mxu0 0.0
    %1382 = vmatpush1.msra.mxu0 0.0
    %1383 = vmatprep.subr.mxu0 0.0
    %1384 = vmatpush1.msra.mxu0 0.0
    %1385 = vmatprep.subr.mxu0 0.0
    %1386 = vmatpush1.msra.mxu0 0.0
    %1387 = vmatprep.subr.mxu0 0.0
    %1388 = vmatpush1.msra.mxu0 0.0
    %1389 = vmatprep.subr.mxu0 0.0
    %1390 = vmatpush1.msra.mxu0 0.0
    %1391 = vmatprep.subr.mxu0 0.0
    %1392 = vmatpush1.msra.mxu0 0.0
    %1393 = vmatprep.subr.mxu0 0.0
    %1394 = vmatpush1.msra.mxu0 0.0
    %1395 = vmatprep.subr.mxu0 0.0
    %1396 = vmatpush1.msra.mxu0 0.0
    %1397 = vmatprep.subr.mxu0 0.0
    %1398 = vmatpush1.msra.mxu0 0.0
    %1399 = vmatprep.subr.mxu0 0.0
    %1400 = vmatpush1.msra.mxu0 0.0
    %1401 = vmatprep.subr.mxu0 0.0
    %1402 = vmatpush1.msra.mxu0 0.0
    %1403 = vmatprep.mubr.f32.mxu0 0.0
    %1404 = vmatmul.mubr.f32.gmra.mrb[0].mxu0 %v1337
    %v1405 = vpop.f32.mrb[0].mxu0
    %v1406 = vadd.f32 0.0, %v1405
    %v1407 = vpop.f32.mrb[0].mxu0
    %1408 = vdwg.mxu0
    %v1410 = vrot.slane %v1406, 1
    %v1411 = vrot.slane %v1406, 2
    %v1414 = vadd.f32 %v241, %v1410
    %v1415 = vadd.f32 %v246, %v1411
    %v1416 = vxor.u32 %v1414, 2147483648
    %v1417 = vxor.u32 %v1415, 2147483648
    %v1418 = vmul.f32 %v1416, 1.442695
    %v1419 = vpow.pop %v1418
    %v1420 = vmul.f32 %v1417, 1.442695
    %v1421 = vpow.pop %v1420
    %v1422 = vadd.f32 %v1419, 1.0
    %v1423 = vadd.f32 %v1421, 1.0
    %v1424 = vrcp.pop %v1422
    %v1425 = vmul.f32 1.0, %v1424
    %v1426 = vrcp.pop %v1423
    %v1427 = vmul.f32 1.0, %v1426
    %v1428 = vtanh.pop %v1414
    %v1429 = vtanh.pop %v1415
    %v1431 = vrot.slane %v1335, 1
    %v1432 = vrot.slane %v1335, 2
    %1433 = vrot.lane.b32.xlu0 %v1431, 32
    %v1434 = vpop.permute.xlu0 %1433
    %1435 = vrot.lane.b32.xlu0 %v1432, 32
    %v1436 = vpop.permute.xlu0 %1435
    %v1439 = vmul.f32 %v1425, %v1434
    %v1440 = vmul.f32 %v1427, %v1436
    %1443 = vrot.lane.b32.xlu0 %v1428, 64
    %v1444 = vpop.permute.xlu0 %1443
    %1445 = vrot.lane.b32.xlu0 %v1429, 64
    %v1446 = vpop.permute.xlu0 %1445
    %v1449 = vmul.f32 %v1425, %v1444
    %v1450 = vmul.f32 %v1427, %v1446
    %1453 = vrot.lane.b32.xlu0 %v1449, 32
    %v1454 = vpop.permute.xlu0 %1453
    %1455 = vrot.lane.b32.xlu0 %v1450, 32
    %v1456 = vpop.permute.xlu0 %1455
    %v1459 = vadd.f32 %v1439, %v1454
    %v1460 = vadd.f32 %v1440, %v1456
    %v1461 = vtanh.pop %v1459
    %v1462 = vtanh.pop %v1460
    %1465 = vrot.lane.b32.xlu0 %v1461, 64
    %v1466 = vpop.permute.xlu0 %1465
    %1467 = vrot.lane.b32.xlu0 %v1462, 64
    %v1468 = vpop.permute.xlu0 %1467
    %v1471 = vmul.f32 %v1425, %v1466
    %v1472 = vmul.f32 %v1427, %v1468
    %vm1473 = vcmp.gt.s32.totalorder %v155, 7
    %v1476 = vrot.slane %v1471, 7
    %v1477 = vrot.slane %v1472, 6
    %v1478 = vsel %vm384, %v1477, %v1476
    %1479 = vrot.lane.b32.xlu0 %v1478, 32
    %v1480 = vpop.permute.xlu0 %1479
    %v1482 = vsel %vm1473, %v1480, 0.0
    %s1483 = scalar_lea.vmem [#allocation3], 32
    %v1484 = vld [vmem:[%s1483] sm:$0xff]
    %v1485 = vld [vmem:[%s1483 + $0x8] sm:$0xff]
    %v1486 = vld [vmem:[%s1483 + $0x10] sm:$0xff]
    %v1487 = vld [vmem:[%s1483 + $0x18] sm:$0xff]
    %s1488 = scalar_lea.vmem %s3, 32
    %v1489 = vld [vmem:[%s1488] sm:$0xff]
    %v1490 = vld [vmem:[%s1488 + $0x8] sm:$0xff]
    %v1491 = vld [vmem:[%s1488 + $0x10] sm:$0xff]
    %v1492 = vld [vmem:[%s1488 + $0x18] sm:$0xff]
    %s1493 = scalar_lea.vmem %s5, 1
    %v1494 = vld [vmem:[%s1493] sm:$0x1]
    %v1496 = vlaneseq
    %v1497 = vshrl.u32 %v1496, 7
    %v1498 = vsub.s32 0, %v1497
    %v1499 = vrot.slane %v1494, %v1498
    %1501 = vmatprep.subr.mxu0 0.0
    %1502 = vmatpush1.msra.mxu0 %v1489
    %1503 = vmatprep.subr.mxu0 0.0
    %1504 = vmatpush1.msra.mxu0 %v1490
    %1505 = vmatprep.subr.mxu0 0.0
    %1506 = vmatpush1.msra.mxu0 %v1491
    %1507 = vmatprep.subr.mxu0 0.0
    %1508 = vmatpush1.msra.mxu0 %v1492
    %1509 = vmatprep.subr.mxu0 0.0
    %1510 = vmatpush1.msra.mxu0 0.0
    %1511 = vmatprep.subr.mxu0 0.0
    %1512 = vmatpush1.msra.mxu0 0.0
    %1513 = vmatprep.subr.mxu0 0.0
    %1514 = vmatpush1.msra.mxu0 0.0
    %1515 = vmatprep.subr.mxu0 0.0
    %1516 = vmatpush1.msra.mxu0 0.0
    %1517 = vmatprep.subr.mxu0 0.0
    %1518 = vmatpush1.msra.mxu0 0.0
    %1519 = vmatprep.subr.mxu0 0.0
    %1520 = vmatpush1.msra.mxu0 0.0
    %1521 = vmatprep.subr.mxu0 0.0
    %1522 = vmatpush1.msra.mxu0 0.0
    %1523 = vmatprep.subr.mxu0 0.0
    %1524 = vmatpush1.msra.mxu0 0.0
    %1525 = vmatprep.subr.mxu0 0.0
    %1526 = vmatpush1.msra.mxu0 0.0
    %1527 = vmatprep.subr.mxu0 0.0
    %1528 = vmatpush1.msra.mxu0 0.0
    %1529 = vmatprep.subr.mxu0 0.0
    %1530 = vmatpush1.msra.mxu0 0.0
    %1531 = vmatprep.subr.mxu0 0.0
    %1532 = vmatpush1.msra.mxu0 0.0
    %1533 = vmatprep.subr.mxu0 0.0
    %1534 = vmatpush1.msra.mxu0 0.0
    %1535 = vmatprep.subr.mxu0 0.0
    %1536 = vmatpush1.msra.mxu0 0.0
    %1537 = vmatprep.subr.mxu0 0.0
    %1538 = vmatpush1.msra.mxu0 0.0
    %1539 = vmatprep.subr.mxu0 0.0
    %1540 = vmatpush1.msra.mxu0 0.0
    %1541 = vmatprep.subr.mxu0 0.0
    %1542 = vmatpush1.msra.mxu0 0.0
    %1543 = vmatprep.subr.mxu0 0.0
    %1544 = vmatpush1.msra.mxu0 0.0
    %1545 = vmatprep.subr.mxu0 0.0
    %1546 = vmatpush1.msra.mxu0 0.0
    %1547 = vmatprep.subr.mxu0 0.0
    %1548 = vmatpush1.msra.mxu0 0.0
    %1549 = vmatprep.subr.mxu0 0.0
    %1550 = vmatpush1.msra.mxu0 0.0
    %1551 = vmatprep.subr.mxu0 0.0
    %1552 = vmatpush1.msra.mxu0 0.0
    %1553 = vmatprep.subr.mxu0 0.0
    %1554 = vmatpush1.msra.mxu0 0.0
    %1555 = vmatprep.subr.mxu0 0.0
    %1556 = vmatpush1.msra.mxu0 0.0
    %1557 = vmatprep.subr.mxu0 0.0
    %1558 = vmatpush1.msra.mxu0 0.0
    %1559 = vmatprep.subr.mxu0 0.0
    %1560 = vmatpush1.msra.mxu0 0.0
    %1561 = vmatprep.subr.mxu0 0.0
    %1562 = vmatpush1.msra.mxu0 0.0
    %1563 = vmatprep.subr.mxu0 0.0
    %1564 = vmatpush1.msra.mxu0 0.0
    %1565 = vmatprep.mubr.f32.mxu0 0.0
    %1566 = vmatmul.mubr.f32.gmra.mrb[0].mxu0 %v399
    %v1567 = vpop.f32.mrb[0].mxu0
    %v1568 = vadd.f32 %v1499, %v1567
    %v1569 = vpop.f32.mrb[0].mxu0
    %1570 = vdwg.mxu0
    %1571 = vmatprep.subr.mxu0 0.0
    %1572 = vmatpush1.msra.mxu0 %v1484
    %1573 = vmatprep.subr.mxu0 0.0
    %1574 = vmatpush1.msra.mxu0 %v1485
    %1575 = vmatprep.subr.mxu0 0.0
    %1576 = vmatpush1.msra.mxu0 %v1486
    %1577 = vmatprep.subr.mxu0 0.0
    %1578 = vmatpush1.msra.mxu0 %v1487
    %1579 = vmatprep.subr.mxu0 0.0
    %1580 = vmatpush1.msra.mxu0 0.0
    %1581 = vmatprep.subr.mxu0 0.0
    %1582 = vmatpush1.msra.mxu0 0.0
    %1583 = vmatprep.subr.mxu0 0.0
    %1584 = vmatpush1.msra.mxu0 0.0
    %1585 = vmatprep.subr.mxu0 0.0
    %1586 = vmatpush1.msra.mxu0 0.0
    %1587 = vmatprep.subr.mxu0 0.0
    %1588 = vmatpush1.msra.mxu0 0.0
    %1589 = vmatprep.subr.mxu0 0.0
    %1590 = vmatpush1.msra.mxu0 0.0
    %1591 = vmatprep.subr.mxu0 0.0
    %1592 = vmatpush1.msra.mxu0 0.0
    %1593 = vmatprep.subr.mxu0 0.0
    %1594 = vmatpush1.msra.mxu0 0.0
    %1595 = vmatprep.subr.mxu0 0.0
    %1596 = vmatpush1.msra.mxu0 0.0
    %1597 = vmatprep.subr.mxu0 0.0
    %1598 = vmatpush1.msra.mxu0 0.0
    %1599 = vmatprep.subr.mxu0 0.0
    %1600 = vmatpush1.msra.mxu0 0.0
    %1601 = vmatprep.subr.mxu0 0.0
    %1602 = vmatpush1.msra.mxu0 0.0
    %1603 = vmatprep.subr.mxu0 0.0
    %1604 = vmatpush1.msra.mxu0 0.0
    %1605 = vmatprep.subr.mxu0 0.0
    %1606 = vmatpush1.msra.mxu0 0.0
    %1607 = vmatprep.subr.mxu0 0.0
    %1608 = vmatpush1.msra.mxu0 0.0
    %1609 = vmatprep.subr.mxu0 0.0
    %1610 = vmatpush1.msra.mxu0 0.0
    %1611 = vmatprep.subr.mxu0 0.0
    %1612 = vmatpush1.msra.mxu0 0.0
    %1613 = vmatprep.subr.mxu0 0.0
    %1614 = vmatpush1.msra.mxu0 0.0
    %1615 = vmatprep.subr.mxu0 0.0
    %1616 = vmatpush1.msra.mxu0 0.0
    %1617 = vmatprep.subr.mxu0 0.0
    %1618 = vmatpush1.msra.mxu0 0.0
    %1619 = vmatprep.subr.mxu0 0.0
    %1620 = vmatpush1.msra.mxu0 0.0
    %1621 = vmatprep.subr.mxu0 0.0
    %1622 = vmatpush1.msra.mxu0 0.0
    %1623 = vmatprep.subr.mxu0 0.0
    %1624 = vmatpush1.msra.mxu0 0.0
    %1625 = vmatprep.subr.mxu0 0.0
    %1626 = vmatpush1.msra.mxu0 0.0
    %1627 = vmatprep.subr.mxu0 0.0
    %1628 = vmatpush1.msra.mxu0 0.0
    %1629 = vmatprep.subr.mxu0 0.0
    %1630 = vmatpush1.msra.mxu0 0.0
    %1631 = vmatprep.subr.mxu0 0.0
    %1632 = vmatpush1.msra.mxu0 0.0
    %1633 = vmatprep.subr.mxu0 0.0
    %1634 = vmatpush1.msra.mxu0 0.0
    %1635 = vmatprep.mubr.f32.mxu0 0.0
    %1636 = vmatmul.mubr.f32.gmra.mrb[0].mxu0 %v254
    %v1637 = vpop.f32.mrb[0].mxu0
    %v1638 = vadd.f32 0.0, %v1637
    %v1639 = vpop.f32.mrb[0].mxu0
    %1640 = vdwg.mxu0
    %v1641 = vadd.f32 %v1568, %v1638
    %v1642 = vxor.u32 %v1641, 2147483648
    %v1643 = vmul.f32 %v1642, 1.442695
    %v1644 = vpow.pop %v1643
    %v1645 = vadd.f32 %v1644, 1.0
    %v1646 = vrcp.pop %v1645
    %v1647 = vmul.f32 1.0, %v1646
    %v1648 = vtanh.pop %v1641
    %v1649 = vmul.f32 %v1647, 0.0
    %1651 = vrot.lane.b32.xlu0 %v1648, 64
    %v1652 = vpop.permute.xlu0 %1651
    %v1654 = vmul.f32 %v1647, %v1652
    %1656 = vrot.lane.b32.xlu0 %v1654, 32
    %v1657 = vpop.permute.xlu0 %1656
    %v1659 = vadd.f32 %v1649, %v1657
    %v1660 = vtanh.pop %v1659
    %1662 = vrot.lane.b32.xlu0 %v1660, 64
    %v1663 = vpop.permute.xlu0 %1662
    %v1665 = vmul.f32 %v1647, %v1663
    %v1666 = vsel %vm380, %v1665, 0.0
    %v1667 = vsel %vm380, %v1659, 0.0
    %v1669 = vsel %vm167, %v541, 0
    %1671 = vmatprep.subr.mxu0 0.0
    %1672 = vmatpush1.msra.mxu0 %v1489
    %1673 = vmatprep.subr.mxu0 0.0
    %1674 = vmatpush1.msra.mxu0 %v1490
    %1675 = vmatprep.subr.mxu0 0.0
    %1676 = vmatpush1.msra.mxu0 %v1491
    %1677 = vmatprep.subr.mxu0 0.0
    %1678 = vmatpush1.msra.mxu0 %v1492
    %1679 = vmatprep.subr.mxu0 0.0
    %1680 = vmatpush1.msra.mxu0 0.0
    %1681 = vmatprep.subr.mxu0 0.0
    %1682 = vmatpush1.msra.mxu0 0.0
    %1683 = vmatprep.subr.mxu0 0.0
    %1684 = vmatpush1.msra.mxu0 0.0
    %1685 = vmatprep.subr.mxu0 0.0
    %1686 = vmatpush1.msra.mxu0 0.0
    %1687 = vmatprep.subr.mxu0 0.0
    %1688 = vmatpush1.msra.mxu0 0.0
    %1689 = vmatprep.subr.mxu0 0.0
    %1690 = vmatpush1.msra.mxu0 0.0
    %1691 = vmatprep.subr.mxu0 0.0
    %1692 = vmatpush1.msra.mxu0 0.0
    %1693 = vmatprep.subr.mxu0 0.0
    %1694 = vmatpush1.msra.mxu0 0.0
    %1695 = vmatprep.subr.mxu0 0.0
    %1696 = vmatpush1.msra.mxu0 0.0
    %1697 = vmatprep.subr.mxu0 0.0
    %1698 = vmatpush1.msra.mxu0 0.0
    %1699 = vmatprep.subr.mxu0 0.0
    %1700 = vmatpush1.msra.mxu0 0.0
    %1701 = vmatprep.subr.mxu0 0.0
    %1702 = vmatpush1.msra.mxu0 0.0
    %1703 = vmatprep.subr.mxu0 0.0
    %1704 = vmatpush1.msra.mxu0 0.0
    %1705 = vmatprep.subr.mxu0 0.0
    %1706 = vmatpush1.msra.mxu0 0.0
    %1707 = vmatprep.subr.mxu0 0.0
    %1708 = vmatpush1.msra.mxu0 0.0
    %1709 = vmatprep.subr.mxu0 0.0
    %1710 = vmatpush1.msra.mxu0 0.0
    %1711 = vmatprep.subr.mxu0 0.0
    %1712 = vmatpush1.msra.mxu0 0.0
    %1713 = vmatprep.subr.mxu0 0.0
    %1714 = vmatpush1.msra.mxu0 0.0
    %1715 = vmatprep.subr.mxu0 0.0
    %1716 = vmatpush1.msra.mxu0 0.0
    %1717 = vmatprep.subr.mxu0 0.0
    %1718 = vmatpush1.msra.mxu0 0.0
    %1719 = vmatprep.subr.mxu0 0.0
    %1720 = vmatpush1.msra.mxu0 0.0
    %1721 = vmatprep.subr.mxu0 0.0
    %1722 = vmatpush1.msra.mxu0 0.0
    %1723 = vmatprep.subr.mxu0 0.0
    %1724 = vmatpush1.msra.mxu0 0.0
    %1725 = vmatprep.subr.mxu0 0.0
    %1726 = vmatpush1.msra.mxu0 0.0
    %1727 = vmatprep.subr.mxu0 0.0
    %1728 = vmatpush1.msra.mxu0 0.0
    %1729 = vmatprep.subr.mxu0 0.0
    %1730 = vmatpush1.msra.mxu0 0.0
    %1731 = vmatprep.subr.mxu0 0.0
    %1732 = vmatpush1.msra.mxu0 0.0
    %1733 = vmatprep.subr.mxu0 0.0
    %1734 = vmatpush1.msra.mxu0 0.0
    %1735 = vmatprep.mubr.f32.mxu0 0.0
    %1736 = vmatmul.mubr.f32.gmra.mrb[0].mxu0 %v1669
    %v1737 = vpop.f32.mrb[0].mxu0
    %v1738 = vadd.f32 %v1499, %v1737
    %v1739 = vpop.f32.mrb[0].mxu0
    %1740 = vdwg.mxu0
    %1742 = vrot.lane.b32.xlu0 %v1666, 32
    %v1743 = vpop.permute.xlu0 %1742
    %v1744 = vsel %vm167, %v1743, 0
    %1746 = vmatprep.subr.mxu0 0.0
    %1747 = vmatpush1.msra.mxu0 %v1484
    %1748 = vmatprep.subr.mxu0 0.0
    %1749 = vmatpush1.msra.mxu0 %v1485
    %1750 = vmatprep.subr.mxu0 0.0
    %1751 = vmatpush1.msra.mxu0 %v1486
    %1752 = vmatprep.subr.mxu0 0.0
    %1753 = vmatpush1.msra.mxu0 %v1487
    %1754 = vmatprep.subr.mxu0 0.0
    %1755 = vmatpush1.msra.mxu0 0.0
    %1756 = vmatprep.subr.mxu0 0.0
    %1757 = vmatpush1.msra.mxu0 0.0
    %1758 = vmatprep.subr.mxu0 0.0
    %1759 = vmatpush1.msra.mxu0 0.0
    %1760 = vmatprep.subr.mxu0 0.0
    %1761 = vmatpush1.msra.mxu0 0.0
    %1762 = vmatprep.subr.mxu0 0.0
    %1763 = vmatpush1.msra.mxu0 0.0
    %1764 = vmatprep.subr.mxu0 0.0
    %1765 = vmatpush1.msra.mxu0 0.0
    %1766 = vmatprep.subr.mxu0 0.0
    %1767 = vmatpush1.msra.mxu0 0.0
    %1768 = vmatprep.subr.mxu0 0.0
    %1769 = vmatpush1.msra.mxu0 0.0
    %1770 = vmatprep.subr.mxu0 0.0
    %1771 = vmatpush1.msra.mxu0 0.0
    %1772 = vmatprep.subr.mxu0 0.0
    %1773 = vmatpush1.msra.mxu0 0.0
    %1774 = vmatprep.subr.mxu0 0.0
    %1775 = vmatpush1.msra.mxu0 0.0
    %1776 = vmatprep.subr.mxu0 0.0
    %1777 = vmatpush1.msra.mxu0 0.0
    %1778 = vmatprep.subr.mxu0 0.0
    %1779 = vmatpush1.msra.mxu0 0.0
    %1780 = vmatprep.subr.mxu0 0.0
    %1781 = vmatpush1.msra.mxu0 0.0
    %1782 = vmatprep.subr.mxu0 0.0
    %1783 = vmatpush1.msra.mxu0 0.0
    %1784 = vmatprep.subr.mxu0 0.0
    %1785 = vmatpush1.msra.mxu0 0.0
    %1786 = vmatprep.subr.mxu0 0.0
    %1787 = vmatpush1.msra.mxu0 0.0
    %1788 = vmatprep.subr.mxu0 0.0
    %1789 = vmatpush1.msra.mxu0 0.0
    %1790 = vmatprep.subr.mxu0 0.0
    %1791 = vmatpush1.msra.mxu0 0.0
    %1792 = vmatprep.subr.mxu0 0.0
    %1793 = vmatpush1.msra.mxu0 0.0
    %1794 = vmatprep.subr.mxu0 0.0
    %1795 = vmatpush1.msra.mxu0 0.0
    %1796 = vmatprep.subr.mxu0 0.0
    %1797 = vmatpush1.msra.mxu0 0.0
    %1798 = vmatprep.subr.mxu0 0.0
    %1799 = vmatpush1.msra.mxu0 0.0
    %1800 = vmatprep.subr.mxu0 0.0
    %1801 = vmatpush1.msra.mxu0 0.0
    %1802 = vmatprep.subr.mxu0 0.0
    %1803 = vmatpush1.msra.mxu0 0.0
    %1804 = vmatprep.subr.mxu0 0.0
    %1805 = vmatpush1.msra.mxu0 0.0
    %1806 = vmatprep.subr.mxu0 0.0
    %1807 = vmatpush1.msra.mxu0 0.0
    %1808 = vmatprep.subr.mxu0 0.0
    %1809 = vmatpush1.msra.mxu0 0.0
    %1810 = vmatprep.mubr.f32.mxu0 0.0
    %1811 = vmatmul.mubr.f32.gmra.mrb[0].mxu0 %v1744
    %v1812 = vpop.f32.mrb[0].mxu0
    %v1813 = vadd.f32 0.0, %v1812
    %v1814 = vpop.f32.mrb[0].mxu0
    %1815 = vdwg.mxu0
    %v1816 = vadd.f32 %v1738, %v1813
    %v1817 = vxor.u32 %v1816, 2147483648
    %v1818 = vmul.f32 %v1817, 1.442695
    %v1819 = vpow.pop %v1818
    %v1820 = vadd.f32 %v1819, 1.0
    %v1821 = vrcp.pop %v1820
    %v1822 = vmul.f32 1.0, %v1821
    %v1823 = vtanh.pop %v1816
    %v1824 = vmul.f32 %v1822, %v1667
    %1826 = vrot.lane.b32.xlu0 %v1823, 64
    %v1827 = vpop.permute.xlu0 %1826
    %v1829 = vmul.f32 %v1822, %v1827
    %1831 = vrot.lane.b32.xlu0 %v1829, 32
    %v1832 = vpop.permute.xlu0 %1831
    %v1834 = vadd.f32 %v1824, %v1832
    %v1835 = vtanh.pop %v1834
    %1837 = vrot.lane.b32.xlu0 %v1835, 64
    %v1838 = vpop.permute.xlu0 %1837
    %v1840 = vmul.f32 %v1822, %v1838
    %v1841 = vsel %vm533, %v1840, 0.0
    %v1842 = vsel %vm533, %v1840, %v1666
    %v1843 = vsel %vm533, %v1834, %v1667
    %v1845 = vsel %vm167, %v697, 0
    %1847 = vmatprep.subr.mxu0 0.0
    %1848 = vmatpush1.msra.mxu0 %v1489
    %1849 = vmatprep.subr.mxu0 0.0
    %1850 = vmatpush1.msra.mxu0 %v1490
    %1851 = vmatprep.subr.mxu0 0.0
    %1852 = vmatpush1.msra.mxu0 %v1491
    %1853 = vmatprep.subr.mxu0 0.0
    %1854 = vmatpush1.msra.mxu0 %v1492
    %1855 = vmatprep.subr.mxu0 0.0
    %1856 = vmatpush1.msra.mxu0 0.0
    %1857 = vmatprep.subr.mxu0 0.0
    %1858 = vmatpush1.msra.mxu0 0.0
    %1859 = vmatprep.subr.mxu0 0.0
    %1860 = vmatpush1.msra.mxu0 0.0
    %1861 = vmatprep.subr.mxu0 0.0
    %1862 = vmatpush1.msra.mxu0 0.0
    %1863 = vmatprep.subr.mxu0 0.0
    %1864 = vmatpush1.msra.mxu0 0.0
    %1865 = vmatprep.subr.mxu0 0.0
    %1866 = vmatpush1.msra.mxu0 0.0
    %1867 = vmatprep.subr.mxu0 0.0
    %1868 = vmatpush1.msra.mxu0 0.0
    %1869 = vmatprep.subr.mxu0 0.0
    %1870 = vmatpush1.msra.mxu0 0.0
    %1871 = vmatprep.subr.mxu0 0.0
    %1872 = vmatpush1.msra.mxu0 0.0
    %1873 = vmatprep.subr.mxu0 0.0
    %1874 = vmatpush1.msra.mxu0 0.0
    %1875 = vmatprep.subr.mxu0 0.0
    %1876 = vmatpush1.msra.mxu0 0.0
    %1877 = vmatprep.subr.mxu0 0.0
    %1878 = vmatpush1.msra.mxu0 0.0
    %1879 = vmatprep.subr.mxu0 0.0
    %1880 = vmatpush1.msra.mxu0 0.0
    %1881 = vmatprep.subr.mxu0 0.0
    %1882 = vmatpush1.msra.mxu0 0.0
    %1883 = vmatprep.subr.mxu0 0.0
    %1884 = vmatpush1.msra.mxu0 0.0
    %1885 = vmatprep.subr.mxu0 0.0
    %1886 = vmatpush1.msra.mxu0 0.0
    %1887 = vmatprep.subr.mxu0 0.0
    %1888 = vmatpush1.msra.mxu0 0.0
    %1889 = vmatprep.subr.mxu0 0.0
    %1890 = vmatpush1.msra.mxu0 0.0
    %1891 = vmatprep.subr.mxu0 0.0
    %1892 = vmatpush1.msra.mxu0 0.0
    %1893 = vmatprep.subr.mxu0 0.0
    %1894 = vmatpush1.msra.mxu0 0.0
    %1895 = vmatprep.subr.mxu0 0.0
    %1896 = vmatpush1.msra.mxu0 0.0
    %1897 = vmatprep.subr.mxu0 0.0
    %1898 = vmatpush1.msra.mxu0 0.0
    %1899 = vmatprep.subr.mxu0 0.0
    %1900 = vmatpush1.msra.mxu0 0.0
    %1901 = vmatprep.subr.mxu0 0.0
    %1902 = vmatpush1.msra.mxu0 0.0
    %1903 = vmatprep.subr.mxu0 0.0
    %1904 = vmatpush1.msra.mxu0 0.0
    %1905 = vmatprep.subr.mxu0 0.0
    %1906 = vmatpush1.msra.mxu0 0.0
    %1907 = vmatprep.subr.mxu0 0.0
    %1908 = vmatpush1.msra.mxu0 0.0
    %1909 = vmatprep.subr.mxu0 0.0
    %1910 = vmatpush1.msra.mxu0 0.0
    %1911 = vmatprep.mubr.f32.mxu0 0.0
    %1912 = vmatmul.mubr.f32.gmra.mrb[0].mxu0 %v1845
    %v1913 = vpop.f32.mrb[0].mxu0
    %v1914 = vadd.f32 %v1499, %v1913
    %v1915 = vpop.f32.mrb[0].mxu0
    %1916 = vdwg.mxu0
    %1918 = vrot.lane.b32.xlu0 %v1842, 32
    %v1919 = vpop.permute.xlu0 %1918
    %v1920 = vsel %vm167, %v1919, 0
    %1922 = vmatprep.subr.mxu0 0.0
    %1923 = vmatpush1.msra.mxu0 %v1484
    %1924 = vmatprep.subr.mxu0 0.0
    %1925 = vmatpush1.msra.mxu0 %v1485
    %1926 = vmatprep.subr.mxu0 0.0
    %1927 = vmatpush1.msra.mxu0 %v1486
    %1928 = vmatprep.subr.mxu0 0.0
    %1929 = vmatpush1.msra.mxu0 %v1487
    %1930 = vmatprep.subr.mxu0 0.0
    %1931 = vmatpush1.msra.mxu0 0.0
    %1932 = vmatprep.subr.mxu0 0.0
    %1933 = vmatpush1.msra.mxu0 0.0
    %1934 = vmatprep.subr.mxu0 0.0
    %1935 = vmatpush1.msra.mxu0 0.0
    %1936 = vmatprep.subr.mxu0 0.0
    %1937 = vmatpush1.msra.mxu0 0.0
    %1938 = vmatprep.subr.mxu0 0.0
    %1939 = vmatpush1.msra.mxu0 0.0
    %1940 = vmatprep.subr.mxu0 0.0
    %1941 = vmatpush1.msra.mxu0 0.0
    %1942 = vmatprep.subr.mxu0 0.0
    %1943 = vmatpush1.msra.mxu0 0.0
    %1944 = vmatprep.subr.mxu0 0.0
    %1945 = vmatpush1.msra.mxu0 0.0
    %1946 = vmatprep.subr.mxu0 0.0
    %1947 = vmatpush1.msra.mxu0 0.0
    %1948 = vmatprep.subr.mxu0 0.0
    %1949 = vmatpush1.msra.mxu0 0.0
    %1950 = vmatprep.subr.mxu0 0.0
    %1951 = vmatpush1.msra.mxu0 0.0
    %1952 = vmatprep.subr.mxu0 0.0
    %1953 = vmatpush1.msra.mxu0 0.0
    %1954 = vmatprep.subr.mxu0 0.0
    %1955 = vmatpush1.msra.mxu0 0.0
    %1956 = vmatprep.subr.mxu0 0.0
    %1957 = vmatpush1.msra.mxu0 0.0
    %1958 = vmatprep.subr.mxu0 0.0
    %1959 = vmatpush1.msra.mxu0 0.0
    %1960 = vmatprep.subr.mxu0 0.0
    %1961 = vmatpush1.msra.mxu0 0.0
    %1962 = vmatprep.subr.mxu0 0.0
    %1963 = vmatpush1.msra.mxu0 0.0
    %1964 = vmatprep.subr.mxu0 0.0
    %1965 = vmatpush1.msra.mxu0 0.0
    %1966 = vmatprep.subr.mxu0 0.0
    %1967 = vmatpush1.msra.mxu0 0.0
    %1968 = vmatprep.subr.mxu0 0.0
    %1969 = vmatpush1.msra.mxu0 0.0
    %1970 = vmatprep.subr.mxu0 0.0
    %1971 = vmatpush1.msra.mxu0 0.0
    %1972 = vmatprep.subr.mxu0 0.0
    %1973 = vmatpush1.msra.mxu0 0.0
    %1974 = vmatprep.subr.mxu0 0.0
    %1975 = vmatpush1.msra.mxu0 0.0
    %1976 = vmatprep.subr.mxu0 0.0
    %1977 = vmatpush1.msra.mxu0 0.0
    %1978 = vmatprep.subr.mxu0 0.0
    %1979 = vmatpush1.msra.mxu0 0.0
    %1980 = vmatprep.subr.mxu0 0.0
    %1981 = vmatpush1.msra.mxu0 0.0
    %1982 = vmatprep.subr.mxu0 0.0
    %1983 = vmatpush1.msra.mxu0 0.0
    %1984 = vmatprep.subr.mxu0 0.0
    %1985 = vmatpush1.msra.mxu0 0.0
    %1986 = vmatprep.mubr.f32.mxu0 0.0
    %1987 = vmatmul.mubr.f32.gmra.mrb[0].mxu0 %v1920
    %v1988 = vpop.f32.mrb[0].mxu0
    %v1989 = vadd.f32 0.0, %v1988
    %v1990 = vpop.f32.mrb[0].mxu0
    %1991 = vdwg.mxu0
    %v1992 = vadd.f32 %v1914, %v1989
    %v1993 = vxor.u32 %v1992, 2147483648
    %v1994 = vmul.f32 %v1993, 1.442695
    %v1995 = vpow.pop %v1994
    %v1996 = vadd.f32 %v1995, 1.0
    %v1997 = vrcp.pop %v1996
    %v1998 = vmul.f32 1.0, %v1997
    %v1999 = vtanh.pop %v1992
    %v2000 = vmul.f32 %v1998, %v1843
    %2002 = vrot.lane.b32.xlu0 %v1999, 64
    %v2003 = vpop.permute.xlu0 %2002
    %v2005 = vmul.f32 %v1998, %v2003
    %2007 = vrot.lane.b32.xlu0 %v2005, 32
    %v2008 = vpop.permute.xlu0 %2007
    %v2010 = vadd.f32 %v2000, %v2008
    %v2011 = vtanh.pop %v2010
    %2013 = vrot.lane.b32.xlu0 %v2011, 64
    %v2014 = vpop.permute.xlu0 %2013
    %v2016 = vmul.f32 %v1998, %v2014
    %v2017 = vsel %vm688, %v2016, 0.0
    %v2018 = vsel %vm688, %v2016, %v1842
    %v2019 = vsel %vm688, %v2010, %v1843
    %v2021 = vsel %vm167, %v854, 0
    %2023 = vmatprep.subr.mxu0 0.0
    %2024 = vmatpush1.msra.mxu0 %v1489
    %2025 = vmatprep.subr.mxu0 0.0
    %2026 = vmatpush1.msra.mxu0 %v1490
    %2027 = vmatprep.subr.mxu0 0.0
    %2028 = vmatpush1.msra.mxu0 %v1491
    %2029 = vmatprep.subr.mxu0 0.0
    %2030 = vmatpush1.msra.mxu0 %v1492
    %2031 = vmatprep.subr.mxu0 0.0
    %2032 = vmatpush1.msra.mxu0 0.0
    %2033 = vmatprep.subr.mxu0 0.0
    %2034 = vmatpush1.msra.mxu0 0.0
    %2035 = vmatprep.subr.mxu0 0.0
    %2036 = vmatpush1.msra.mxu0 0.0
    %2037 = vmatprep.subr.mxu0 0.0
    %2038 = vmatpush1.msra.mxu0 0.0
    %2039 = vmatprep.subr.mxu0 0.0
    %2040 = vmatpush1.msra.mxu0 0.0
    %2041 = vmatprep.subr.mxu0 0.0
    %2042 = vmatpush1.msra.mxu0 0.0
    %2043 = vmatprep.subr.mxu0 0.0
    %2044 = vmatpush1.msra.mxu0 0.0
    %2045 = vmatprep.subr.mxu0 0.0
    %2046 = vmatpush1.msra.mxu0 0.0
    %2047 = vmatprep.subr.mxu0 0.0
    %2048 = vmatpush1.msra.mxu0 0.0
    %2049 = vmatprep.subr.mxu0 0.0
    %2050 = vmatpush1.msra.mxu0 0.0
    %2051 = vmatprep.subr.mxu0 0.0
    %2052 = vmatpush1.msra.mxu0 0.0
    %2053 = vmatprep.subr.mxu0 0.0
    %2054 = vmatpush1.msra.mxu0 0.0
    %2055 = vmatprep.subr.mxu0 0.0
    %2056 = vmatpush1.msra.mxu0 0.0
    %2057 = vmatprep.subr.mxu0 0.0
    %2058 = vmatpush1.msra.mxu0 0.0
    %2059 = vmatprep.subr.mxu0 0.0
    %2060 = vmatpush1.msra.mxu0 0.0
    %2061 = vmatprep.subr.mxu0 0.0
    %2062 = vmatpush1.msra.mxu0 0.0
    %2063 = vmatprep.subr.mxu0 0.0
    %2064 = vmatpush1.msra.mxu0 0.0
    %2065 = vmatprep.subr.mxu0 0.0
    %2066 = vmatpush1.msra.mxu0 0.0
    %2067 = vmatprep.subr.mxu0 0.0
    %2068 = vmatpush1.msra.mxu0 0.0
    %2069 = vmatprep.subr.mxu0 0.0
    %2070 = vmatpush1.msra.mxu0 0.0
    %2071 = vmatprep.subr.mxu0 0.0
    %2072 = vmatpush1.msra.mxu0 0.0
    %2073 = vmatprep.subr.mxu0 0.0
    %2074 = vmatpush1.msra.mxu0 0.0
    %2075 = vmatprep.subr.mxu0 0.0
    %2076 = vmatpush1.msra.mxu0 0.0
    %2077 = vmatprep.subr.mxu0 0.0
    %2078 = vmatpush1.msra.mxu0 0.0
    %2079 = vmatprep.subr.mxu0 0.0
    %2080 = vmatpush1.msra.mxu0 0.0
    %2081 = vmatprep.subr.mxu0 0.0
    %2082 = vmatpush1.msra.mxu0 0.0
    %2083 = vmatprep.subr.mxu0 0.0
    %2084 = vmatpush1.msra.mxu0 0.0
    %2085 = vmatprep.subr.mxu0 0.0
    %2086 = vmatpush1.msra.mxu0 0.0
    %2087 = vmatprep.mubr.f32.mxu0 0.0
    %2088 = vmatmul.mubr.f32.gmra.mrb[0].mxu0 %v2021
    %v2089 = vpop.f32.mrb[0].mxu0
    %v2090 = vadd.f32 %v1499, %v2089
    %v2091 = vpop.f32.mrb[0].mxu0
    %2092 = vdwg.mxu0
    %2094 = vrot.lane.b32.xlu0 %v2018, 32
    %v2095 = vpop.permute.xlu0 %2094
    %v2096 = vsel %vm167, %v2095, 0
    %2098 = vmatprep.subr.mxu0 0.0
    %2099 = vmatpush1.msra.mxu0 %v1484
    %2100 = vmatprep.subr.mxu0 0.0
    %2101 = vmatpush1.msra.mxu0 %v1485
    %2102 = vmatprep.subr.mxu0 0.0
    %2103 = vmatpush1.msra.mxu0 %v1486
    %2104 = vmatprep.subr.mxu0 0.0
    %2105 = vmatpush1.msra.mxu0 %v1487
    %2106 = vmatprep.subr.mxu0 0.0
    %2107 = vmatpush1.msra.mxu0 0.0
    %2108 = vmatprep.subr.mxu0 0.0
    %2109 = vmatpush1.msra.mxu0 0.0
    %2110 = vmatprep.subr.mxu0 0.0
    %2111 = vmatpush1.msra.mxu0 0.0
    %2112 = vmatprep.subr.mxu0 0.0
    %2113 = vmatpush1.msra.mxu0 0.0
    %2114 = vmatprep.subr.mxu0 0.0
    %2115 = vmatpush1.msra.mxu0 0.0
    %2116 = vmatprep.subr.mxu0 0.0
    %2117 = vmatpush1.msra.mxu0 0.0
    %2118 = vmatprep.subr.mxu0 0.0
    %2119 = vmatpush1.msra.mxu0 0.0
    %2120 = vmatprep.subr.mxu0 0.0
    %2121 = vmatpush1.msra.mxu0 0.0
    %2122 = vmatprep.subr.mxu0 0.0
    %2123 = vmatpush1.msra.mxu0 0.0
    %2124 = vmatprep.subr.mxu0 0.0
    %2125 = vmatpush1.msra.mxu0 0.0
    %2126 = vmatprep.subr.mxu0 0.0
    %2127 = vmatpush1.msra.mxu0 0.0
    %2128 = vmatprep.subr.mxu0 0.0
    %2129 = vmatpush1.msra.mxu0 0.0
    %2130 = vmatprep.subr.mxu0 0.0
    %2131 = vmatpush1.msra.mxu0 0.0
    %2132 = vmatprep.subr.mxu0 0.0
    %2133 = vmatpush1.msra.mxu0 0.0
    %2134 = vmatprep.subr.mxu0 0.0
    %2135 = vmatpush1.msra.mxu0 0.0
    %2136 = vmatprep.subr.mxu0 0.0
    %2137 = vmatpush1.msra.mxu0 0.0
    %2138 = vmatprep.subr.mxu0 0.0
    %2139 = vmatpush1.msra.mxu0 0.0
    %2140 = vmatprep.subr.mxu0 0.0
    %2141 = vmatpush1.msra.mxu0 0.0
    %2142 = vmatprep.subr.mxu0 0.0
    %2143 = vmatpush1.msra.mxu0 0.0
    %2144 = vmatprep.subr.mxu0 0.0
    %2145 = vmatpush1.msra.mxu0 0.0
    %2146 = vmatprep.subr.mxu0 0.0
    %2147 = vmatpush1.msra.mxu0 0.0
    %2148 = vmatprep.subr.mxu0 0.0
    %2149 = vmatpush1.msra.mxu0 0.0
    %2150 = vmatprep.subr.mxu0 0.0
    %2151 = vmatpush1.msra.mxu0 0.0
    %2152 = vmatprep.subr.mxu0 0.0
    %2153 = vmatpush1.msra.mxu0 0.0
    %2154 = vmatprep.subr.mxu0 0.0
    %2155 = vmatpush1.msra.mxu0 0.0
    %2156 = vmatprep.subr.mxu0 0.0
    %2157 = vmatpush1.msra.mxu0 0.0
    %2158 = vmatprep.subr.mxu0 0.0
    %2159 = vmatpush1.msra.mxu0 0.0
    %2160 = vmatprep.subr.mxu0 0.0
    %2161 = vmatpush1.msra.mxu0 0.0
    %2162 = vmatprep.mubr.f32.mxu0 0.0
    %2163 = vmatmul.mubr.f32.gmra.mrb[0].mxu0 %v2096
    %v2164 = vpop.f32.mrb[0].mxu0
    %v2165 = vadd.f32 0.0, %v2164
    %v2166 = vpop.f32.mrb[0].mxu0
    %2167 = vdwg.mxu0
    %v2168 = vadd.f32 %v2090, %v2165
    %v2169 = vxor.u32 %v2168, 2147483648
    %v2170 = vmul.f32 %v2169, 1.442695
    %v2171 = vpow.pop %v2170
    %v2172 = vadd.f32 %v2171, 1.0
    %v2173 = vrcp.pop %v2172
    %v2174 = vmul.f32 1.0, %v2173
    %v2175 = vtanh.pop %v2168
    %v2176 = vmul.f32 %v2174, %v2019
    %2178 = vrot.lane.b32.xlu0 %v2175, 64
    %v2179 = vpop.permute.xlu0 %2178
    %v2181 = vmul.f32 %v2174, %v2179
    %2183 = vrot.lane.b32.xlu0 %v2181, 32
    %v2184 = vpop.permute.xlu0 %2183
    %v2186 = vadd.f32 %v2176, %v2184
    %v2187 = vtanh.pop %v2186
    %2189 = vrot.lane.b32.xlu0 %v2187, 64
    %v2190 = vpop.permute.xlu0 %2189
    %v2192 = vmul.f32 %v2174, %v2190
    %v2193 = vsel %vm845, %v2192, 0.0
    %v2194 = vsel %vm845, %v2192, %v2018
    %v2195 = vsel %vm845, %v2186, %v2019
    %v2197 = vsel %vm167, %v1011, 0
    %2199 = vmatprep.subr.mxu0 0.0
    %2200 = vmatpush1.msra.mxu0 %v1489
    %2201 = vmatprep.subr.mxu0 0.0
    %2202 = vmatpush1.msra.mxu0 %v1490
    %2203 = vmatprep.subr.mxu0 0.0
    %2204 = vmatpush1.msra.mxu0 %v1491
    %2205 = vmatprep.subr.mxu0 0.0
    %2206 = vmatpush1.msra.mxu0 %v1492
    %2207 = vmatprep.subr.mxu0 0.0
    %2208 = vmatpush1.msra.mxu0 0.0
    %2209 = vmatprep.subr.mxu0 0.0
    %2210 = vmatpush1.msra.mxu0 0.0
    %2211 = vmatprep.subr.mxu0 0.0
    %2212 = vmatpush1.msra.mxu0 0.0
    %2213 = vmatprep.subr.mxu0 0.0
    %2214 = vmatpush1.msra.mxu0 0.0
    %2215 = vmatprep.subr.mxu0 0.0
    %2216 = vmatpush1.msra.mxu0 0.0
    %2217 = vmatprep.subr.mxu0 0.0
    %2218 = vmatpush1.msra.mxu0 0.0
    %2219 = vmatprep.subr.mxu0 0.0
    %2220 = vmatpush1.msra.mxu0 0.0
    %2221 = vmatprep.subr.mxu0 0.0
    %2222 = vmatpush1.msra.mxu0 0.0
    %2223 = vmatprep.subr.mxu0 0.0
    %2224 = vmatpush1.msra.mxu0 0.0
    %2225 = vmatprep.subr.mxu0 0.0
    %2226 = vmatpush1.msra.mxu0 0.0
    %2227 = vmatprep.subr.mxu0 0.0
    %2228 = vmatpush1.msra.mxu0 0.0
    %2229 = vmatprep.subr.mxu0 0.0
    %2230 = vmatpush1.msra.mxu0 0.0
    %2231 = vmatprep.subr.mxu0 0.0
    %2232 = vmatpush1.msra.mxu0 0.0
    %2233 = vmatprep.subr.mxu0 0.0
    %2234 = vmatpush1.msra.mxu0 0.0
    %2235 = vmatprep.subr.mxu0 0.0
    %2236 = vmatpush1.msra.mxu0 0.0
    %2237 = vmatprep.subr.mxu0 0.0
    %2238 = vmatpush1.msra.mxu0 0.0
    %2239 = vmatprep.subr.mxu0 0.0
    %2240 = vmatpush1.msra.mxu0 0.0
    %2241 = vmatprep.subr.mxu0 0.0
    %2242 = vmatpush1.msra.mxu0 0.0
    %2243 = vmatprep.subr.mxu0 0.0
    %2244 = vmatpush1.msra.mxu0 0.0
    %2245 = vmatprep.subr.mxu0 0.0
    %2246 = vmatpush1.msra.mxu0 0.0
    %2247 = vmatprep.subr.mxu0 0.0
    %2248 = vmatpush1.msra.mxu0 0.0
    %2249 = vmatprep.subr.mxu0 0.0
    %2250 = vmatpush1.msra.mxu0 0.0
    %2251 = vmatprep.subr.mxu0 0.0
    %2252 = vmatpush1.msra.mxu0 0.0
    %2253 = vmatprep.subr.mxu0 0.0
    %2254 = vmatpush1.msra.mxu0 0.0
    %2255 = vmatprep.subr.mxu0 0.0
    %2256 = vmatpush1.msra.mxu0 0.0
    %2257 = vmatprep.subr.mxu0 0.0
    %2258 = vmatpush1.msra.mxu0 0.0
    %2259 = vmatprep.subr.mxu0 0.0
    %2260 = vmatpush1.msra.mxu0 0.0
    %2261 = vmatprep.subr.mxu0 0.0
    %2262 = vmatpush1.msra.mxu0 0.0
    %2263 = vmatprep.mubr.f32.mxu0 0.0
    %2264 = vmatmul.mubr.f32.gmra.mrb[0].mxu0 %v2197
    %v2265 = vpop.f32.mrb[0].mxu0
    %v2266 = vadd.f32 %v1499, %v2265
    %v2267 = vpop.f32.mrb[0].mxu0
    %2268 = vdwg.mxu0
    %2270 = vrot.lane.b32.xlu0 %v2194, 32
    %v2271 = vpop.permute.xlu0 %2270
    %v2272 = vsel %vm167, %v2271, 0
    %2274 = vmatprep.subr.mxu0 0.0
    %2275 = vmatpush1.msra.mxu0 %v1484
    %2276 = vmatprep.subr.mxu0 0.0
    %2277 = vmatpush1.msra.mxu0 %v1485
    %2278 = vmatprep.subr.mxu0 0.0
    %2279 = vmatpush1.msra.mxu0 %v1486
    %2280 = vmatprep.subr.mxu0 0.0
    %2281 = vmatpush1.msra.mxu0 %v1487
    %2282 = vmatprep.subr.mxu0 0.0
    %2283 = vmatpush1.msra.mxu0 0.0
    %2284 = vmatprep.subr.mxu0 0.0
    %2285 = vmatpush1.msra.mxu0 0.0
    %2286 = vmatprep.subr.mxu0 0.0
    %2287 = vmatpush1.msra.mxu0 0.0
    %2288 = vmatprep.subr.mxu0 0.0
    %2289 = vmatpush1.msra.mxu0 0.0
    %2290 = vmatprep.subr.mxu0 0.0
    %2291 = vmatpush1.msra.mxu0 0.0
    %2292 = vmatprep.subr.mxu0 0.0
    %2293 = vmatpush1.msra.mxu0 0.0
    %2294 = vmatprep.subr.mxu0 0.0
    %2295 = vmatpush1.msra.mxu0 0.0
    %2296 = vmatprep.subr.mxu0 0.0
    %2297 = vmatpush1.msra.mxu0 0.0
    %2298 = vmatprep.subr.mxu0 0.0
    %2299 = vmatpush1.msra.mxu0 0.0
    %2300 = vmatprep.subr.mxu0 0.0
    %2301 = vmatpush1.msra.mxu0 0.0
    %2302 = vmatprep.subr.mxu0 0.0
    %2303 = vmatpush1.msra.mxu0 0.0
    %2304 = vmatprep.subr.mxu0 0.0
    %2305 = vmatpush1.msra.mxu0 0.0
    %2306 = vmatprep.subr.mxu0 0.0
    %2307 = vmatpush1.msra.mxu0 0.0
    %2308 = vmatprep.subr.mxu0 0.0
    %2309 = vmatpush1.msra.mxu0 0.0
    %2310 = vmatprep.subr.mxu0 0.0
    %2311 = vmatpush1.msra.mxu0 0.0
    %2312 = vmatprep.subr.mxu0 0.0
    %2313 = vmatpush1.msra.mxu0 0.0
    %2314 = vmatprep.subr.mxu0 0.0
    %2315 = vmatpush1.msra.mxu0 0.0
    %2316 = vmatprep.subr.mxu0 0.0
    %2317 = vmatpush1.msra.mxu0 0.0
    %2318 = vmatprep.subr.mxu0 0.0
    %2319 = vmatpush1.msra.mxu0 0.0
    %2320 = vmatprep.subr.mxu0 0.0
    %2321 = vmatpush1.msra.mxu0 0.0
    %2322 = vmatprep.subr.mxu0 0.0
    %2323 = vmatpush1.msra.mxu0 0.0
    %2324 = vmatprep.subr.mxu0 0.0
    %2325 = vmatpush1.msra.mxu0 0.0
    %2326 = vmatprep.subr.mxu0 0.0
    %2327 = vmatpush1.msra.mxu0 0.0
    %2328 = vmatprep.subr.mxu0 0.0
    %2329 = vmatpush1.msra.mxu0 0.0
    %2330 = vmatprep.subr.mxu0 0.0
    %2331 = vmatpush1.msra.mxu0 0.0
    %2332 = vmatprep.subr.mxu0 0.0
    %2333 = vmatpush1.msra.mxu0 0.0
    %2334 = vmatprep.subr.mxu0 0.0
    %2335 = vmatpush1.msra.mxu0 0.0
    %2336 = vmatprep.subr.mxu0 0.0
    %2337 = vmatpush1.msra.mxu0 0.0
    %2338 = vmatprep.mubr.f32.mxu0 0.0
    %2339 = vmatmul.mubr.f32.gmra.mrb[0].mxu0 %v2272
    %v2340 = vpop.f32.mrb[0].mxu0
    %v2341 = vadd.f32 0.0, %v2340
    %v2342 = vpop.f32.mrb[0].mxu0
    %2343 = vdwg.mxu0
    %v2344 = vadd.f32 %v2266, %v2341
    %v2345 = vxor.u32 %v2344, 2147483648
    %v2346 = vmul.f32 %v2345, 1.442695
    %v2347 = vpow.pop %v2346
    %v2348 = vadd.f32 %v2347, 1.0
    %v2349 = vrcp.pop %v2348
    %v2350 = vmul.f32 1.0, %v2349
    %v2351 = vtanh.pop %v2344
    %v2352 = vmul.f32 %v2350, %v2195
    %2354 = vrot.lane.b32.xlu0 %v2351, 64
    %v2355 = vpop.permute.xlu0 %2354
    %v2357 = vmul.f32 %v2350, %v2355
    %2359 = vrot.lane.b32.xlu0 %v2357, 32
    %v2360 = vpop.permute.xlu0 %2359
    %v2362 = vadd.f32 %v2352, %v2360
    %v2363 = vtanh.pop %v2362
    %2365 = vrot.lane.b32.xlu0 %v2363, 64
    %v2366 = vpop.permute.xlu0 %2365
    %v2368 = vmul.f32 %v2350, %v2366
    %v2369 = vsel %vm1002, %v2368, 0.0
    %v2370 = vsel %vm1002, %v2368, %v2194
    %v2371 = vsel %vm1002, %v2362, %v2195
    %v2373 = vsel %vm167, %v1168, 0
    %2375 = vmatprep.subr.mxu0 0.0
    %2376 = vmatpush1.msra.mxu0 %v1489
    %2377 = vmatprep.subr.mxu0 0.0
    %2378 = vmatpush1.msra.mxu0 %v1490
    %2379 = vmatprep.subr.mxu0 0.0
    %2380 = vmatpush1.msra.mxu0 %v1491
    %2381 = vmatprep.subr.mxu0 0.0
    %2382 = vmatpush1.msra.mxu0 %v1492
    %2383 = vmatprep.subr.mxu0 0.0
    %2384 = vmatpush1.msra.mxu0 0.0
    %2385 = vmatprep.subr.mxu0 0.0
    %2386 = vmatpush1.msra.mxu0 0.0
    %2387 = vmatprep.subr.mxu0 0.0
    %2388 = vmatpush1.msra.mxu0 0.0
    %2389 = vmatprep.subr.mxu0 0.0
    %2390 = vmatpush1.msra.mxu0 0.0
    %2391 = vmatprep.subr.mxu0 0.0
    %2392 = vmatpush1.msra.mxu0 0.0
    %2393 = vmatprep.subr.mxu0 0.0
    %2394 = vmatpush1.msra.mxu0 0.0
    %2395 = vmatprep.subr.mxu0 0.0
    %2396 = vmatpush1.msra.mxu0 0.0
    %2397 = vmatprep.subr.mxu0 0.0
    %2398 = vmatpush1.msra.mxu0 0.0
    %2399 = vmatprep.subr.mxu0 0.0
    %2400 = vmatpush1.msra.mxu0 0.0
    %2401 = vmatprep.subr.mxu0 0.0
    %2402 = vmatpush1.msra.mxu0 0.0
    %2403 = vmatprep.subr.mxu0 0.0
    %2404 = vmatpush1.msra.mxu0 0.0
    %2405 = vmatprep.subr.mxu0 0.0
    %2406 = vmatpush1.msra.mxu0 0.0
    %2407 = vmatprep.subr.mxu0 0.0
    %2408 = vmatpush1.msra.mxu0 0.0
    %2409 = vmatprep.subr.mxu0 0.0
    %2410 = vmatpush1.msra.mxu0 0.0
    %2411 = vmatprep.subr.mxu0 0.0
    %2412 = vmatpush1.msra.mxu0 0.0
    %2413 = vmatprep.subr.mxu0 0.0
    %2414 = vmatpush1.msra.mxu0 0.0
    %2415 = vmatprep.subr.mxu0 0.0
    %2416 = vmatpush1.msra.mxu0 0.0
    %2417 = vmatprep.subr.mxu0 0.0
    %2418 = vmatpush1.msra.mxu0 0.0
    %2419 = vmatprep.subr.mxu0 0.0
    %2420 = vmatpush1.msra.mxu0 0.0
    %2421 = vmatprep.subr.mxu0 0.0
    %2422 = vmatpush1.msra.mxu0 0.0
    %2423 = vmatprep.subr.mxu0 0.0
    %2424 = vmatpush1.msra.mxu0 0.0
    %2425 = vmatprep.subr.mxu0 0.0
    %2426 = vmatpush1.msra.mxu0 0.0
    %2427 = vmatprep.subr.mxu0 0.0
    %2428 = vmatpush1.msra.mxu0 0.0
    %2429 = vmatprep.subr.mxu0 0.0
    %2430 = vmatpush1.msra.mxu0 0.0
    %2431 = vmatprep.subr.mxu0 0.0
    %2432 = vmatpush1.msra.mxu0 0.0
    %2433 = vmatprep.subr.mxu0 0.0
    %2434 = vmatpush1.msra.mxu0 0.0
    %2435 = vmatprep.subr.mxu0 0.0
    %2436 = vmatpush1.msra.mxu0 0.0
    %2437 = vmatprep.subr.mxu0 0.0
    %2438 = vmatpush1.msra.mxu0 0.0
    %2439 = vmatprep.mubr.f32.mxu0 0.0
    %2440 = vmatmul.mubr.f32.gmra.mrb[0].mxu0 %v2373
    %v2441 = vpop.f32.mrb[0].mxu0
    %v2442 = vadd.f32 %v1499, %v2441
    %v2443 = vpop.f32.mrb[0].mxu0
    %2444 = vdwg.mxu0
    %2446 = vrot.lane.b32.xlu0 %v2370, 32
    %v2447 = vpop.permute.xlu0 %2446
    %v2448 = vsel %vm167, %v2447, 0
    %2450 = vmatprep.subr.mxu0 0.0
    %2451 = vmatpush1.msra.mxu0 %v1484
    %2452 = vmatprep.subr.mxu0 0.0
    %2453 = vmatpush1.msra.mxu0 %v1485
    %2454 = vmatprep.subr.mxu0 0.0
    %2455 = vmatpush1.msra.mxu0 %v1486
    %2456 = vmatprep.subr.mxu0 0.0
    %2457 = vmatpush1.msra.mxu0 %v1487
    %2458 = vmatprep.subr.mxu0 0.0
    %2459 = vmatpush1.msra.mxu0 0.0
    %2460 = vmatprep.subr.mxu0 0.0
    %2461 = vmatpush1.msra.mxu0 0.0
    %2462 = vmatprep.subr.mxu0 0.0
    %2463 = vmatpush1.msra.mxu0 0.0
    %2464 = vmatprep.subr.mxu0 0.0
    %2465 = vmatpush1.msra.mxu0 0.0
    %2466 = vmatprep.subr.mxu0 0.0
    %2467 = vmatpush1.msra.mxu0 0.0
    %2468 = vmatprep.subr.mxu0 0.0
    %2469 = vmatpush1.msra.mxu0 0.0
    %2470 = vmatprep.subr.mxu0 0.0
    %2471 = vmatpush1.msra.mxu0 0.0
    %2472 = vmatprep.subr.mxu0 0.0
    %2473 = vmatpush1.msra.mxu0 0.0
    %2474 = vmatprep.subr.mxu0 0.0
    %2475 = vmatpush1.msra.mxu0 0.0
    %2476 = vmatprep.subr.mxu0 0.0
    %2477 = vmatpush1.msra.mxu0 0.0
    %2478 = vmatprep.subr.mxu0 0.0
    %2479 = vmatpush1.msra.mxu0 0.0
    %2480 = vmatprep.subr.mxu0 0.0
    %2481 = vmatpush1.msra.mxu0 0.0
    %2482 = vmatprep.subr.mxu0 0.0
    %2483 = vmatpush1.msra.mxu0 0.0
    %2484 = vmatprep.subr.mxu0 0.0
    %2485 = vmatpush1.msra.mxu0 0.0
    %2486 = vmatprep.subr.mxu0 0.0
    %2487 = vmatpush1.msra.mxu0 0.0
    %2488 = vmatprep.subr.mxu0 0.0
    %2489 = vmatpush1.msra.mxu0 0.0
    %2490 = vmatprep.subr.mxu0 0.0
    %2491 = vmatpush1.msra.mxu0 0.0
    %2492 = vmatprep.subr.mxu0 0.0
    %2493 = vmatpush1.msra.mxu0 0.0
    %2494 = vmatprep.subr.mxu0 0.0
    %2495 = vmatpush1.msra.mxu0 0.0
    %2496 = vmatprep.subr.mxu0 0.0
    %2497 = vmatpush1.msra.mxu0 0.0
    %2498 = vmatprep.subr.mxu0 0.0
    %2499 = vmatpush1.msra.mxu0 0.0
    %2500 = vmatprep.subr.mxu0 0.0
    %2501 = vmatpush1.msra.mxu0 0.0
    %2502 = vmatprep.subr.mxu0 0.0
    %2503 = vmatpush1.msra.mxu0 0.0
    %2504 = vmatprep.subr.mxu0 0.0
    %2505 = vmatpush1.msra.mxu0 0.0
    %2506 = vmatprep.subr.mxu0 0.0
    %2507 = vmatpush1.msra.mxu0 0.0
    %2508 = vmatprep.subr.mxu0 0.0
    %2509 = vmatpush1.msra.mxu0 0.0
    %2510 = vmatprep.subr.mxu0 0.0
    %2511 = vmatpush1.msra.mxu0 0.0
    %2512 = vmatprep.subr.mxu0 0.0
    %2513 = vmatpush1.msra.mxu0 0.0
    %2514 = vmatprep.mubr.f32.mxu0 0.0
    %2515 = vmatmul.mubr.f32.gmra.mrb[0].mxu0 %v2448
    %v2516 = vpop.f32.mrb[0].mxu0
    %v2517 = vadd.f32 0.0, %v2516
    %v2518 = vpop.f32.mrb[0].mxu0
    %2519 = vdwg.mxu0
    %v2520 = vadd.f32 %v2442, %v2517
    %v2521 = vxor.u32 %v2520, 2147483648
    %v2522 = vmul.f32 %v2521, 1.442695
    %v2523 = vpow.pop %v2522
    %v2524 = vadd.f32 %v2523, 1.0
    %v2525 = vrcp.pop %v2524
    %v2526 = vmul.f32 1.0, %v2525
    %v2527 = vtanh.pop %v2520
    %v2528 = vmul.f32 %v2526, %v2371
    %2530 = vrot.lane.b32.xlu0 %v2527, 64
    %v2531 = vpop.permute.xlu0 %2530
    %v2533 = vmul.f32 %v2526, %v2531
    %2535 = vrot.lane.b32.xlu0 %v2533, 32
    %v2536 = vpop.permute.xlu0 %2535
    %v2538 = vadd.f32 %v2528, %v2536
    %v2539 = vtanh.pop %v2538
    %2541 = vrot.lane.b32.xlu0 %v2539, 64
    %v2542 = vpop.permute.xlu0 %2541
    %v2544 = vmul.f32 %v2526, %v2542
    %v2545 = vsel %vm1159, %v2544, 0.0
    %v2546 = vsel %vm1159, %v2544, %v2370
    %v2547 = vsel %vm1159, %v2538, %v2371
    %v2549 = vsel %vm167, %v1325, 0
    %2551 = vmatprep.subr.mxu0 0.0
    %2552 = vmatpush1.msra.mxu0 %v1489
    %2553 = vmatprep.subr.mxu0 0.0
    %2554 = vmatpush1.msra.mxu0 %v1490
    %2555 = vmatprep.subr.mxu0 0.0
    %2556 = vmatpush1.msra.mxu0 %v1491
    %2557 = vmatprep.subr.mxu0 0.0
    %2558 = vmatpush1.msra.mxu0 %v1492
    %2559 = vmatprep.subr.mxu0 0.0
    %2560 = vmatpush1.msra.mxu0 0.0
    %2561 = vmatprep.subr.mxu0 0.0
    %2562 = vmatpush1.msra.mxu0 0.0
    %2563 = vmatprep.subr.mxu0 0.0
    %2564 = vmatpush1.msra.mxu0 0.0
    %2565 = vmatprep.subr.mxu0 0.0
    %2566 = vmatpush1.msra.mxu0 0.0
    %2567 = vmatprep.subr.mxu0 0.0
    %2568 = vmatpush1.msra.mxu0 0.0
    %2569 = vmatprep.subr.mxu0 0.0
    %2570 = vmatpush1.msra.mxu0 0.0
    %2571 = vmatprep.subr.mxu0 0.0
    %2572 = vmatpush1.msra.mxu0 0.0
    %2573 = vmatprep.subr.mxu0 0.0
    %2574 = vmatpush1.msra.mxu0 0.0
    %2575 = vmatprep.subr.mxu0 0.0
    %2576 = vmatpush1.msra.mxu0 0.0
    %2577 = vmatprep.subr.mxu0 0.0
    %2578 = vmatpush1.msra.mxu0 0.0
    %2579 = vmatprep.subr.mxu0 0.0
    %2580 = vmatpush1.msra.mxu0 0.0
    %2581 = vmatprep.subr.mxu0 0.0
    %2582 = vmatpush1.msra.mxu0 0.0
    %2583 = vmatprep.subr.mxu0 0.0
    %2584 = vmatpush1.msra.mxu0 0.0
    %2585 = vmatprep.subr.mxu0 0.0
    %2586 = vmatpush1.msra.mxu0 0.0
    %2587 = vmatprep.subr.mxu0 0.0
    %2588 = vmatpush1.msra.mxu0 0.0
    %2589 = vmatprep.subr.mxu0 0.0
    %2590 = vmatpush1.msra.mxu0 0.0
    %2591 = vmatprep.subr.mxu0 0.0
    %2592 = vmatpush1.msra.mxu0 0.0
    %2593 = vmatprep.subr.mxu0 0.0
    %2594 = vmatpush1.msra.mxu0 0.0
    %2595 = vmatprep.subr.mxu0 0.0
    %2596 = vmatpush1.msra.mxu0 0.0
    %2597 = vmatprep.subr.mxu0 0.0
    %2598 = vmatpush1.msra.mxu0 0.0
    %2599 = vmatprep.subr.mxu0 0.0
    %2600 = vmatpush1.msra.mxu0 0.0
    %2601 = vmatprep.subr.mxu0 0.0
    %2602 = vmatpush1.msra.mxu0 0.0
    %2603 = vmatprep.subr.mxu0 0.0
    %2604 = vmatpush1.msra.mxu0 0.0
    %2605 = vmatprep.subr.mxu0 0.0
    %2606 = vmatpush1.msra.mxu0 0.0
    %2607 = vmatprep.subr.mxu0 0.0
    %2608 = vmatpush1.msra.mxu0 0.0
    %2609 = vmatprep.subr.mxu0 0.0
    %2610 = vmatpush1.msra.mxu0 0.0
    %2611 = vmatprep.subr.mxu0 0.0
    %2612 = vmatpush1.msra.mxu0 0.0
    %2613 = vmatprep.subr.mxu0 0.0
    %2614 = vmatpush1.msra.mxu0 0.0
    %2615 = vmatprep.mubr.f32.mxu0 0.0
    %2616 = vmatmul.mubr.f32.gmra.mrb[0].mxu0 %v2549
    %v2617 = vpop.f32.mrb[0].mxu0
    %v2618 = vadd.f32 %v1499, %v2617
    %v2619 = vpop.f32.mrb[0].mxu0
    %2620 = vdwg.mxu0
    %2622 = vrot.lane.b32.xlu0 %v2546, 32
    %v2623 = vpop.permute.xlu0 %2622
    %v2624 = vsel %vm167, %v2623, 0
    %2626 = vmatprep.subr.mxu0 0.0
    %2627 = vmatpush1.msra.mxu0 %v1484
    %2628 = vmatprep.subr.mxu0 0.0
    %2629 = vmatpush1.msra.mxu0 %v1485
    %2630 = vmatprep.subr.mxu0 0.0
    %2631 = vmatpush1.msra.mxu0 %v1486
    %2632 = vmatprep.subr.mxu0 0.0
    %2633 = vmatpush1.msra.mxu0 %v1487
    %2634 = vmatprep.subr.mxu0 0.0
    %2635 = vmatpush1.msra.mxu0 0.0
    %2636 = vmatprep.subr.mxu0 0.0
    %2637 = vmatpush1.msra.mxu0 0.0
    %2638 = vmatprep.subr.mxu0 0.0
    %2639 = vmatpush1.msra.mxu0 0.0
    %2640 = vmatprep.subr.mxu0 0.0
    %2641 = vmatpush1.msra.mxu0 0.0
    %2642 = vmatprep.subr.mxu0 0.0
    %2643 = vmatpush1.msra.mxu0 0.0
    %2644 = vmatprep.subr.mxu0 0.0
    %2645 = vmatpush1.msra.mxu0 0.0
    %2646 = vmatprep.subr.mxu0 0.0
    %2647 = vmatpush1.msra.mxu0 0.0
    %2648 = vmatprep.subr.mxu0 0.0
    %2649 = vmatpush1.msra.mxu0 0.0
    %2650 = vmatprep.subr.mxu0 0.0
    %2651 = vmatpush1.msra.mxu0 0.0
    %2652 = vmatprep.subr.mxu0 0.0
    %2653 = vmatpush1.msra.mxu0 0.0
    %2654 = vmatprep.subr.mxu0 0.0
    %2655 = vmatpush1.msra.mxu0 0.0
    %2656 = vmatprep.subr.mxu0 0.0
    %2657 = vmatpush1.msra.mxu0 0.0
    %2658 = vmatprep.subr.mxu0 0.0
    %2659 = vmatpush1.msra.mxu0 0.0
    %2660 = vmatprep.subr.mxu0 0.0
    %2661 = vmatpush1.msra.mxu0 0.0
    %2662 = vmatprep.subr.mxu0 0.0
    %2663 = vmatpush1.msra.mxu0 0.0
    %2664 = vmatprep.subr.mxu0 0.0
    %2665 = vmatpush1.msra.mxu0 0.0
    %2666 = vmatprep.subr.mxu0 0.0
    %2667 = vmatpush1.msra.mxu0 0.0
    %2668 = vmatprep.subr.mxu0 0.0
    %2669 = vmatpush1.msra.mxu0 0.0
    %2670 = vmatprep.subr.mxu0 0.0
    %2671 = vmatpush1.msra.mxu0 0.0
    %2672 = vmatprep.subr.mxu0 0.0
    %2673 = vmatpush1.msra.mxu0 0.0
    %2674 = vmatprep.subr.mxu0 0.0
    %2675 = vmatpush1.msra.mxu0 0.0
    %2676 = vmatprep.subr.mxu0 0.0
    %2677 = vmatpush1.msra.mxu0 0.0
    %2678 = vmatprep.subr.mxu0 0.0
    %2679 = vmatpush1.msra.mxu0 0.0
    %2680 = vmatprep.subr.mxu0 0.0
    %2681 = vmatpush1.msra.mxu0 0.0
    %2682 = vmatprep.subr.mxu0 0.0
    %2683 = vmatpush1.msra.mxu0 0.0
    %2684 = vmatprep.subr.mxu0 0.0
    %2685 = vmatpush1.msra.mxu0 0.0
    %2686 = vmatprep.subr.mxu0 0.0
    %2687 = vmatpush1.msra.mxu0 0.0
    %2688 = vmatprep.subr.mxu0 0.0
    %2689 = vmatpush1.msra.mxu0 0.0
    %2690 = vmatprep.mubr.f32.mxu0 0.0
    %2691 = vmatmul.mubr.f32.gmra.mrb[0].mxu0 %v2624
    %v2692 = vpop.f32.mrb[0].mxu0
    %v2693 = vadd.f32 0.0, %v2692
    %v2694 = vpop.f32.mrb[0].mxu0
    %2695 = vdwg.mxu0
    %v2696 = vadd.f32 %v2618, %v2693
    %v2697 = vxor.u32 %v2696, 2147483648
    %v2698 = vmul.f32 %v2697, 1.442695
    %v2699 = vpow.pop %v2698
    %v2700 = vadd.f32 %v2699, 1.0
    %v2701 = vrcp.pop %v2700
    %v2702 = vmul.f32 1.0, %v2701
    %v2703 = vtanh.pop %v2696
    %v2704 = vmul.f32 %v2702, %v2547
    %2706 = vrot.lane.b32.xlu0 %v2703, 64
    %v2707 = vpop.permute.xlu0 %2706
    %v2709 = vmul.f32 %v2702, %v2707
    %2711 = vrot.lane.b32.xlu0 %v2709, 32
    %v2712 = vpop.permute.xlu0 %2711
    %v2714 = vadd.f32 %v2704, %v2712
    %v2715 = vtanh.pop %v2714
    %2717 = vrot.lane.b32.xlu0 %v2715, 64
    %v2718 = vpop.permute.xlu0 %2717
    %v2720 = vmul.f32 %v2702, %v2718
    %v2721 = vsel %vm1316, %v2720, 0.0
    %v2722 = vsel %vm1316, %v2720, %v2546
    %v2723 = vsel %vm1316, %v2714, %v2547
    %v2725 = vsel %vm167, %v1482, 0
    %2727 = vmatprep.subr.mxu0 0.0
    %2728 = vmatpush1.msra.mxu0 %v1489
    %2729 = vmatprep.subr.mxu0 0.0
    %2730 = vmatpush1.msra.mxu0 %v1490
    %2731 = vmatprep.subr.mxu0 0.0
    %2732 = vmatpush1.msra.mxu0 %v1491
    %2733 = vmatprep.subr.mxu0 0.0
    %2734 = vmatpush1.msra.mxu0 %v1492
    %2735 = vmatprep.subr.mxu0 0.0
    %2736 = vmatpush1.msra.mxu0 0.0
    %2737 = vmatprep.subr.mxu0 0.0
    %2738 = vmatpush1.msra.mxu0 0.0
    %2739 = vmatprep.subr.mxu0 0.0
    %2740 = vmatpush1.msra.mxu0 0.0
    %2741 = vmatprep.subr.mxu0 0.0
    %2742 = vmatpush1.msra.mxu0 0.0
    %2743 = vmatprep.subr.mxu0 0.0
    %2744 = vmatpush1.msra.mxu0 0.0
    %2745 = vmatprep.subr.mxu0 0.0
    %2746 = vmatpush1.msra.mxu0 0.0
    %2747 = vmatprep.subr.mxu0 0.0
    %2748 = vmatpush1.msra.mxu0 0.0
    %2749 = vmatprep.subr.mxu0 0.0
    %2750 = vmatpush1.msra.mxu0 0.0
    %2751 = vmatprep.subr.mxu0 0.0
    %2752 = vmatpush1.msra.mxu0 0.0
    %2753 = vmatprep.subr.mxu0 0.0
    %2754 = vmatpush1.msra.mxu0 0.0
    %2755 = vmatprep.subr.mxu0 0.0
    %2756 = vmatpush1.msra.mxu0 0.0
    %2757 = vmatprep.subr.mxu0 0.0
    %2758 = vmatpush1.msra.mxu0 0.0
    %2759 = vmatprep.subr.mxu0 0.0
    %2760 = vmatpush1.msra.mxu0 0.0
    %2761 = vmatprep.subr.mxu0 0.0
    %2762 = vmatpush1.msra.mxu0 0.0
    %2763 = vmatprep.subr.mxu0 0.0
    %2764 = vmatpush1.msra.mxu0 0.0
    %2765 = vmatprep.subr.mxu0 0.0
    %2766 = vmatpush1.msra.mxu0 0.0
    %2767 = vmatprep.subr.mxu0 0.0
    %2768 = vmatpush1.msra.mxu0 0.0
    %2769 = vmatprep.subr.mxu0 0.0
    %2770 = vmatpush1.msra.mxu0 0.0
    %2771 = vmatprep.subr.mxu0 0.0
    %2772 = vmatpush1.msra.mxu0 0.0
    %2773 = vmatprep.subr.mxu0 0.0
    %2774 = vmatpush1.msra.mxu0 0.0
    %2775 = vmatprep.subr.mxu0 0.0
    %2776 = vmatpush1.msra.mxu0 0.0
    %2777 = vmatprep.subr.mxu0 0.0
    %2778 = vmatpush1.msra.mxu0 0.0
    %2779 = vmatprep.subr.mxu0 0.0
    %2780 = vmatpush1.msra.mxu0 0.0
    %2781 = vmatprep.subr.mxu0 0.0
    %2782 = vmatpush1.msra.mxu0 0.0
    %2783 = vmatprep.subr.mxu0 0.0
    %2784 = vmatpush1.msra.mxu0 0.0
    %2785 = vmatprep.subr.mxu0 0.0
    %2786 = vmatpush1.msra.mxu0 0.0
    %2787 = vmatprep.subr.mxu0 0.0
    %2788 = vmatpush1.msra.mxu0 0.0
    %2789 = vmatprep.subr.mxu0 0.0
    %2790 = vmatpush1.msra.mxu0 0.0
    %2791 = vmatprep.mubr.f32.mxu0 0.0
    %2792 = vmatmul.mubr.f32.gmra.mrb[0].mxu0 %v2725
    %v2793 = vpop.f32.mrb[0].mxu0
    %v2794 = vadd.f32 %v1499, %v2793
    %v2795 = vpop.f32.mrb[0].mxu0
    %2796 = vdwg.mxu0
    %2798 = vrot.lane.b32.xlu0 %v2722, 32
    %v2799 = vpop.permute.xlu0 %2798
    %v2800 = vsel %vm167, %v2799, 0
    %2802 = vmatprep.subr.mxu0 0.0
    %2803 = vmatpush1.msra.mxu0 %v1484
    %2804 = vmatprep.subr.mxu0 0.0
    %2805 = vmatpush1.msra.mxu0 %v1485
    %2806 = vmatprep.subr.mxu0 0.0
    %2807 = vmatpush1.msra.mxu0 %v1486
    %2808 = vmatprep.subr.mxu0 0.0
    %2809 = vmatpush1.msra.mxu0 %v1487
    %2810 = vmatprep.subr.mxu0 0.0
    %2811 = vmatpush1.msra.mxu0 0.0
    %2812 = vmatprep.subr.mxu0 0.0
    %2813 = vmatpush1.msra.mxu0 0.0
    %2814 = vmatprep.subr.mxu0 0.0
    %2815 = vmatpush1.msra.mxu0 0.0
    %2816 = vmatprep.subr.mxu0 0.0
    %2817 = vmatpush1.msra.mxu0 0.0
    %2818 = vmatprep.subr.mxu0 0.0
    %2819 = vmatpush1.msra.mxu0 0.0
    %2820 = vmatprep.subr.mxu0 0.0
    %2821 = vmatpush1.msra.mxu0 0.0
    %2822 = vmatprep.subr.mxu0 0.0
    %2823 = vmatpush1.msra.mxu0 0.0
    %2824 = vmatprep.subr.mxu0 0.0
    %2825 = vmatpush1.msra.mxu0 0.0
    %2826 = vmatprep.subr.mxu0 0.0
    %2827 = vmatpush1.msra.mxu0 0.0
    %2828 = vmatprep.subr.mxu0 0.0
    %2829 = vmatpush1.msra.mxu0 0.0
    %2830 = vmatprep.subr.mxu0 0.0
    %2831 = vmatpush1.msra.mxu0 0.0
    %2832 = vmatprep.subr.mxu0 0.0
    %2833 = vmatpush1.msra.mxu0 0.0
    %2834 = vmatprep.subr.mxu0 0.0
    %2835 = vmatpush1.msra.mxu0 0.0
    %2836 = vmatprep.subr.mxu0 0.0
    %2837 = vmatpush1.msra.mxu0 0.0
    %2838 = vmatprep.subr.mxu0 0.0
    %2839 = vmatpush1.msra.mxu0 0.0
    %2840 = vmatprep.subr.mxu0 0.0
    %2841 = vmatpush1.msra.mxu0 0.0
    %2842 = vmatprep.subr.mxu0 0.0
    %2843 = vmatpush1.msra.mxu0 0.0
    %2844 = vmatprep.subr.mxu0 0.0
    %2845 = vmatpush1.msra.mxu0 0.0
    %2846 = vmatprep.subr.mxu0 0.0
    %2847 = vmatpush1.msra.mxu0 0.0
    %2848 = vmatprep.subr.mxu0 0.0
    %2849 = vmatpush1.msra.mxu0 0.0
    %2850 = vmatprep.subr.mxu0 0.0
    %2851 = vmatpush1.msra.mxu0 0.0
    %2852 = vmatprep.subr.mxu0 0.0
    %2853 = vmatpush1.msra.mxu0 0.0
    %2854 = vmatprep.subr.mxu0 0.0
    %2855 = vmatpush1.msra.mxu0 0.0
    %2856 = vmatprep.subr.mxu0 0.0
    %2857 = vmatpush1.msra.mxu0 0.0
    %2858 = vmatprep.subr.mxu0 0.0
    %2859 = vmatpush1.msra.mxu0 0.0
    %2860 = vmatprep.subr.mxu0 0.0
    %2861 = vmatpush1.msra.mxu0 0.0
    %2862 = vmatprep.subr.mxu0 0.0
    %2863 = vmatpush1.msra.mxu0 0.0
    %2864 = vmatprep.subr.mxu0 0.0
    %2865 = vmatpush1.msra.mxu0 0.0
    %2866 = vmatprep.mubr.f32.mxu0 0.0
    %2867 = vmatmul.mubr.f32.gmra.mrb[0].mxu0 %v2800
    %v2868 = vpop.f32.mrb[0].mxu0
    %v2869 = vadd.f32 0.0, %v2868
    %v2870 = vpop.f32.mrb[0].mxu0
    %2871 = vdwg.mxu0
    %v2872 = vadd.f32 %v2794, %v2869
    %v2873 = vxor.u32 %v2872, 2147483648
    %v2874 = vmul.f32 %v2873, 1.442695
    %v2875 = vpow.pop %v2874
    %v2876 = vadd.f32 %v2875, 1.0
    %v2877 = vrcp.pop %v2876
    %v2878 = vmul.f32 1.0, %v2877
    %v2879 = vtanh.pop %v2872
    %v2880 = vmul.f32 %v2878, %v2723
    %2882 = vrot.lane.b32.xlu0 %v2879, 64
    %v2883 = vpop.permute.xlu0 %2882
    %v2885 = vmul.f32 %v2878, %v2883
    %2887 = vrot.lane.b32.xlu0 %v2885, 32
    %v2888 = vpop.permute.xlu0 %2887
    %v2890 = vadd.f32 %v2880, %v2888
    %v2891 = vtanh.pop %v2890
    %2893 = vrot.lane.b32.xlu0 %v2891, 64
    %v2894 = vpop.permute.xlu0 %2893
    %v2896 = vmul.f32 %v2878, %v2894
    %v2897 = vsel %vm1473, %v2896, 0.0
    %s2898 = scalar_lea.vmem [#allocation3], 64
    %v2899 = vld [vmem:[%s2898] sm:$0xff]
    %v2900 = vld [vmem:[%s2898 + $0x8] sm:$0xff]
    %v2901 = vld [vmem:[%s2898 + $0x10] sm:$0xff]
    %v2902 = vld [vmem:[%s2898 + $0x18] sm:$0xff]
    %s2903 = scalar_lea.vmem %s3, 64
    %v2904 = vld [vmem:[%s2903] sm:$0xff]
    %v2905 = vld [vmem:[%s2903 + $0x8] sm:$0xff]
    %v2906 = vld [vmem:[%s2903 + $0x10] sm:$0xff]
    %v2907 = vld [vmem:[%s2903 + $0x18] sm:$0xff]
    %s2908 = scalar_lea.vmem %s5, 2
    %v2909 = vld [vmem:[%s2908] sm:$0x1]
    %v2911 = vlaneseq
    %v2912 = vshrl.u32 %v2911, 7
    %v2913 = vsub.s32 0, %v2912
    %v2914 = vrot.slane %v2909, %v2913
    %2916 = vmatprep.subr.mxu0 0.0
    %2917 = vmatpush1.msra.mxu0 %v2904
    %2918 = vmatprep.subr.mxu0 0.0
    %2919 = vmatpush1.msra.mxu0 %v2905
    %2920 = vmatprep.subr.mxu0 0.0
    %2921 = vmatpush1.msra.mxu0 %v2906
    %2922 = vmatprep.subr.mxu0 0.0
    %2923 = vmatpush1.msra.mxu0 %v2907
    %2924 = vmatprep.subr.mxu0 0.0
    %2925 = vmatpush1.msra.mxu0 0.0
    %2926 = vmatprep.subr.mxu0 0.0
    %2927 = vmatpush1.msra.mxu0 0.0
    %2928 = vmatprep.subr.mxu0 0.0
    %2929 = vmatpush1.msra.mxu0 0.0
    %2930 = vmatprep.subr.mxu0 0.0
    %2931 = vmatpush1.msra.mxu0 0.0
    %2932 = vmatprep.subr.mxu0 0.0
    %2933 = vmatpush1.msra.mxu0 0.0
    %2934 = vmatprep.subr.mxu0 0.0
    %2935 = vmatpush1.msra.mxu0 0.0
    %2936 = vmatprep.subr.mxu0 0.0
    %2937 = vmatpush1.msra.mxu0 0.0
    %2938 = vmatprep.subr.mxu0 0.0
    %2939 = vmatpush1.msra.mxu0 0.0
    %2940 = vmatprep.subr.mxu0 0.0
    %2941 = vmatpush1.msra.mxu0 0.0
    %2942 = vmatprep.subr.mxu0 0.0
    %2943 = vmatpush1.msra.mxu0 0.0
    %2944 = vmatprep.subr.mxu0 0.0
    %2945 = vmatpush1.msra.mxu0 0.0
    %2946 = vmatprep.subr.mxu0 0.0
    %2947 = vmatpush1.msra.mxu0 0.0
    %2948 = vmatprep.subr.mxu0 0.0
    %2949 = vmatpush1.msra.mxu0 0.0
    %2950 = vmatprep.subr.mxu0 0.0
    %2951 = vmatpush1.msra.mxu0 0.0
    %2952 = vmatprep.subr.mxu0 0.0
    %2953 = vmatpush1.msra.mxu0 0.0
    %2954 = vmatprep.subr.mxu0 0.0
    %2955 = vmatpush1.msra.mxu0 0.0
    %2956 = vmatprep.subr.mxu0 0.0
    %2957 = vmatpush1.msra.mxu0 0.0
    %2958 = vmatprep.subr.mxu0 0.0
    %2959 = vmatpush1.msra.mxu0 0.0
    %2960 = vmatprep.subr.mxu0 0.0
    %2961 = vmatpush1.msra.mxu0 0.0
    %2962 = vmatprep.subr.mxu0 0.0
    %2963 = vmatpush1.msra.mxu0 0.0
    %2964 = vmatprep.subr.mxu0 0.0
    %2965 = vmatpush1.msra.mxu0 0.0
    %2966 = vmatprep.subr.mxu0 0.0
    %2967 = vmatpush1.msra.mxu0 0.0
    %2968 = vmatprep.subr.mxu0 0.0
    %2969 = vmatpush1.msra.mxu0 0.0
    %2970 = vmatprep.subr.mxu0 0.0
    %2971 = vmatpush1.msra.mxu0 0.0
    %2972 = vmatprep.subr.mxu0 0.0
    %2973 = vmatpush1.msra.mxu0 0.0
    %2974 = vmatprep.subr.mxu0 0.0
    %2975 = vmatpush1.msra.mxu0 0.0
    %2976 = vmatprep.subr.mxu0 0.0
    %2977 = vmatpush1.msra.mxu0 0.0
    %2978 = vmatprep.subr.mxu0 0.0
    %2979 = vmatpush1.msra.mxu0 0.0
    %2980 = vmatprep.mubr.f32.mxu0 0.0
    %2981 = vmatmul.mubr.f32.gmra.mrb[0].mxu0 %v1744
    %v2982 = vpop.f32.mrb[0].mxu0
    %v2983 = vadd.f32 %v2914, %v2982
    %v2984 = vpop.f32.mrb[0].mxu0
    %2985 = vdwg.mxu0
    %2986 = vmatprep.subr.mxu0 0.0
    %2987 = vmatpush1.msra.mxu0 %v2899
    %2988 = vmatprep.subr.mxu0 0.0
    %2989 = vmatpush1.msra.mxu0 %v2900
    %2990 = vmatprep.subr.mxu0 0.0
    %2991 = vmatpush1.msra.mxu0 %v2901
    %2992 = vmatprep.subr.mxu0 0.0
    %2993 = vmatpush1.msra.mxu0 %v2902
    %2994 = vmatprep.subr.mxu0 0.0
    %2995 = vmatpush1.msra.mxu0 0.0
    %2996 = vmatprep.subr.mxu0 0.0
    %2997 = vmatpush1.msra.mxu0 0.0
    %2998 = vmatprep.subr.mxu0 0.0
    %2999 = vmatpush1.msra.mxu0 0.0
    %3000 = vmatprep.subr.mxu0 0.0
    %3001 = vmatpush1.msra.mxu0 0.0
    %3002 = vmatprep.subr.mxu0 0.0
    %3003 = vmatpush1.msra.mxu0 0.0
    %3004 = vmatprep.subr.mxu0 0.0
    %3005 = vmatpush1.msra.mxu0 0.0
    %3006 = vmatprep.subr.mxu0 0.0
    %3007 = vmatpush1.msra.mxu0 0.0
    %3008 = vmatprep.subr.mxu0 0.0
    %3009 = vmatpush1.msra.mxu0 0.0
    %3010 = vmatprep.subr.mxu0 0.0
    %3011 = vmatpush1.msra.mxu0 0.0
    %3012 = vmatprep.subr.mxu0 0.0
    %3013 = vmatpush1.msra.mxu0 0.0
    %3014 = vmatprep.subr.mxu0 0.0
    %3015 = vmatpush1.msra.mxu0 0.0
    %3016 = vmatprep.subr.mxu0 0.0
    %3017 = vmatpush1.msra.mxu0 0.0
    %3018 = vmatprep.subr.mxu0 0.0
    %3019 = vmatpush1.msra.mxu0 0.0
    %3020 = vmatprep.subr.mxu0 0.0
    %3021 = vmatpush1.msra.mxu0 0.0
    %3022 = vmatprep.subr.mxu0 0.0
    %3023 = vmatpush1.msra.mxu0 0.0
    %3024 = vmatprep.subr.mxu0 0.0
    %3025 = vmatpush1.msra.mxu0 0.0
    %3026 = vmatprep.subr.mxu0 0.0
    %3027 = vmatpush1.msra.mxu0 0.0
    %3028 = vmatprep.subr.mxu0 0.0
    %3029 = vmatpush1.msra.mxu0 0.0
    %3030 = vmatprep.subr.mxu0 0.0
    %3031 = vmatpush1.msra.mxu0 0.0
    %3032 = vmatprep.subr.mxu0 0.0
    %3033 = vmatpush1.msra.mxu0 0.0
    %3034 = vmatprep.subr.mxu0 0.0
    %3035 = vmatpush1.msra.mxu0 0.0
    %3036 = vmatprep.subr.mxu0 0.0
    %3037 = vmatpush1.msra.mxu0 0.0
    %3038 = vmatprep.subr.mxu0 0.0
    %3039 = vmatpush1.msra.mxu0 0.0
    %3040 = vmatprep.subr.mxu0 0.0
    %3041 = vmatpush1.msra.mxu0 0.0
    %3042 = vmatprep.subr.mxu0 0.0
    %3043 = vmatpush1.msra.mxu0 0.0
    %3044 = vmatprep.subr.mxu0 0.0
    %3045 = vmatpush1.msra.mxu0 0.0
    %3046 = vmatprep.subr.mxu0 0.0
    %3047 = vmatpush1.msra.mxu0 0.0
    %3048 = vmatprep.subr.mxu0 0.0
    %3049 = vmatpush1.msra.mxu0 0.0
    %3050 = vmatprep.mubr.f32.mxu0 0.0
    %3051 = vmatmul.mubr.f32.gmra.mrb[0].mxu0 %v254
    %v3052 = vpop.f32.mrb[0].mxu0
    %v3053 = vadd.f32 0.0, %v3052
    %v3054 = vpop.f32.mrb[0].mxu0
    %3055 = vdwg.mxu0
    %v3056 = vadd.f32 %v2983, %v3053
    %v3057 = vxor.u32 %v3056, 2147483648
    %v3058 = vmul.f32 %v3057, 1.442695
    %v3059 = vpow.pop %v3058
    %v3060 = vadd.f32 %v3059, 1.0
    %v3061 = vrcp.pop %v3060
    %v3062 = vmul.f32 1.0, %v3061
    %v3063 = vtanh.pop %v3056
    %v3064 = vmul.f32 %v3062, 0.0
    %3066 = vrot.lane.b32.xlu0 %v3063, 64
    %v3067 = vpop.permute.xlu0 %3066
    %v3069 = vmul.f32 %v3062, %v3067
    %3071 = vrot.lane.b32.xlu0 %v3069, 32
    %v3072 = vpop.permute.xlu0 %3071
    %v3074 = vadd.f32 %v3064, %v3072
    %v3075 = vtanh.pop %v3074
    %3077 = vrot.lane.b32.xlu0 %v3075, 64
    %v3078 = vpop.permute.xlu0 %3077
    %v3080 = vmul.f32 %v3062, %v3078
    %v3081 = vsel %vm380, %v3080, 0.0
    %v3082 = vsel %vm380, %v3074, 0.0
    %3084 = vrot.lane.b32.xlu0 %v1841, 32
    %v3085 = vpop.permute.xlu0 %3084
    %v3086 = vsel %vm167, %v3085, 0
    %3088 = vmatprep.subr.mxu0 0.0
    %3089 = vmatpush1.msra.mxu0 %v2904
    %3090 = vmatprep.subr.mxu0 0.0
    %3091 = vmatpush1.msra.mxu0 %v2905
    %3092 = vmatprep.subr.mxu0 0.0
    %3093 = vmatpush1.msra.mxu0 %v2906
    %3094 = vmatprep.subr.mxu0 0.0
    %3095 = vmatpush1.msra.mxu0 %v2907
    %3096 = vmatprep.subr.mxu0 0.0
    %3097 = vmatpush1.msra.mxu0 0.0
    %3098 = vmatprep.subr.mxu0 0.0
    %3099 = vmatpush1.msra.mxu0 0.0
    %3100 = vmatprep.subr.mxu0 0.0
    %3101 = vmatpush1.msra.mxu0 0.0
    %3102 = vmatprep.subr.mxu0 0.0
    %3103 = vmatpush1.msra.mxu0 0.0
    %3104 = vmatprep.subr.mxu0 0.0
    %3105 = vmatpush1.msra.mxu0 0.0
    %3106 = vmatprep.subr.mxu0 0.0
    %3107 = vmatpush1.msra.mxu0 0.0
    %3108 = vmatprep.subr.mxu0 0.0
    %3109 = vmatpush1.msra.mxu0 0.0
    %3110 = vmatprep.subr.mxu0 0.0
    %3111 = vmatpush1.msra.mxu0 0.0
    %3112 = vmatprep.subr.mxu0 0.0
    %3113 = vmatpush1.msra.mxu0 0.0
    %3114 = vmatprep.subr.mxu0 0.0
    %3115 = vmatpush1.msra.mxu0 0.0
    %3116 = vmatprep.subr.mxu0 0.0
    %3117 = vmatpush1.msra.mxu0 0.0
    %3118 = vmatprep.subr.mxu0 0.0
    %3119 = vmatpush1.msra.mxu0 0.0
    %3120 = vmatprep.subr.mxu0 0.0
    %3121 = vmatpush1.msra.mxu0 0.0
    %3122 = vmatprep.subr.mxu0 0.0
    %3123 = vmatpush1.msra.mxu0 0.0
    %3124 = vmatprep.subr.mxu0 0.0
    %3125 = vmatpush1.msra.mxu0 0.0
    %3126 = vmatprep.subr.mxu0 0.0
    %3127 = vmatpush1.msra.mxu0 0.0
    %3128 = vmatprep.subr.mxu0 0.0
    %3129 = vmatpush1.msra.mxu0 0.0
    %3130 = vmatprep.subr.mxu0 0.0
    %3131 = vmatpush1.msra.mxu0 0.0
    %3132 = vmatprep.subr.mxu0 0.0
    %3133 = vmatpush1.msra.mxu0 0.0
    %3134 = vmatprep.subr.mxu0 0.0
    %3135 = vmatpush1.msra.mxu0 0.0
    %3136 = vmatprep.subr.mxu0 0.0
    %3137 = vmatpush1.msra.mxu0 0.0
    %3138 = vmatprep.subr.mxu0 0.0
    %3139 = vmatpush1.msra.mxu0 0.0
    %3140 = vmatprep.subr.mxu0 0.0
    %3141 = vmatpush1.msra.mxu0 0.0
    %3142 = vmatprep.subr.mxu0 0.0
    %3143 = vmatpush1.msra.mxu0 0.0
    %3144 = vmatprep.subr.mxu0 0.0
    %3145 = vmatpush1.msra.mxu0 0.0
    %3146 = vmatprep.subr.mxu0 0.0
    %3147 = vmatpush1.msra.mxu0 0.0
    %3148 = vmatprep.subr.mxu0 0.0
    %3149 = vmatpush1.msra.mxu0 0.0
    %3150 = vmatprep.subr.mxu0 0.0
    %3151 = vmatpush1.msra.mxu0 0.0
    %3152 = vmatprep.mubr.f32.mxu0 0.0
    %3153 = vmatmul.mubr.f32.gmra.mrb[0].mxu0 %v3086
    %v3154 = vpop.f32.mrb[0].mxu0
    %v3155 = vadd.f32 %v2914, %v3154
    %v3156 = vpop.f32.mrb[0].mxu0
    %3157 = vdwg.mxu0
    %3159 = vrot.lane.b32.xlu0 %v3081, 32
    %v3160 = vpop.permute.xlu0 %3159
    %v3161 = vsel %vm167, %v3160, 0
    %3163 = vmatprep.subr.mxu0 0.0
    %3164 = vmatpush1.msra.mxu0 %v2899
    %3165 = vmatprep.subr.mxu0 0.0
    %3166 = vmatpush1.msra.mxu0 %v2900
    %3167 = vmatprep.subr.mxu0 0.0
    %3168 = vmatpush1.msra.mxu0 %v2901
    %3169 = vmatprep.subr.mxu0 0.0
    %3170 = vmatpush1.msra.mxu0 %v2902
    %3171 = vmatprep.subr.mxu0 0.0
    %3172 = vmatpush1.msra.mxu0 0.0
    %3173 = vmatprep.subr.mxu0 0.0
    %3174 = vmatpush1.msra.mxu0 0.0
    %3175 = vmatprep.subr.mxu0 0.0
    %3176 = vmatpush1.msra.mxu0 0.0
    %3177 = vmatprep.subr.mxu0 0.0
    %3178 = vmatpush1.msra.mxu0 0.0
    %3179 = vmatprep.subr.mxu0 0.0
    %3180 = vmatpush1.msra.mxu0 0.0
    %3181 = vmatprep.subr.mxu0 0.0
    %3182 = vmatpush1.msra.mxu0 0.0
    %3183 = vmatprep.subr.mxu0 0.0
    %3184 = vmatpush1.msra.mxu0 0.0
    %3185 = vmatprep.subr.mxu0 0.0
    %3186 = vmatpush1.msra.mxu0 0.0
    %3187 = vmatprep.subr.mxu0 0.0
    %3188 = vmatpush1.msra.mxu0 0.0
    %3189 = vmatprep.subr.mxu0 0.0
    %3190 = vmatpush1.msra.mxu0 0.0
    %3191 = vmatprep.subr.mxu0 0.0
    %3192 = vmatpush1.msra.mxu0 0.0
    %3193 = vmatprep.subr.mxu0 0.0
    %3194 = vmatpush1.msra.mxu0 0.0
    %3195 = vmatprep.subr.mxu0 0.0
    %3196 = vmatpush1.msra.mxu0 0.0
    %3197 = vmatprep.subr.mxu0 0.0
    %3198 = vmatpush1.msra.mxu0 0.0
    %3199 = vmatprep.subr.mxu0 0.0
    %3200 = vmatpush1.msra.mxu0 0.0
    %3201 = vmatprep.subr.mxu0 0.0
    %3202 = vmatpush1.msra.mxu0 0.0
    %3203 = vmatprep.subr.mxu0 0.0
    %3204 = vmatpush1.msra.mxu0 0.0
    %3205 = vmatprep.subr.mxu0 0.0
    %3206 = vmatpush1.msra.mxu0 0.0
    %3207 = vmatprep.subr.mxu0 0.0
    %3208 = vmatpush1.msra.mxu0 0.0
    %3209 = vmatprep.subr.mxu0 0.0
    %3210 = vmatpush1.msra.mxu0 0.0
    %3211 = vmatprep.subr.mxu0 0.0
    %3212 = vmatpush1.msra.mxu0 0.0
    %3213 = vmatprep.subr.mxu0 0.0
    %3214 = vmatpush1.msra.mxu0 0.0
    %3215 = vmatprep.subr.mxu0 0.0
    %3216 = vmatpush1.msra.mxu0 0.0
    %3217 = vmatprep.subr.mxu0 0.0
    %3218 = vmatpush1.msra.mxu0 0.0
    %3219 = vmatprep.subr.mxu0 0.0
    %3220 = vmatpush1.msra.mxu0 0.0
    %3221 = vmatprep.subr.mxu0 0.0
    %3222 = vmatpush1.msra.mxu0 0.0
    %3223 = vmatprep.subr.mxu0 0.0
    %3224 = vmatpush1.msra.mxu0 0.0
    %3225 = vmatprep.subr.mxu0 0.0
    %3226 = vmatpush1.msra.mxu0 0.0
    %3227 = vmatprep.mubr.f32.mxu0 0.0
    %3228 = vmatmul.mubr.f32.gmra.mrb[0].mxu0 %v3161
    %v3229 = vpop.f32.mrb[0].mxu0
    %v3230 = vadd.f32 0.0, %v3229
    %v3231 = vpop.f32.mrb[0].mxu0
    %3232 = vdwg.mxu0
    %v3233 = vadd.f32 %v3155, %v3230
    %v3234 = vxor.u32 %v3233, 2147483648
    %v3235 = vmul.f32 %v3234, 1.442695
    %v3236 = vpow.pop %v3235
    %v3237 = vadd.f32 %v3236, 1.0
    %v3238 = vrcp.pop %v3237
    %v3239 = vmul.f32 1.0, %v3238
    %v3240 = vtanh.pop %v3233
    %v3241 = vmul.f32 %v3239, %v3082
    %3243 = vrot.lane.b32.xlu0 %v3240, 64
    %v3244 = vpop.permute.xlu0 %3243
    %v3246 = vmul.f32 %v3239, %v3244
    %3248 = vrot.lane.b32.xlu0 %v3246, 32
    %v3249 = vpop.permute.xlu0 %3248
    %v3251 = vadd.f32 %v3241, %v3249
    %v3252 = vtanh.pop %v3251
    %3254 = vrot.lane.b32.xlu0 %v3252, 64
    %v3255 = vpop.permute.xlu0 %3254
    %v3257 = vmul.f32 %v3239, %v3255
    %v3258 = vsel %vm533, %v3257, 0.0
    %v3259 = vsel %vm533, %v3257, %v3081
    %v3260 = vsel %vm533, %v3251, %v3082
    %3262 = vrot.lane.b32.xlu0 %v2017, 32
    %v3263 = vpop.permute.xlu0 %3262
    %v3264 = vsel %vm167, %v3263, 0
    %3266 = vmatprep.subr.mxu0 0.0
    %3267 = vmatpush1.msra.mxu0 %v2904
    %3268 = vmatprep.subr.mxu0 0.0
    %3269 = vmatpush1.msra.mxu0 %v2905
    %3270 = vmatprep.subr.mxu0 0.0
    %3271 = vmatpush1.msra.mxu0 %v2906
    %3272 = vmatprep.subr.mxu0 0.0
    %3273 = vmatpush1.msra.mxu0 %v2907
    %3274 = vmatprep.subr.mxu0 0.0
    %3275 = vmatpush1.msra.mxu0 0.0
    %3276 = vmatprep.subr.mxu0 0.0
    %3277 = vmatpush1.msra.mxu0 0.0
    %3278 = vmatprep.subr.mxu0 0.0
    %3279 = vmatpush1.msra.mxu0 0.0
    %3280 = vmatprep.subr.mxu0 0.0
    %3281 = vmatpush1.msra.mxu0 0.0
    %3282 = vmatprep.subr.mxu0 0.0
    %3283 = vmatpush1.msra.mxu0 0.0
    %3284 = vmatprep.subr.mxu0 0.0
    %3285 = vmatpush1.msra.mxu0 0.0
    %3286 = vmatprep.subr.mxu0 0.0
    %3287 = vmatpush1.msra.mxu0 0.0
    %3288 = vmatprep.subr.mxu0 0.0
    %3289 = vmatpush1.msra.mxu0 0.0
    %3290 = vmatprep.subr.mxu0 0.0
    %3291 = vmatpush1.msra.mxu0 0.0
    %3292 = vmatprep.subr.mxu0 0.0
    %3293 = vmatpush1.msra.mxu0 0.0
    %3294 = vmatprep.subr.mxu0 0.0
    %3295 = vmatpush1.msra.mxu0 0.0
    %3296 = vmatprep.subr.mxu0 0.0
    %3297 = vmatpush1.msra.mxu0 0.0
    %3298 = vmatprep.subr.mxu0 0.0
    %3299 = vmatpush1.msra.mxu0 0.0
    %3300 = vmatprep.subr.mxu0 0.0
    %3301 = vmatpush1.msra.mxu0 0.0
    %3302 = vmatprep.subr.mxu0 0.0
    %3303 = vmatpush1.msra.mxu0 0.0
    %3304 = vmatprep.subr.mxu0 0.0
    %3305 = vmatpush1.msra.mxu0 0.0
    %3306 = vmatprep.subr.mxu0 0.0
    %3307 = vmatpush1.msra.mxu0 0.0
    %3308 = vmatprep.subr.mxu0 0.0
    %3309 = vmatpush1.msra.mxu0 0.0
    %3310 = vmatprep.subr.mxu0 0.0
    %3311 = vmatpush1.msra.mxu0 0.0
    %3312 = vmatprep.subr.mxu0 0.0
    %3313 = vmatpush1.msra.mxu0 0.0
    %3314 = vmatprep.subr.mxu0 0.0
    %3315 = vmatpush1.msra.mxu0 0.0
    %3316 = vmatprep.subr.mxu0 0.0
    %3317 = vmatpush1.msra.mxu0 0.0
    %3318 = vmatprep.subr.mxu0 0.0
    %3319 = vmatpush1.msra.mxu0 0.0
    %3320 = vmatprep.subr.mxu0 0.0
    %3321 = vmatpush1.msra.mxu0 0.0
    %3322 = vmatprep.subr.mxu0 0.0
    %3323 = vmatpush1.msra.mxu0 0.0
    %3324 = vmatprep.subr.mxu0 0.0
    %3325 = vmatpush1.msra.mxu0 0.0
    %3326 = vmatprep.subr.mxu0 0.0
    %3327 = vmatpush1.msra.mxu0 0.0
    %3328 = vmatprep.subr.mxu0 0.0
    %3329 = vmatpush1.msra.mxu0 0.0
    %3330 = vmatprep.mubr.f32.mxu0 0.0
    %3331 = vmatmul.mubr.f32.gmra.mrb[0].mxu0 %v3264
    %v3332 = vpop.f32.mrb[0].mxu0
    %v3333 = vadd.f32 %v2914, %v3332
    %v3334 = vpop.f32.mrb[0].mxu0
    %3335 = vdwg.mxu0
    %3337 = vrot.lane.b32.xlu0 %v3259, 32
    %v3338 = vpop.permute.xlu0 %3337
    %v3339 = vsel %vm167, %v3338, 0
    %3341 = vmatprep.subr.mxu0 0.0
    %3342 = vmatpush1.msra.mxu0 %v2899
    %3343 = vmatprep.subr.mxu0 0.0
    %3344 = vmatpush1.msra.mxu0 %v2900
    %3345 = vmatprep.subr.mxu0 0.0
    %3346 = vmatpush1.msra.mxu0 %v2901
    %3347 = vmatprep.subr.mxu0 0.0
    %3348 = vmatpush1.msra.mxu0 %v2902
    %3349 = vmatprep.subr.mxu0 0.0
    %3350 = vmatpush1.msra.mxu0 0.0
    %3351 = vmatprep.subr.mxu0 0.0
    %3352 = vmatpush1.msra.mxu0 0.0
    %3353 = vmatprep.subr.mxu0 0.0
    %3354 = vmatpush1.msra.mxu0 0.0
    %3355 = vmatprep.subr.mxu0 0.0
    %3356 = vmatpush1.msra.mxu0 0.0
    %3357 = vmatprep.subr.mxu0 0.0
    %3358 = vmatpush1.msra.mxu0 0.0
    %3359 = vmatprep.subr.mxu0 0.0
    %3360 = vmatpush1.msra.mxu0 0.0
    %3361 = vmatprep.subr.mxu0 0.0
    %3362 = vmatpush1.msra.mxu0 0.0
    %3363 = vmatprep.subr.mxu0 0.0
    %3364 = vmatpush1.msra.mxu0 0.0
    %3365 = vmatprep.subr.mxu0 0.0
    %3366 = vmatpush1.msra.mxu0 0.0
    %3367 = vmatprep.subr.mxu0 0.0
    %3368 = vmatpush1.msra.mxu0 0.0
    %3369 = vmatprep.subr.mxu0 0.0
    %3370 = vmatpush1.msra.mxu0 0.0
    %3371 = vmatprep.subr.mxu0 0.0
    %3372 = vmatpush1.msra.mxu0 0.0
    %3373 = vmatprep.subr.mxu0 0.0
    %3374 = vmatpush1.msra.mxu0 0.0
    %3375 = vmatprep.subr.mxu0 0.0
    %3376 = vmatpush1.msra.mxu0 0.0
    %3377 = vmatprep.subr.mxu0 0.0
    %3378 = vmatpush1.msra.mxu0 0.0
    %3379 = vmatprep.subr.mxu0 0.0
    %3380 = vmatpush1.msra.mxu0 0.0
    %3381 = vmatprep.subr.mxu0 0.0
    %3382 = vmatpush1.msra.mxu0 0.0
    %3383 = vmatprep.subr.mxu0 0.0
    %3384 = vmatpush1.msra.mxu0 0.0
    %3385 = vmatprep.subr.mxu0 0.0
    %3386 = vmatpush1.msra.mxu0 0.0
    %3387 = vmatprep.subr.mxu0 0.0
    %3388 = vmatpush1.msra.mxu0 0.0
    %3389 = vmatprep.subr.mxu0 0.0
    %3390 = vmatpush1.msra.mxu0 0.0
    %3391 = vmatprep.subr.mxu0 0.0
    %3392 = vmatpush1.msra.mxu0 0.0
    %3393 = vmatprep.subr.mxu0 0.0
    %3394 = vmatpush1.msra.mxu0 0.0
    %3395 = vmatprep.subr.mxu0 0.0
    %3396 = vmatpush1.msra.mxu0 0.0
    %3397 = vmatprep.subr.mxu0 0.0
    %3398 = vmatpush1.msra.mxu0 0.0
    %3399 = vmatprep.subr.mxu0 0.0
    %3400 = vmatpush1.msra.mxu0 0.0
    %3401 = vmatprep.subr.mxu0 0.0
    %3402 = vmatpush1.msra.mxu0 0.0
    %3403 = vmatprep.subr.mxu0 0.0
    %3404 = vmatpush1.msra.mxu0 0.0
    %3405 = vmatprep.mubr.f32.mxu0 0.0
    %3406 = vmatmul.mubr.f32.gmra.mrb[0].mxu0 %v3339
    %v3407 = vpop.f32.mrb[0].mxu0
    %v3408 = vadd.f32 0.0, %v3407
    %v3409 = vpop.f32.mrb[0].mxu0
    %3410 = vdwg.mxu0
    %v3411 = vadd.f32 %v3333, %v3408
    %v3412 = vxor.u32 %v3411, 2147483648
    %v3413 = vmul.f32 %v3412, 1.442695
    %v3414 = vpow.pop %v3413
    %v3415 = vadd.f32 %v3414, 1.0
    %v3416 = vrcp.pop %v3415
    %v3417 = vmul.f32 1.0, %v3416
    %v3418 = vtanh.pop %v3411
    %v3419 = vmul.f32 %v3417, %v3260
    %3421 = vrot.lane.b32.xlu0 %v3418, 64
    %v3422 = vpop.permute.xlu0 %3421
    %v3424 = vmul.f32 %v3417, %v3422
    %3426 = vrot.lane.b32.xlu0 %v3424, 32
    %v3427 = vpop.permute.xlu0 %3426
    %v3429 = vadd.f32 %v3419, %v3427
    %v3430 = vtanh.pop %v3429
    %3432 = vrot.lane.b32.xlu0 %v3430, 64
    %v3433 = vpop.permute.xlu0 %3432
    %v3435 = vmul.f32 %v3417, %v3433
    %v3436 = vsel %vm688, %v3435, 0.0
    %v3437 = vsel %vm688, %v3435, %v3259
    %v3438 = vsel %vm688, %v3429, %v3260
    %3440 = vrot.lane.b32.xlu0 %v2193, 32
    %v3441 = vpop.permute.xlu0 %3440
    %v3442 = vsel %vm167, %v3441, 0
    %3444 = vmatprep.subr.mxu0 0.0
    %3445 = vmatpush1.msra.mxu0 %v2904
    %3446 = vmatprep.subr.mxu0 0.0
    %3447 = vmatpush1.msra.mxu0 %v2905
    %3448 = vmatprep.subr.mxu0 0.0
    %3449 = vmatpush1.msra.mxu0 %v2906
    %3450 = vmatprep.subr.mxu0 0.0
    %3451 = vmatpush1.msra.mxu0 %v2907
    %3452 = vmatprep.subr.mxu0 0.0
    %3453 = vmatpush1.msra.mxu0 0.0
    %3454 = vmatprep.subr.mxu0 0.0
    %3455 = vmatpush1.msra.mxu0 0.0
    %3456 = vmatprep.subr.mxu0 0.0
    %3457 = vmatpush1.msra.mxu0 0.0
    %3458 = vmatprep.subr.mxu0 0.0
    %3459 = vmatpush1.msra.mxu0 0.0
    %3460 = vmatprep.subr.mxu0 0.0
    %3461 = vmatpush1.msra.mxu0 0.0
    %3462 = vmatprep.subr.mxu0 0.0
    %3463 = vmatpush1.msra.mxu0 0.0
    %3464 = vmatprep.subr.mxu0 0.0
    %3465 = vmatpush1.msra.mxu0 0.0
    %3466 = vmatprep.subr.mxu0 0.0
    %3467 = vmatpush1.msra.mxu0 0.0
    %3468 = vmatprep.subr.mxu0 0.0
    %3469 = vmatpush1.msra.mxu0 0.0
    %3470 = vmatprep.subr.mxu0 0.0
    %3471 = vmatpush1.msra.mxu0 0.0
    %3472 = vmatprep.subr.mxu0 0.0
    %3473 = vmatpush1.msra.mxu0 0.0
    %3474 = vmatprep.subr.mxu0 0.0
    %3475 = vmatpush1.msra.mxu0 0.0
    %3476 = vmatprep.subr.mxu0 0.0
    %3477 = vmatpush1.msra.mxu0 0.0
    %3478 = vmatprep.subr.mxu0 0.0
    %3479 = vmatpush1.msra.mxu0 0.0
    %3480 = vmatprep.subr.mxu0 0.0
    %3481 = vmatpush1.msra.mxu0 0.0
    %3482 = vmatprep.subr.mxu0 0.0
    %3483 = vmatpush1.msra.mxu0 0.0
    %3484 = vmatprep.subr.mxu0 0.0
    %3485 = vmatpush1.msra.mxu0 0.0
    %3486 = vmatprep.subr.mxu0 0.0
    %3487 = vmatpush1.msra.mxu0 0.0
    %3488 = vmatprep.subr.mxu0 0.0
    %3489 = vmatpush1.msra.mxu0 0.0
    %3490 = vmatprep.subr.mxu0 0.0
    %3491 = vmatpush1.msra.mxu0 0.0
    %3492 = vmatprep.subr.mxu0 0.0
    %3493 = vmatpush1.msra.mxu0 0.0
    %3494 = vmatprep.subr.mxu0 0.0
    %3495 = vmatpush1.msra.mxu0 0.0
    %3496 = vmatprep.subr.mxu0 0.0
    %3497 = vmatpush1.msra.mxu0 0.0
    %3498 = vmatprep.subr.mxu0 0.0
    %3499 = vmatpush1.msra.mxu0 0.0
    %3500 = vmatprep.subr.mxu0 0.0
    %3501 = vmatpush1.msra.mxu0 0.0
    %3502 = vmatprep.subr.mxu0 0.0
    %3503 = vmatpush1.msra.mxu0 0.0
    %3504 = vmatprep.subr.mxu0 0.0
    %3505 = vmatpush1.msra.mxu0 0.0
    %3506 = vmatprep.subr.mxu0 0.0
    %3507 = vmatpush1.msra.mxu0 0.0
    %3508 = vmatprep.mubr.f32.mxu0 0.0
    %3509 = vmatmul.mubr.f32.gmra.mrb[0].mxu0 %v3442
    %v3510 = vpop.f32.mrb[0].mxu0
    %v3511 = vadd.f32 %v2914, %v3510
    %v3512 = vpop.f32.mrb[0].mxu0
    %3513 = vdwg.mxu0
    %3515 = vrot.lane.b32.xlu0 %v3437, 32
    %v3516 = vpop.permute.xlu0 %3515
    %v3517 = vsel %vm167, %v3516, 0
    %3519 = vmatprep.subr.mxu0 0.0
    %3520 = vmatpush1.msra.mxu0 %v2899
    %3521 = vmatprep.subr.mxu0 0.0
    %3522 = vmatpush1.msra.mxu0 %v2900
    %3523 = vmatprep.subr.mxu0 0.0
    %3524 = vmatpush1.msra.mxu0 %v2901
    %3525 = vmatprep.subr.mxu0 0.0
    %3526 = vmatpush1.msra.mxu0 %v2902
    %3527 = vmatprep.subr.mxu0 0.0
    %3528 = vmatpush1.msra.mxu0 0.0
    %3529 = vmatprep.subr.mxu0 0.0
    %3530 = vmatpush1.msra.mxu0 0.0
    %3531 = vmatprep.subr.mxu0 0.0
    %3532 = vmatpush1.msra.mxu0 0.0
    %3533 = vmatprep.subr.mxu0 0.0
    %3534 = vmatpush1.msra.mxu0 0.0
    %3535 = vmatprep.subr.mxu0 0.0
    %3536 = vmatpush1.msra.mxu0 0.0
    %3537 = vmatprep.subr.mxu0 0.0
    %3538 = vmatpush1.msra.mxu0 0.0
    %3539 = vmatprep.subr.mxu0 0.0
    %3540 = vmatpush1.msra.mxu0 0.0
    %3541 = vmatprep.subr.mxu0 0.0
    %3542 = vmatpush1.msra.mxu0 0.0
    %3543 = vmatprep.subr.mxu0 0.0
    %3544 = vmatpush1.msra.mxu0 0.0
    %3545 = vmatprep.subr.mxu0 0.0
    %3546 = vmatpush1.msra.mxu0 0.0
    %3547 = vmatprep.subr.mxu0 0.0
    %3548 = vmatpush1.msra.mxu0 0.0
    %3549 = vmatprep.subr.mxu0 0.0
    %3550 = vmatpush1.msra.mxu0 0.0
    %3551 = vmatprep.subr.mxu0 0.0
    %3552 = vmatpush1.msra.mxu0 0.0
    %3553 = vmatprep.subr.mxu0 0.0
    %3554 = vmatpush1.msra.mxu0 0.0
    %3555 = vmatprep.subr.mxu0 0.0
    %3556 = vmatpush1.msra.mxu0 0.0
    %3557 = vmatprep.subr.mxu0 0.0
    %3558 = vmatpush1.msra.mxu0 0.0
    %3559 = vmatprep.subr.mxu0 0.0
    %3560 = vmatpush1.msra.mxu0 0.0
    %3561 = vmatprep.subr.mxu0 0.0
    %3562 = vmatpush1.msra.mxu0 0.0
    %3563 = vmatprep.subr.mxu0 0.0
    %3564 = vmatpush1.msra.mxu0 0.0
    %3565 = vmatprep.subr.mxu0 0.0
    %3566 = vmatpush1.msra.mxu0 0.0
    %3567 = vmatprep.subr.mxu0 0.0
    %3568 = vmatpush1.msra.mxu0 0.0
    %3569 = vmatprep.subr.mxu0 0.0
    %3570 = vmatpush1.msra.mxu0 0.0
    %3571 = vmatprep.subr.mxu0 0.0
    %3572 = vmatpush1.msra.mxu0 0.0
    %3573 = vmatprep.subr.mxu0 0.0
    %3574 = vmatpush1.msra.mxu0 0.0
    %3575 = vmatprep.subr.mxu0 0.0
    %3576 = vmatpush1.msra.mxu0 0.0
    %3577 = vmatprep.subr.mxu0 0.0
    %3578 = vmatpush1.msra.mxu0 0.0
    %3579 = vmatprep.subr.mxu0 0.0
    %3580 = vmatpush1.msra.mxu0 0.0
    %3581 = vmatprep.subr.mxu0 0.0
    %3582 = vmatpush1.msra.mxu0 0.0
    %3583 = vmatprep.mubr.f32.mxu0 0.0
    %3584 = vmatmul.mubr.f32.gmra.mrb[0].mxu0 %v3517
    %v3585 = vpop.f32.mrb[0].mxu0
    %v3586 = vadd.f32 0.0, %v3585
    %v3587 = vpop.f32.mrb[0].mxu0
    %3588 = vdwg.mxu0
    %v3589 = vadd.f32 %v3511, %v3586
    %v3590 = vxor.u32 %v3589, 2147483648
    %v3591 = vmul.f32 %v3590, 1.442695
    %v3592 = vpow.pop %v3591
    %v3593 = vadd.f32 %v3592, 1.0
    %v3594 = vrcp.pop %v3593
    %v3595 = vmul.f32 1.0, %v3594
    %v3596 = vtanh.pop %v3589
    %v3597 = vmul.f32 %v3595, %v3438
    %3599 = vrot.lane.b32.xlu0 %v3596, 64
    %v3600 = vpop.permute.xlu0 %3599
    %v3602 = vmul.f32 %v3595, %v3600
    %3604 = vrot.lane.b32.xlu0 %v3602, 32
    %v3605 = vpop.permute.xlu0 %3604
    %v3607 = vadd.f32 %v3597, %v3605
    %v3608 = vtanh.pop %v3607
    %3610 = vrot.lane.b32.xlu0 %v3608, 64
    %v3611 = vpop.permute.xlu0 %3610
    %v3613 = vmul.f32 %v3595, %v3611
    %v3614 = vsel %vm845, %v3613, 0.0
    %v3615 = vsel %vm845, %v3613, %v3437
    %v3616 = vsel %vm845, %v3607, %v3438
    %3618 = vrot.lane.b32.xlu0 %v2369, 32
    %v3619 = vpop.permute.xlu0 %3618
    %v3620 = vsel %vm167, %v3619, 0
    %3622 = vmatprep.subr.mxu0 0.0
    %3623 = vmatpush1.msra.mxu0 %v2904
    %3624 = vmatprep.subr.mxu0 0.0
    %3625 = vmatpush1.msra.mxu0 %v2905
    %3626 = vmatprep.subr.mxu0 0.0
    %3627 = vmatpush1.msra.mxu0 %v2906
    %3628 = vmatprep.subr.mxu0 0.0
    %3629 = vmatpush1.msra.mxu0 %v2907
    %3630 = vmatprep.subr.mxu0 0.0
    %3631 = vmatpush1.msra.mxu0 0.0
    %3632 = vmatprep.subr.mxu0 0.0
    %3633 = vmatpush1.msra.mxu0 0.0
    %3634 = vmatprep.subr.mxu0 0.0
    %3635 = vmatpush1.msra.mxu0 0.0
    %3636 = vmatprep.subr.mxu0 0.0
    %3637 = vmatpush1.msra.mxu0 0.0
    %3638 = vmatprep.subr.mxu0 0.0
    %3639 = vmatpush1.msra.mxu0 0.0
    %3640 = vmatprep.subr.mxu0 0.0
    %3641 = vmatpush1.msra.mxu0 0.0
    %3642 = vmatprep.subr.mxu0 0.0
    %3643 = vmatpush1.msra.mxu0 0.0
    %3644 = vmatprep.subr.mxu0 0.0
    %3645 = vmatpush1.msra.mxu0 0.0
    %3646 = vmatprep.subr.mxu0 0.0
    %3647 = vmatpush1.msra.mxu0 0.0
    %3648 = vmatprep.subr.mxu0 0.0
    %3649 = vmatpush1.msra.mxu0 0.0
    %3650 = vmatprep.subr.mxu0 0.0
    %3651 = vmatpush1.msra.mxu0 0.0
    %3652 = vmatprep.subr.mxu0 0.0
    %3653 = vmatpush1.msra.mxu0 0.0
    %3654 = vmatprep.subr.mxu0 0.0
    %3655 = vmatpush1.msra.mxu0 0.0
    %3656 = vmatprep.subr.mxu0 0.0
    %3657 = vmatpush1.msra.mxu0 0.0
    %3658 = vmatprep.subr.mxu0 0.0
    %3659 = vmatpush1.msra.mxu0 0.0
    %3660 = vmatprep.subr.mxu0 0.0
    %3661 = vmatpush1.msra.mxu0 0.0
    %3662 = vmatprep.subr.mxu0 0.0
    %3663 = vmatpush1.msra.mxu0 0.0
    %3664 = vmatprep.subr.mxu0 0.0
    %3665 = vmatpush1.msra.mxu0 0.0
    %3666 = vmatprep.subr.mxu0 0.0
    %3667 = vmatpush1.msra.mxu0 0.0
    %3668 = vmatprep.subr.mxu0 0.0
    %3669 = vmatpush1.msra.mxu0 0.0
    %3670 = vmatprep.subr.mxu0 0.0
    %3671 = vmatpush1.msra.mxu0 0.0
    %3672 = vmatprep.subr.mxu0 0.0
    %3673 = vmatpush1.msra.mxu0 0.0
    %3674 = vmatprep.subr.mxu0 0.0
    %3675 = vmatpush1.msra.mxu0 0.0
    %3676 = vmatprep.subr.mxu0 0.0
    %3677 = vmatpush1.msra.mxu0 0.0
    %3678 = vmatprep.subr.mxu0 0.0
    %3679 = vmatpush1.msra.mxu0 0.0
    %3680 = vmatprep.subr.mxu0 0.0
    %3681 = vmatpush1.msra.mxu0 0.0
    %3682 = vmatprep.subr.mxu0 0.0
    %3683 = vmatpush1.msra.mxu0 0.0
    %3684 = vmatprep.subr.mxu0 0.0
    %3685 = vmatpush1.msra.mxu0 0.0
    %3686 = vmatprep.mubr.f32.mxu0 0.0
    %3687 = vmatmul.mubr.f32.gmra.mrb[0].mxu0 %v3620
    %v3688 = vpop.f32.mrb[0].mxu0
    %v3689 = vadd.f32 %v2914, %v3688
    %v3690 = vpop.f32.mrb[0].mxu0
    %3691 = vdwg.mxu0
    %3693 = vrot.lane.b32.xlu0 %v3615, 32
    %v3694 = vpop.permute.xlu0 %3693
    %v3695 = vsel %vm167, %v3694, 0
    %3697 = vmatprep.subr.mxu0 0.0
    %3698 = vmatpush1.msra.mxu0 %v2899
    %3699 = vmatprep.subr.mxu0 0.0
    %3700 = vmatpush1.msra.mxu0 %v2900
    %3701 = vmatprep.subr.mxu0 0.0
    %3702 = vmatpush1.msra.mxu0 %v2901
    %3703 = vmatprep.subr.mxu0 0.0
    %3704 = vmatpush1.msra.mxu0 %v2902
    %3705 = vmatprep.subr.mxu0 0.0
    %3706 = vmatpush1.msra.mxu0 0.0
    %3707 = vmatprep.subr.mxu0 0.0
    %3708 = vmatpush1.msra.mxu0 0.0
    %3709 = vmatprep.subr.mxu0 0.0
    %3710 = vmatpush1.msra.mxu0 0.0
    %3711 = vmatprep.subr.mxu0 0.0
    %3712 = vmatpush1.msra.mxu0 0.0
    %3713 = vmatprep.subr.mxu0 0.0
    %3714 = vmatpush1.msra.mxu0 0.0
    %3715 = vmatprep.subr.mxu0 0.0
    %3716 = vmatpush1.msra.mxu0 0.0
    %3717 = vmatprep.subr.mxu0 0.0
    %3718 = vmatpush1.msra.mxu0 0.0
    %3719 = vmatprep.subr.mxu0 0.0
    %3720 = vmatpush1.msra.mxu0 0.0
    %3721 = vmatprep.subr.mxu0 0.0
    %3722 = vmatpush1.msra.mxu0 0.0
    %3723 = vmatprep.subr.mxu0 0.0
    %3724 = vmatpush1.msra.mxu0 0.0
    %3725 = vmatprep.subr.mxu0 0.0
    %3726 = vmatpush1.msra.mxu0 0.0
    %3727 = vmatprep.subr.mxu0 0.0
    %3728 = vmatpush1.msra.mxu0 0.0
    %3729 = vmatprep.subr.mxu0 0.0
    %3730 = vmatpush1.msra.mxu0 0.0
    %3731 = vmatprep.subr.mxu0 0.0
    %3732 = vmatpush1.msra.mxu0 0.0
    %3733 = vmatprep.subr.mxu0 0.0
    %3734 = vmatpush1.msra.mxu0 0.0
    %3735 = vmatprep.subr.mxu0 0.0
    %3736 = vmatpush1.msra.mxu0 0.0
    %3737 = vmatprep.subr.mxu0 0.0
    %3738 = vmatpush1.msra.mxu0 0.0
    %3739 = vmatprep.subr.mxu0 0.0
    %3740 = vmatpush1.msra.mxu0 0.0
    %3741 = vmatprep.subr.mxu0 0.0
    %3742 = vmatpush1.msra.mxu0 0.0
    %3743 = vmatprep.subr.mxu0 0.0
    %3744 = vmatpush1.msra.mxu0 0.0
    %3745 = vmatprep.subr.mxu0 0.0
    %3746 = vmatpush1.msra.mxu0 0.0
    %3747 = vmatprep.subr.mxu0 0.0
    %3748 = vmatpush1.msra.mxu0 0.0
    %3749 = vmatprep.subr.mxu0 0.0
    %3750 = vmatpush1.msra.mxu0 0.0
    %3751 = vmatprep.subr.mxu0 0.0
    %3752 = vmatpush1.msra.mxu0 0.0
    %3753 = vmatprep.subr.mxu0 0.0
    %3754 = vmatpush1.msra.mxu0 0.0
    %3755 = vmatprep.subr.mxu0 0.0
    %3756 = vmatpush1.msra.mxu0 0.0
    %3757 = vmatprep.subr.mxu0 0.0
    %3758 = vmatpush1.msra.mxu0 0.0
    %3759 = vmatprep.subr.mxu0 0.0
    %3760 = vmatpush1.msra.mxu0 0.0
    %3761 = vmatprep.mubr.f32.mxu0 0.0
    %3762 = vmatmul.mubr.f32.gmra.mrb[0].mxu0 %v3695
    %v3763 = vpop.f32.mrb[0].mxu0
    %v3764 = vadd.f32 0.0, %v3763
    %v3765 = vpop.f32.mrb[0].mxu0
    %3766 = vdwg.mxu0
    %v3767 = vadd.f32 %v3689, %v3764
    %v3768 = vxor.u32 %v3767, 2147483648
    %v3769 = vmul.f32 %v3768, 1.442695
    %v3770 = vpow.pop %v3769
    %v3771 = vadd.f32 %v3770, 1.0
    %v3772 = vrcp.pop %v3771
    %v3773 = vmul.f32 1.0, %v3772
    %v3774 = vtanh.pop %v3767
    %v3775 = vmul.f32 %v3773, %v3616
    %3777 = vrot.lane.b32.xlu0 %v3774, 64
    %v3778 = vpop.permute.xlu0 %3777
    %v3780 = vmul.f32 %v3773, %v3778
    %3782 = vrot.lane.b32.xlu0 %v3780, 32
    %v3783 = vpop.permute.xlu0 %3782
    %v3785 = vadd.f32 %v3775, %v3783
    %v3786 = vtanh.pop %v3785
    %3788 = vrot.lane.b32.xlu0 %v3786, 64
    %v3789 = vpop.permute.xlu0 %3788
    %v3791 = vmul.f32 %v3773, %v3789
    %v3792 = vsel %vm1002, %v3791, 0.0
    %v3793 = vsel %vm1002, %v3791, %v3615
    %v3794 = vsel %vm1002, %v3785, %v3616
    %3796 = vrot.lane.b32.xlu0 %v2545, 32
    %v3797 = vpop.permute.xlu0 %3796
    %v3798 = vsel %vm167, %v3797, 0
    %3800 = vmatprep.subr.mxu0 0.0
    %3801 = vmatpush1.msra.mxu0 %v2904
    %3802 = vmatprep.subr.mxu0 0.0
    %3803 = vmatpush1.msra.mxu0 %v2905
    %3804 = vmatprep.subr.mxu0 0.0
    %3805 = vmatpush1.msra.mxu0 %v2906
    %3806 = vmatprep.subr.mxu0 0.0
    %3807 = vmatpush1.msra.mxu0 %v2907
    %3808 = vmatprep.subr.mxu0 0.0
    %3809 = vmatpush1.msra.mxu0 0.0
    %3810 = vmatprep.subr.mxu0 0.0
    %3811 = vmatpush1.msra.mxu0 0.0
    %3812 = vmatprep.subr.mxu0 0.0
    %3813 = vmatpush1.msra.mxu0 0.0
    %3814 = vmatprep.subr.mxu0 0.0
    %3815 = vmatpush1.msra.mxu0 0.0
    %3816 = vmatprep.subr.mxu0 0.0
    %3817 = vmatpush1.msra.mxu0 0.0
    %3818 = vmatprep.subr.mxu0 0.0
    %3819 = vmatpush1.msra.mxu0 0.0
    %3820 = vmatprep.subr.mxu0 0.0
    %3821 = vmatpush1.msra.mxu0 0.0
    %3822 = vmatprep.subr.mxu0 0.0
    %3823 = vmatpush1.msra.mxu0 0.0
    %3824 = vmatprep.subr.mxu0 0.0
    %3825 = vmatpush1.msra.mxu0 0.0
    %3826 = vmatprep.subr.mxu0 0.0
    %3827 = vmatpush1.msra.mxu0 0.0
    %3828 = vmatprep.subr.mxu0 0.0
    %3829 = vmatpush1.msra.mxu0 0.0
    %3830 = vmatprep.subr.mxu0 0.0
    %3831 = vmatpush1.msra.mxu0 0.0
    %3832 = vmatprep.subr.mxu0 0.0
    %3833 = vmatpush1.msra.mxu0 0.0
    %3834 = vmatprep.subr.mxu0 0.0
    %3835 = vmatpush1.msra.mxu0 0.0
    %3836 = vmatprep.subr.mxu0 0.0
    %3837 = vmatpush1.msra.mxu0 0.0
    %3838 = vmatprep.subr.mxu0 0.0
    %3839 = vmatpush1.msra.mxu0 0.0
    %3840 = vmatprep.subr.mxu0 0.0
    %3841 = vmatpush1.msra.mxu0 0.0
    %3842 = vmatprep.subr.mxu0 0.0
    %3843 = vmatpush1.msra.mxu0 0.0
    %3844 = vmatprep.subr.mxu0 0.0
    %3845 = vmatpush1.msra.mxu0 0.0
    %3846 = vmatprep.subr.mxu0 0.0
    %3847 = vmatpush1.msra.mxu0 0.0
    %3848 = vmatprep.subr.mxu0 0.0
    %3849 = vmatpush1.msra.mxu0 0.0
    %3850 = vmatprep.subr.mxu0 0.0
    %3851 = vmatpush1.msra.mxu0 0.0
    %3852 = vmatprep.subr.mxu0 0.0
    %3853 = vmatpush1.msra.mxu0 0.0
    %3854 = vmatprep.subr.mxu0 0.0
    %3855 = vmatpush1.msra.mxu0 0.0
    %3856 = vmatprep.subr.mxu0 0.0
    %3857 = vmatpush1.msra.mxu0 0.0
    %3858 = vmatprep.subr.mxu0 0.0
    %3859 = vmatpush1.msra.mxu0 0.0
    %3860 = vmatprep.subr.mxu0 0.0
    %3861 = vmatpush1.msra.mxu0 0.0
    %3862 = vmatprep.subr.mxu0 0.0
    %3863 = vmatpush1.msra.mxu0 0.0
    %3864 = vmatprep.mubr.f32.mxu0 0.0
    %3865 = vmatmul.mubr.f32.gmra.mrb[0].mxu0 %v3798
    %v3866 = vpop.f32.mrb[0].mxu0
    %v3867 = vadd.f32 %v2914, %v3866
    %v3868 = vpop.f32.mrb[0].mxu0
    %3869 = vdwg.mxu0
    %3871 = vrot.lane.b32.xlu0 %v3793, 32
    %v3872 = vpop.permute.xlu0 %3871
    %v3873 = vsel %vm167, %v3872, 0
    %3875 = vmatprep.subr.mxu0 0.0
    %3876 = vmatpush1.msra.mxu0 %v2899
    %3877 = vmatprep.subr.mxu0 0.0
    %3878 = vmatpush1.msra.mxu0 %v2900
    %3879 = vmatprep.subr.mxu0 0.0
    %3880 = vmatpush1.msra.mxu0 %v2901
    %3881 = vmatprep.subr.mxu0 0.0
    %3882 = vmatpush1.msra.mxu0 %v2902
    %3883 = vmatprep.subr.mxu0 0.0
    %3884 = vmatpush1.msra.mxu0 0.0
    %3885 = vmatprep.subr.mxu0 0.0
    %3886 = vmatpush1.msra.mxu0 0.0
    %3887 = vmatprep.subr.mxu0 0.0
    %3888 = vmatpush1.msra.mxu0 0.0
    %3889 = vmatprep.subr.mxu0 0.0
    %3890 = vmatpush1.msra.mxu0 0.0
    %3891 = vmatprep.subr.mxu0 0.0
    %3892 = vmatpush1.msra.mxu0 0.0
    %3893 = vmatprep.subr.mxu0 0.0
    %3894 = vmatpush1.msra.mxu0 0.0
    %3895 = vmatprep.subr.mxu0 0.0
    %3896 = vmatpush1.msra.mxu0 0.0
    %3897 = vmatprep.subr.mxu0 0.0
    %3898 = vmatpush1.msra.mxu0 0.0
    %3899 = vmatprep.subr.mxu0 0.0
    %3900 = vmatpush1.msra.mxu0 0.0
    %3901 = vmatprep.subr.mxu0 0.0
    %3902 = vmatpush1.msra.mxu0 0.0
    %3903 = vmatprep.subr.mxu0 0.0
    %3904 = vmatpush1.msra.mxu0 0.0
    %3905 = vmatprep.subr.mxu0 0.0
    %3906 = vmatpush1.msra.mxu0 0.0
    %3907 = vmatprep.subr.mxu0 0.0
    %3908 = vmatpush1.msra.mxu0 0.0
    %3909 = vmatprep.subr.mxu0 0.0
    %3910 = vmatpush1.msra.mxu0 0.0
    %3911 = vmatprep.subr.mxu0 0.0
    %3912 = vmatpush1.msra.mxu0 0.0
    %3913 = vmatprep.subr.mxu0 0.0
    %3914 = vmatpush1.msra.mxu0 0.0
    %3915 = vmatprep.subr.mxu0 0.0
    %3916 = vmatpush1.msra.mxu0 0.0
    %3917 = vmatprep.subr.mxu0 0.0
    %3918 = vmatpush1.msra.mxu0 0.0
    %3919 = vmatprep.subr.mxu0 0.0
    %3920 = vmatpush1.msra.mxu0 0.0
    %3921 = vmatprep.subr.mxu0 0.0
    %3922 = vmatpush1.msra.mxu0 0.0
    %3923 = vmatprep.subr.mxu0 0.0
    %3924 = vmatpush1.msra.mxu0 0.0
    %3925 = vmatprep.subr.mxu0 0.0
    %3926 = vmatpush1.msra.mxu0 0.0
    %3927 = vmatprep.subr.mxu0 0.0
    %3928 = vmatpush1.msra.mxu0 0.0
    %3929 = vmatprep.subr.mxu0 0.0
    %3930 = vmatpush1.msra.mxu0 0.0
    %3931 = vmatprep.subr.mxu0 0.0
    %3932 = vmatpush1.msra.mxu0 0.0
    %3933 = vmatprep.subr.mxu0 0.0
    %3934 = vmatpush1.msra.mxu0 0.0
    %3935 = vmatprep.subr.mxu0 0.0
    %3936 = vmatpush1.msra.mxu0 0.0
    %3937 = vmatprep.subr.mxu0 0.0
    %3938 = vmatpush1.msra.mxu0 0.0
    %3939 = vmatprep.mubr.f32.mxu0 0.0
    %3940 = vmatmul.mubr.f32.gmra.mrb[0].mxu0 %v3873
    %v3941 = vpop.f32.mrb[0].mxu0
    %v3942 = vadd.f32 0.0, %v3941
    %v3943 = vpop.f32.mrb[0].mxu0
    %3944 = vdwg.mxu0
    %v3945 = vadd.f32 %v3867, %v3942
    %v3946 = vxor.u32 %v3945, 2147483648
    %v3947 = vmul.f32 %v3946, 1.442695
    %v3948 = vpow.pop %v3947
    %v3949 = vadd.f32 %v3948, 1.0
    %v3950 = vrcp.pop %v3949
    %v3951 = vmul.f32 1.0, %v3950
    %v3952 = vtanh.pop %v3945
    %v3953 = vmul.f32 %v3951, %v3794
    %3955 = vrot.lane.b32.xlu0 %v3952, 64
    %v3956 = vpop.permute.xlu0 %3955
    %v3958 = vmul.f32 %v3951, %v3956
    %3960 = vrot.lane.b32.xlu0 %v3958, 32
    %v3961 = vpop.permute.xlu0 %3960
    %v3963 = vadd.f32 %v3953, %v3961
    %v3964 = vtanh.pop %v3963
    %3966 = vrot.lane.b32.xlu0 %v3964, 64
    %v3967 = vpop.permute.xlu0 %3966
    %v3969 = vmul.f32 %v3951, %v3967
    %v3970 = vsel %vm1159, %v3969, 0.0
    %v3971 = vsel %vm1159, %v3969, %v3793
    %v3972 = vsel %vm1159, %v3963, %v3794
    %3974 = vrot.lane.b32.xlu0 %v2721, 32
    %v3975 = vpop.permute.xlu0 %3974
    %v3976 = vsel %vm167, %v3975, 0
    %3978 = vmatprep.subr.mxu0 0.0
    %3979 = vmatpush1.msra.mxu0 %v2904
    %3980 = vmatprep.subr.mxu0 0.0
    %3981 = vmatpush1.msra.mxu0 %v2905
    %3982 = vmatprep.subr.mxu0 0.0
    %3983 = vmatpush1.msra.mxu0 %v2906
    %3984 = vmatprep.subr.mxu0 0.0
    %3985 = vmatpush1.msra.mxu0 %v2907
    %3986 = vmatprep.subr.mxu0 0.0
    %3987 = vmatpush1.msra.mxu0 0.0
    %3988 = vmatprep.subr.mxu0 0.0
    %3989 = vmatpush1.msra.mxu0 0.0
    %3990 = vmatprep.subr.mxu0 0.0
    %3991 = vmatpush1.msra.mxu0 0.0
    %3992 = vmatprep.subr.mxu0 0.0
    %3993 = vmatpush1.msra.mxu0 0.0
    %3994 = vmatprep.subr.mxu0 0.0
    %3995 = vmatpush1.msra.mxu0 0.0
    %3996 = vmatprep.subr.mxu0 0.0
    %3997 = vmatpush1.msra.mxu0 0.0
    %3998 = vmatprep.subr.mxu0 0.0
    %3999 = vmatpush1.msra.mxu0 0.0
    %4000 = vmatprep.subr.mxu0 0.0
    %4001 = vmatpush1.msra.mxu0 0.0
    %4002 = vmatprep.subr.mxu0 0.0
    %4003 = vmatpush1.msra.mxu0 0.0
    %4004 = vmatprep.subr.mxu0 0.0
    %4005 = vmatpush1.msra.mxu0 0.0
    %4006 = vmatprep.subr.mxu0 0.0
    %4007 = vmatpush1.msra.mxu0 0.0
    %4008 = vmatprep.subr.mxu0 0.0
    %4009 = vmatpush1.msra.mxu0 0.0
    %4010 = vmatprep.subr.mxu0 0.0
    %4011 = vmatpush1.msra.mxu0 0.0
    %4012 = vmatprep.subr.mxu0 0.0
    %4013 = vmatpush1.msra.mxu0 0.0
    %4014 = vmatprep.subr.mxu0 0.0
    %4015 = vmatpush1.msra.mxu0 0.0
    %4016 = vmatprep.subr.mxu0 0.0
    %4017 = vmatpush1.msra.mxu0 0.0
    %4018 = vmatprep.subr.mxu0 0.0
    %4019 = vmatpush1.msra.mxu0 0.0
    %4020 = vmatprep.subr.mxu0 0.0
    %4021 = vmatpush1.msra.mxu0 0.0
    %4022 = vmatprep.subr.mxu0 0.0
    %4023 = vmatpush1.msra.mxu0 0.0
    %4024 = vmatprep.subr.mxu0 0.0
    %4025 = vmatpush1.msra.mxu0 0.0
    %4026 = vmatprep.subr.mxu0 0.0
    %4027 = vmatpush1.msra.mxu0 0.0
    %4028 = vmatprep.subr.mxu0 0.0
    %4029 = vmatpush1.msra.mxu0 0.0
    %4030 = vmatprep.subr.mxu0 0.0
    %4031 = vmatpush1.msra.mxu0 0.0
    %4032 = vmatprep.subr.mxu0 0.0
    %4033 = vmatpush1.msra.mxu0 0.0
    %4034 = vmatprep.subr.mxu0 0.0
    %4035 = vmatpush1.msra.mxu0 0.0
    %4036 = vmatprep.subr.mxu0 0.0
    %4037 = vmatpush1.msra.mxu0 0.0
    %4038 = vmatprep.subr.mxu0 0.0
    %4039 = vmatpush1.msra.mxu0 0.0
    %4040 = vmatprep.subr.mxu0 0.0
    %4041 = vmatpush1.msra.mxu0 0.0
    %4042 = vmatprep.mubr.f32.mxu0 0.0
    %4043 = vmatmul.mubr.f32.gmra.mrb[0].mxu0 %v3976
    %v4044 = vpop.f32.mrb[0].mxu0
    %v4045 = vadd.f32 %v2914, %v4044
    %v4046 = vpop.f32.mrb[0].mxu0
    %4047 = vdwg.mxu0
    %4049 = vrot.lane.b32.xlu0 %v3971, 32
    %v4050 = vpop.permute.xlu0 %4049
    %v4051 = vsel %vm167, %v4050, 0
    %4053 = vmatprep.subr.mxu0 0.0
    %4054 = vmatpush1.msra.mxu0 %v2899
    %4055 = vmatprep.subr.mxu0 0.0
    %4056 = vmatpush1.msra.mxu0 %v2900
    %4057 = vmatprep.subr.mxu0 0.0
    %4058 = vmatpush1.msra.mxu0 %v2901
    %4059 = vmatprep.subr.mxu0 0.0
    %4060 = vmatpush1.msra.mxu0 %v2902
    %4061 = vmatprep.subr.mxu0 0.0
    %4062 = vmatpush1.msra.mxu0 0.0
    %4063 = vmatprep.subr.mxu0 0.0
    %4064 = vmatpush1.msra.mxu0 0.0
    %4065 = vmatprep.subr.mxu0 0.0
    %4066 = vmatpush1.msra.mxu0 0.0
    %4067 = vmatprep.subr.mxu0 0.0
    %4068 = vmatpush1.msra.mxu0 0.0
    %4069 = vmatprep.subr.mxu0 0.0
    %4070 = vmatpush1.msra.mxu0 0.0
    %4071 = vmatprep.subr.mxu0 0.0
    %4072 = vmatpush1.msra.mxu0 0.0
    %4073 = vmatprep.subr.mxu0 0.0
    %4074 = vmatpush1.msra.mxu0 0.0
    %4075 = vmatprep.subr.mxu0 0.0
    %4076 = vmatpush1.msra.mxu0 0.0
    %4077 = vmatprep.subr.mxu0 0.0
    %4078 = vmatpush1.msra.mxu0 0.0
    %4079 = vmatprep.subr.mxu0 0.0
    %4080 = vmatpush1.msra.mxu0 0.0
    %4081 = vmatprep.subr.mxu0 0.0
    %4082 = vmatpush1.msra.mxu0 0.0
    %4083 = vmatprep.subr.mxu0 0.0
    %4084 = vmatpush1.msra.mxu0 0.0
    %4085 = vmatprep.subr.mxu0 0.0
    %4086 = vmatpush1.msra.mxu0 0.0
    %4087 = vmatprep.subr.mxu0 0.0
    %4088 = vmatpush1.msra.mxu0 0.0
    %4089 = vmatprep.subr.mxu0 0.0
    %4090 = vmatpush1.msra.mxu0 0.0
    %4091 = vmatprep.subr.mxu0 0.0
    %4092 = vmatpush1.msra.mxu0 0.0
    %4093 = vmatprep.subr.mxu0 0.0
    %4094 = vmatpush1.msra.mxu0 0.0
    %4095 = vmatprep.subr.mxu0 0.0
    %4096 = vmatpush1.msra.mxu0 0.0
    %4097 = vmatprep.subr.mxu0 0.0
    %4098 = vmatpush1.msra.mxu0 0.0
    %4099 = vmatprep.subr.mxu0 0.0
    %4100 = vmatpush1.msra.mxu0 0.0
    %4101 = vmatprep.subr.mxu0 0.0
    %4102 = vmatpush1.msra.mxu0 0.0
    %4103 = vmatprep.subr.mxu0 0.0
    %4104 = vmatpush1.msra.mxu0 0.0
    %4105 = vmatprep.subr.mxu0 0.0
    %4106 = vmatpush1.msra.mxu0 0.0
    %4107 = vmatprep.subr.mxu0 0.0
    %4108 = vmatpush1.msra.mxu0 0.0
    %4109 = vmatprep.subr.mxu0 0.0
    %4110 = vmatpush1.msra.mxu0 0.0
    %4111 = vmatprep.subr.mxu0 0.0
    %4112 = vmatpush1.msra.mxu0 0.0
    %4113 = vmatprep.subr.mxu0 0.0
    %4114 = vmatpush1.msra.mxu0 0.0
    %4115 = vmatprep.subr.mxu0 0.0
    %4116 = vmatpush1.msra.mxu0 0.0
    %4117 = vmatprep.mubr.f32.mxu0 0.0
    %4118 = vmatmul.mubr.f32.gmra.mrb[0].mxu0 %v4051
    %v4119 = vpop.f32.mrb[0].mxu0
    %v4120 = vadd.f32 0.0, %v4119
    %v4121 = vpop.f32.mrb[0].mxu0
    %4122 = vdwg.mxu0
    %v4123 = vadd.f32 %v4045, %v4120
    %v4124 = vxor.u32 %v4123, 2147483648
    %v4125 = vmul.f32 %v4124, 1.442695
    %v4126 = vpow.pop %v4125
    %v4127 = vadd.f32 %v4126, 1.0
    %v4128 = vrcp.pop %v4127
    %v4129 = vmul.f32 1.0, %v4128
    %v4130 = vtanh.pop %v4123
    %v4131 = vmul.f32 %v4129, %v3972
    %4133 = vrot.lane.b32.xlu0 %v4130, 64
    %v4134 = vpop.permute.xlu0 %4133
    %v4136 = vmul.f32 %v4129, %v4134
    %4138 = vrot.lane.b32.xlu0 %v4136, 32
    %v4139 = vpop.permute.xlu0 %4138
    %v4141 = vadd.f32 %v4131, %v4139
    %v4142 = vtanh.pop %v4141
    %4144 = vrot.lane.b32.xlu0 %v4142, 64
    %v4145 = vpop.permute.xlu0 %4144
    %v4147 = vmul.f32 %v4129, %v4145
    %v4148 = vsel %vm1316, %v4147, 0.0
    %v4149 = vsel %vm1316, %v4147, %v3971
    %v4150 = vsel %vm1316, %v4141, %v3972
    %4152 = vrot.lane.b32.xlu0 %v2897, 32
    %v4153 = vpop.permute.xlu0 %4152
    %v4154 = vsel %vm167, %v4153, 0
    %4156 = vmatprep.subr.mxu0 0.0
    %4157 = vmatpush1.msra.mxu0 %v2904
    %4158 = vmatprep.subr.mxu0 0.0
    %4159 = vmatpush1.msra.mxu0 %v2905
    %4160 = vmatprep.subr.mxu0 0.0
    %4161 = vmatpush1.msra.mxu0 %v2906
    %4162 = vmatprep.subr.mxu0 0.0
    %4163 = vmatpush1.msra.mxu0 %v2907
    %4164 = vmatprep.subr.mxu0 0.0
    %4165 = vmatpush1.msra.mxu0 0.0
    %4166 = vmatprep.subr.mxu0 0.0
    %4167 = vmatpush1.msra.mxu0 0.0
    %4168 = vmatprep.subr.mxu0 0.0
    %4169 = vmatpush1.msra.mxu0 0.0
    %4170 = vmatprep.subr.mxu0 0.0
    %4171 = vmatpush1.msra.mxu0 0.0
    %4172 = vmatprep.subr.mxu0 0.0
    %4173 = vmatpush1.msra.mxu0 0.0
    %4174 = vmatprep.subr.mxu0 0.0
    %4175 = vmatpush1.msra.mxu0 0.0
    %4176 = vmatprep.subr.mxu0 0.0
    %4177 = vmatpush1.msra.mxu0 0.0
    %4178 = vmatprep.subr.mxu0 0.0
    %4179 = vmatpush1.msra.mxu0 0.0
    %4180 = vmatprep.subr.mxu0 0.0
    %4181 = vmatpush1.msra.mxu0 0.0
    %4182 = vmatprep.subr.mxu0 0.0
    %4183 = vmatpush1.msra.mxu0 0.0
    %4184 = vmatprep.subr.mxu0 0.0
    %4185 = vmatpush1.msra.mxu0 0.0
    %4186 = vmatprep.subr.mxu0 0.0
    %4187 = vmatpush1.msra.mxu0 0.0
    %4188 = vmatprep.subr.mxu0 0.0
    %4189 = vmatpush1.msra.mxu0 0.0
    %4190 = vmatprep.subr.mxu0 0.0
    %4191 = vmatpush1.msra.mxu0 0.0
    %4192 = vmatprep.subr.mxu0 0.0
    %4193 = vmatpush1.msra.mxu0 0.0
    %4194 = vmatprep.subr.mxu0 0.0
    %4195 = vmatpush1.msra.mxu0 0.0
    %4196 = vmatprep.subr.mxu0 0.0
    %4197 = vmatpush1.msra.mxu0 0.0
    %4198 = vmatprep.subr.mxu0 0.0
    %4199 = vmatpush1.msra.mxu0 0.0
    %4200 = vmatprep.subr.mxu0 0.0
    %4201 = vmatpush1.msra.mxu0 0.0
    %4202 = vmatprep.subr.mxu0 0.0
    %4203 = vmatpush1.msra.mxu0 0.0
    %4204 = vmatprep.subr.mxu0 0.0
    %4205 = vmatpush1.msra.mxu0 0.0
    %4206 = vmatprep.subr.mxu0 0.0
    %4207 = vmatpush1.msra.mxu0 0.0
    %4208 = vmatprep.subr.mxu0 0.0
    %4209 = vmatpush1.msra.mxu0 0.0
    %4210 = vmatprep.subr.mxu0 0.0
    %4211 = vmatpush1.msra.mxu0 0.0
    %4212 = vmatprep.subr.mxu0 0.0
    %4213 = vmatpush1.msra.mxu0 0.0
    %4214 = vmatprep.subr.mxu0 0.0
    %4215 = vmatpush1.msra.mxu0 0.0
    %4216 = vmatprep.subr.mxu0 0.0
    %4217 = vmatpush1.msra.mxu0 0.0
    %4218 = vmatprep.subr.mxu0 0.0
    %4219 = vmatpush1.msra.mxu0 0.0
    %4220 = vmatprep.mubr.f32.mxu0 0.0
    %4221 = vmatmul.mubr.f32.gmra.mrb[0].mxu0 %v4154
    %v4222 = vpop.f32.mrb[0].mxu0
    %v4223 = vadd.f32 %v2914, %v4222
    %v4224 = vpop.f32.mrb[0].mxu0
    %4225 = vdwg.mxu0
    %4227 = vrot.lane.b32.xlu0 %v4149, 32
    %v4228 = vpop.permute.xlu0 %4227
    %v4229 = vsel %vm167, %v4228, 0
    %4231 = vmatprep.subr.mxu0 0.0
    %4232 = vmatpush1.msra.mxu0 %v2899
    %4233 = vmatprep.subr.mxu0 0.0
    %4234 = vmatpush1.msra.mxu0 %v2900
    %4235 = vmatprep.subr.mxu0 0.0
    %4236 = vmatpush1.msra.mxu0 %v2901
    %4237 = vmatprep.subr.mxu0 0.0
    %4238 = vmatpush1.msra.mxu0 %v2902
    %4239 = vmatprep.subr.mxu0 0.0
    %4240 = vmatpush1.msra.mxu0 0.0
    %4241 = vmatprep.subr.mxu0 0.0
    %4242 = vmatpush1.msra.mxu0 0.0
    %4243 = vmatprep.subr.mxu0 0.0
    %4244 = vmatpush1.msra.mxu0 0.0
    %4245 = vmatprep.subr.mxu0 0.0
    %4246 = vmatpush1.msra.mxu0 0.0
    %4247 = vmatprep.subr.mxu0 0.0
    %4248 = vmatpush1.msra.mxu0 0.0
    %4249 = vmatprep.subr.mxu0 0.0
    %4250 = vmatpush1.msra.mxu0 0.0
    %4251 = vmatprep.subr.mxu0 0.0
    %4252 = vmatpush1.msra.mxu0 0.0
    %4253 = vmatprep.subr.mxu0 0.0
    %4254 = vmatpush1.msra.mxu0 0.0
    %4255 = vmatprep.subr.mxu0 0.0
    %4256 = vmatpush1.msra.mxu0 0.0
    %4257 = vmatprep.subr.mxu0 0.0
    %4258 = vmatpush1.msra.mxu0 0.0
    %4259 = vmatprep.subr.mxu0 0.0
    %4260 = vmatpush1.msra.mxu0 0.0
    %4261 = vmatprep.subr.mxu0 0.0
    %4262 = vmatpush1.msra.mxu0 0.0
    %4263 = vmatprep.subr.mxu0 0.0
    %4264 = vmatpush1.msra.mxu0 0.0
    %4265 = vmatprep.subr.mxu0 0.0
    %4266 = vmatpush1.msra.mxu0 0.0
    %4267 = vmatprep.subr.mxu0 0.0
    %4268 = vmatpush1.msra.mxu0 0.0
    %4269 = vmatprep.subr.mxu0 0.0
    %4270 = vmatpush1.msra.mxu0 0.0
    %4271 = vmatprep.subr.mxu0 0.0
    %4272 = vmatpush1.msra.mxu0 0.0
    %4273 = vmatprep.subr.mxu0 0.0
    %4274 = vmatpush1.msra.mxu0 0.0
    %4275 = vmatprep.subr.mxu0 0.0
    %4276 = vmatpush1.msra.mxu0 0.0
    %4277 = vmatprep.subr.mxu0 0.0
    %4278 = vmatpush1.msra.mxu0 0.0
    %4279 = vmatprep.subr.mxu0 0.0
    %4280 = vmatpush1.msra.mxu0 0.0
    %4281 = vmatprep.subr.mxu0 0.0
    %4282 = vmatpush1.msra.mxu0 0.0
    %4283 = vmatprep.subr.mxu0 0.0
    %4284 = vmatpush1.msra.mxu0 0.0
    %4285 = vmatprep.subr.mxu0 0.0
    %4286 = vmatpush1.msra.mxu0 0.0
    %4287 = vmatprep.subr.mxu0 0.0
    %4288 = vmatpush1.msra.mxu0 0.0
    %4289 = vmatprep.subr.mxu0 0.0
    %4290 = vmatpush1.msra.mxu0 0.0
    %4291 = vmatprep.subr.mxu0 0.0
    %4292 = vmatpush1.msra.mxu0 0.0
    %4293 = vmatprep.subr.mxu0 0.0
    %4294 = vmatpush1.msra.mxu0 0.0
    %4295 = vmatprep.mubr.f32.mxu0 0.0
    %4296 = vmatmul.mubr.f32.gmra.mrb[0].mxu0 %v4229
    %v4297 = vpop.f32.mrb[0].mxu0
    %v4298 = vadd.f32 0.0, %v4297
    %v4299 = vpop.f32.mrb[0].mxu0
    %4300 = vdwg.mxu0
    %v4301 = vadd.f32 %v4223, %v4298
    %v4302 = vxor.u32 %v4301, 2147483648
    %v4303 = vmul.f32 %v4302, 1.442695
    %v4304 = vpow.pop %v4303
    %v4305 = vadd.f32 %v4304, 1.0
    %v4306 = vrcp.pop %v4305
    %v4307 = vmul.f32 1.0, %v4306
    %v4308 = vtanh.pop %v4301
    %v4309 = vmul.f32 %v4307, %v4150
    %4311 = vrot.lane.b32.xlu0 %v4308, 64
    %v4312 = vpop.permute.xlu0 %4311
    %v4314 = vmul.f32 %v4307, %v4312
    %4316 = vrot.lane.b32.xlu0 %v4314, 32
    %v4317 = vpop.permute.xlu0 %4316
    %v4319 = vadd.f32 %v4309, %v4317
    %v4320 = vtanh.pop %v4319
    %4322 = vrot.lane.b32.xlu0 %v4320, 64
    %v4323 = vpop.permute.xlu0 %4322
    %v4325 = vmul.f32 %v4307, %v4323
    %v4326 = vsel %vm1473, %v4325, 0.0
    %v4327 = vld [vmem:[%s6] sm:$0x1]
    %v4329 = vlaneseq
    %v4330 = vshrl.u32 %v4329, 7
    %v4331 = vsub.s32 0, %v4330
    %v4332 = vrot.slane %v4327, %v4331
    %4333 = vrot.lane.b32.xlu0 %v4332, 96
    %v4334 = vpop.permute.xlu0 %4333
    %v4336 = vmul.f32 %v3081, %v4334
    %4338 = vrot.lane.b32.xlu0 %v4336, 32
    %v4339 = vpop.permute.xlu0 %4338
    %vm4341 = vcmask 254976
    %v4342 = vsel %vm4341, %v4339, 0.0
    %4343 = vadd.xlane.f32.xlu0 %v4342
    %v4344 = vpop.xlane.xlu0 %4343
    %v4345 = vmul.f32 %v3258, %v4334
    %4347 = vrot.lane.b32.xlu0 %v4345, 32
    %v4348 = vpop.permute.xlu0 %4347
    %v4350 = vsel %vm4341, %v4348, 0.0
    %4351 = vadd.xlane.f32.xlu0 %v4350
    %v4352 = vpop.xlane.xlu0 %4351
    %v4353 = vmul.f32 %v3436, %v4334
    %4355 = vrot.lane.b32.xlu0 %v4353, 32
    %v4356 = vpop.permute.xlu0 %4355
    %v4358 = vsel %vm4341, %v4356, 0.0
    %4359 = vadd.xlane.f32.xlu0 %v4358
    %v4360 = vpop.xlane.xlu0 %4359
    %v4361 = vmul.f32 %v3614, %v4334
    %4363 = vrot.lane.b32.xlu0 %v4361, 32
    %v4364 = vpop.permute.xlu0 %4363
    %v4366 = vsel %vm4341, %v4364, 0.0
    %4367 = vadd.xlane.f32.xlu0 %v4366
    %v4368 = vpop.xlane.xlu0 %4367
    %v4369 = vmul.f32 %v3792, %v4334
    %4371 = vrot.lane.b32.xlu0 %v4369, 32
    %v4372 = vpop.permute.xlu0 %4371
    %v4374 = vsel %vm4341, %v4372, 0.0
    %4375 = vadd.xlane.f32.xlu0 %v4374
    %v4376 = vpop.xlane.xlu0 %4375
    %v4377 = vmul.f32 %v3970, %v4334
    %4379 = vrot.lane.b32.xlu0 %v4377, 32
    %v4380 = vpop.permute.xlu0 %4379
    %v4382 = vsel %vm4341, %v4380, 0.0
    %4383 = vadd.xlane.f32.xlu0 %v4382
    %v4384 = vpop.xlane.xlu0 %4383
    %v4385 = vmul.f32 %v4148, %v4334
    %4387 = vrot.lane.b32.xlu0 %v4385, 32
    %v4388 = vpop.permute.xlu0 %4387
    %v4390 = vsel %vm4341, %v4388, 0.0
    %4391 = vadd.xlane.f32.xlu0 %v4390
    %v4392 = vpop.xlane.xlu0 %4391
    %v4393 = vmul.f32 %v4326, %v4334
    %4395 = vrot.lane.b32.xlu0 %v4393, 32
    %v4396 = vpop.permute.xlu0 %4395
    %v4398 = vsel %vm4341, %v4396, 0.0
    %4399 = vadd.xlane.f32.xlu0 %v4398
    %v4400 = vpop.xlane.xlu0 %4399
    %vm4401 = vcmask 7168
    %v4402 = vsel %vm4401, %v4344, %v4352
    %vm4403 = vcmask 15360
    %v4404 = vsel %vm4403, %v4402, %v4360
    %vm4405 = vcmask 23552
    %v4406 = vsel %vm4405, %v4404, %v4368
    %vm4407 = vcmask 31744
    %v4408 = vsel %vm4407, %v4406, %v4376
    %vm4409 = vcmask 39936
    %v4410 = vsel %vm4409, %v4408, %v4384
    %vm4411 = vcmask 48128
    %v4412 = vsel %vm4411, %v4410, %v4392
    %vm4413 = vcmask 56320
    %v4414 = vsel %vm4413, %v4412, %v4400
    %v4415 = vld [vmem:[#allocation2] sm:$0x1]
    %v4417 = vlaneseq
    %v4418 = vshrl.u32 %v4417, 7
    %v4419 = vsub.s32 0, %v4418
    %v4420 = vrot.slane %v4415, %v4419
    %4421 = vset.pattern.permute.xlu0 0
    %4422 = vperm.xlu0 %4421, %v4420
    %v4423 = vpop.permute.xlu0 %4422
    %v4425 = vadd.f32 %v4414, %v4423
    %vm4426 = vcmask 58368
    %4427 = vst.msk [vmem:[#allocation6] sm:$0x3] %vm4426, %v4425
    // Predicated region
    $region38: #{fudge_forward.1} parent=1 // pred_check
      _
    $region39: #{fudge_forward.1} parent=1 // pred_check_branch
      %4429 = sbr.rel (0) target = $region41
    $region40: #{fudge_forward.1} parent=1 // pred_region
      %s4431 = ssub.s32 32, 32
      %4432 = vsyncadd [#allocation5], %s4431
      %s4434 = sshll.u32 [#allocation6], 4
      %s4435 = int_to_ptr.vmem [resolvable:$true] %s4434
      %4437 = dma.vmem_to_hbm [thread:$0]  %s4435, 32, %s8, [#allocation5]
    $region41: #{fudge_forward.1} parent=1 // pred_fallthru
      _
    // Predicated region
    $region42: #{fudge_forward.1} parent=1 // pred_check
      _
    $region43: #{fudge_forward.1} parent=1 // pred_check_branch
      %4439 = sbr.rel (0) target = $region45
    $region44: #{fudge_forward.1} parent=1 // pred_region
      %4440 = dma.done [#allocation5], 32
    $region45: #{fudge_forward.1} parent=1 // pred_fallthru
      _
    %4441 = vsyncpa [#allocation4], 1
    %4442 = vsyncpa [#allocation5], 1

</llo_original>
